<compile_context>
chip_gen: v6e
topology: v6e:2x2x1
jax: 0.10.0
libtpu: 0.0.40
codegen_flags: <defaults>
</compile_context>

<pallas_src>
import numpy as np
import jax
import jax.numpy as jnp
from jax.experimental import pallas as pl
from jax.experimental.pallas import tpu as pltpu

# ---- dims from the PyTorch module ------------------------------------------
EMBED_DIM   = 64
GENOME_DIM  = 16
M_BASIS     = 8
NUM_HEADS   = 2
HEAD_DIM    = EMBED_DIM // NUM_HEADS
MLP_DIM     = 4 * EMBED_DIM
NUM_CLASSES = 10
IN_DIM      = 28          # input_proj = nn.Linear(28, EMBED_DIM)
OUT_PAD     = 128         # logits padded to a full lane width

SUB_BATCH        = 16     # batch elements per sub-tile -> 16 * T=8 = 128 rows
MAX_SUB_PER_STEP = 4      # up to 64 batch elements (512 rows) per grid step

_SIZES = [EMBED_DIM * EMBED_DIM] * 4 + [EMBED_DIM * MLP_DIM, MLP_DIM * EMBED_DIM]
_P = int(sum(_SIZES))


def _split_flat(flat):
    E, Hm = EMBED_DIM, MLP_DIM
    offs = np.cumsum([0] + _SIZES)
    wq = flat[offs[0]:offs[1]].reshape(E, E)
    wk = flat[offs[1]:offs[2]].reshape(E, E)
    wv = flat[offs[2]:offs[3]].reshape(E, E)
    wo = flat[offs[3]:offs[4]].reshape(E, E)
    w1 = flat[offs[4]:offs[5]].reshape(E, Hm)
    w2 = flat[offs[5]:offs[6]].reshape(Hm, E)
    return wq, wk, wv, wo, w1, w2


def _num_tensorcores():
    """2 TensorCores per chip on v7x, 1 on v5e/v6e (and as a safe fallback)."""
    try:
        kind = jax.devices()[0].device_kind.lower()
    except Exception:
        return 1
    return 2 if ("v7" in kind or "7x" in kind) else 1


# ============================================================================
# Forward: batch-tiled Pallas kernel (last-token-only attention)
# ============================================================================
def hypernet_classifier_forward(x, params):
    B, T, Ein = x.shape
    E, C, Dh = EMBED_DIM, NUM_CLASSES, HEAD_DIM
    SUB = SUB_BATCH
    R_SUB = SUB * T                                    # rows per 16-batch sub-tile

    # ---- hypernetwork weight mixing: degenerate matmul, left to XLA ----
    hp = jax.lax.Precision.HIGHEST
    coeff = jnp.dot(params['z'], params['wg'], precision=hp) + params['bg']
    flat = jnp.dot(coeff, params['basis'], precision=hp)[0]
    wq, wk, wv, wo, w1, w2 = _split_flat(flat)

    # bf16 MXU operands (f32 accumulate / f32 elementwise); attention scale folded
    # into the Q projection + bias.
    scale = jnp.float32(1.0 / np.sqrt(Dh))
    bft = jnp.bfloat16
    wp_b = params['wp'].astype(bft)                                    # (Ein, E)
    wq_b = (wq * scale).astype(bft)
    wk_b = wk.astype(bft)
    wv_b = wv.astype(bft)
    wo_b = wo.astype(bft)
    w1_b = w1.astype(bft)
    w2_b = w2.astype(bft)
    wc_b = jnp.zeros((E, OUT_PAD), bft).at[:, :C].set(params['wc'].astype(bft))

    bc_pad = jnp.zeros((1, OUT_PAD), jnp.float32).at[:, :C].set(params['bc'])
    b1 = params['b1']                                                  # (1, MLP_DIM) f32

    # pack the ten (1,E) bias / LN vectors into one (16,E) f32 operand
    vec16 = jnp.concatenate(
        [params['bp'], params['g1'], params['be1'],
         params['bq'] * scale, params['bk'], params['bv'], params['bo'],
         params['g2'], params['be2'], params['b2'],
         jnp.zeros((6, E), jnp.float32)], axis=0)                      # (16, E)

    # trace-time numpy masks (passed as operands, not closed-over constants):
    #   blk_mask: additive block-diag mask so stacked-query row r only attends to
    #             the T key columns of its own batch element (r % SUB).
    #   head_mask: 0/1 lane mask per stacked row (head = r // SUB).
    NHS = NUM_HEADS * SUB
    col_b = np.arange(R_SUB)[None, :] // T                            # key column -> batch id
    row_b = np.arange(NHS)[:, None] % SUB                             # stacked row -> batch id
    blk_mask = jnp.asarray(np.where(col_b == row_b, 0.0, -1e30).astype(np.float32))   # (NHS, R_SUB)
    lane = np.arange(E)[None, :]
    hrow = np.arange(NHS)[:, None] // SUB                             # stacked row -> head id
    head_mask = jnp.asarray(((lane >= hrow * Dh) & (lane < (hrow + 1) * Dh))
                            .astype(np.float32))                      # (NHS, E)

    # ---- batch tiling: >=2 grid steps on v7x (2 TCs), 1 big step on 1-TC parts ----
    num_tc = _num_tensorcores()
    n_sub = -(-B // SUB)
    sub_per_step = max(1, min(MAX_SUB_PER_STEP, n_sub // num_tc)) if n_sub >= num_tc else 1
    n_steps = -(-n_sub // sub_per_step)
    B_pad = n_steps * sub_per_step * SUB
    BB = sub_per_step * SUB                                            # batch per grid step
    R_STEP = sub_per_step * R_SUB                                      # rows per grid step

    xf = x.astype(jnp.float32)
    if B_pad == B:
        x_flat = xf.reshape(B * T, Ein)                                # no HBM round trip
    else:
        x_flat = jnp.zeros((B_pad * T, Ein), jnp.float32).at[:B * T, :].set(
            xf.reshape(B * T, Ein))

    def kernel(x_ref, wp_ref, wq_ref, wk_ref, wv_ref, wo_ref, w1_ref, w2_ref, wc_ref,
               vec_ref, b1_ref, bc_ref, mask_ref, hmask_ref, out_ref):
        bp, g1, be1 = vec_ref[0:1, :], vec_ref[1:2, :], vec_ref[2:3, :]
        bq, bk, bv  = vec_ref[3:4, :], vec_ref[4:5, :], vec_ref[5:6, :]
        bo, g2, be2 = vec_ref[6:7, :], vec_ref[7:8, :], vec_ref[8:9, :]
        b2 = vec_ref[9:10, :]
        blk = mask_ref[...]                    # (NHS, R_SUB) additive block-diag mask
        hmask = hmask_ref[...]                 # (NHS, E)     0/1 head lane mask

        def ln(v, g, be):
            mu = jnp.mean(v, axis=-1, keepdims=True)
            var = jnp.mean(jnp.square(v - mu), axis=-1, keepdims=True)
            return (v - mu) * jax.lax.rsqrt(var + 1e-5) * g + be

        def b16(v):
            return v.astype(jnp.bfloat16)

        def subtile(s, carry):
            r0 = pl.multiple_of(s * R_SUB, R_SUB)
            xs = x_ref[pl.ds(r0, R_SUB), :]                            # (R_SUB, Ein) f32

            # input projection + pre-LN over all tokens (K/V need every token)
            h = jnp.dot(b16(xs), wp_ref[...],
                        preferred_element_type=jnp.float32) + bp       # (R_SUB, E) f32
            hn = b16(ln(h, g1, be1))
            k = jnp.dot(hn, wk_ref[...], preferred_element_type=jnp.float32) + bk
            v = jnp.dot(hn, wv_ref[...], preferred_element_type=jnp.float32) + bv

            # classifier reads only the last token -> Q / residual path last-token only
            h_last = h.reshape(SUB, T, E)[:, T - 1:T, :].reshape(SUB, E)
            hn_last = ln(h_last, g1, be1)
            q = jnp.dot(b16(hn_last), wq_ref[...],
                        preferred_element_type=jnp.float32) + bq       # scale pre-folded

            # heads stacked along sublanes -> ONE lane-dense score matmul per sub-tile
            q_stack = jnp.concatenate([q] * NUM_HEADS, axis=0) * hmask  # (NHS, E)
            s_mat = jax.lax.dot_general(
                b16(q_stack), b16(k), (((1,), (1,)), ((), ())),
                preferred_element_type=jnp.float32)                     # (NHS, R_SUB)
            s_mat = s_mat + blk
            s_mat = s_mat - jnp.max(s_mat, axis=-1, keepdims=True)
            p = jnp.exp(s_mat)
            p = p * pl.reciprocal(jnp.sum(p, axis=-1, keepdims=True), approx=True)

            ctx_stack = jnp.dot(b16(p), b16(v),
                                preferred_element_type=jnp.float32) * hmask  # (NHS, E)
            ctx = ctx_stack[0:SUB, :]
            for hd in range(1, NUM_HEADS):
                ctx = ctx + ctx_stack[hd * SUB:(hd + 1) * SUB, :]        # (SUB, E)

            hl = h_last + jnp.dot(b16(ctx), wo_ref[...],
                                  preferred_element_type=jnp.float32) + bo
            hn2 = ln(hl, g2, be2)
            m = jnp.maximum(jnp.dot(b16(hn2), w1_ref[...],
                                    preferred_element_type=jnp.float32) + b1_ref[...], 0.0)
            hl = hl + jnp.dot(b16(m), w2_ref[...],
                              preferred_element_type=jnp.float32) + b2

            # classifier into a lane-dense padded block (cols >= 10 are zero weights)
            out_ref[pl.ds(pl.multiple_of(s * SUB, SUB), SUB), :] = (
                jnp.dot(b16(hl), wc_ref[...],
                        preferred_element_type=jnp.float32) + bc_ref[...])
            return carry

        # 128-row sub-tiles inside an unrolled loop: bounded live ranges, amortized
        # per-grid-step overhead.
        jax.lax.fori_loop(0, sub_per_step, subtile, 0, unroll=True)

    weight_ops = [wp_b, wq_b, wk_b, wv_b, wo_b, w1_b, w2_b, wc_b,
                  vec16, b1, bc_pad, blk_mask, head_mask]
    in_specs = ([pl.BlockSpec((R_STEP, Ein), lambda i: (i, 0))]
                + [pl.BlockSpec(a.shape, lambda i: (0, 0)) for a in weight_ops])

    out = pl.pallas_call(
        kernel,
        grid=(n_steps,),
        in_specs=in_specs,
        out_specs=pl.BlockSpec((BB, OUT_PAD), lambda i: (i, 0)),
        out_shape=jax.ShapeDtypeStruct((B_pad, OUT_PAD), jnp.float32),
        compiler_params=pltpu.CompilerParams(dimension_semantics=("parallel",)),
    )(x_flat, *weight_ops)

    return out[:B, :NUM_CLASSES]


# ============================================================================
# Deterministic parameter init + pure-JAX reference
# ============================================================================
def init_params(key):
    ks = jax.random.split(key, 16)
    E, G, M, Hm, C = EMBED_DIM, GENOME_DIM, M_BASIS, MLP_DIM, NUM_CLASSES

    def nrm(k, shape, std):
        return (jax.random.normal(k, shape, jnp.float32) * std).astype(jnp.float32)

    return dict(
        z=nrm(ks[0], (1, G), 1.0),
        wg=nrm(ks[1], (G, M), 1.0 / np.sqrt(G)),
        bg=nrm(ks[2], (1, M), 0.1),
        basis=nrm(ks[3], (M, _P), 1.0 / np.sqrt(M * E)),
        wp=nrm(ks[4], (IN_DIM, E), 1.0 / np.sqrt(IN_DIM)),
        bp=nrm(ks[5], (1, E), 0.1),
        bq=nrm(ks[6], (1, E), 0.1),
        bk=nrm(ks[7], (1, E), 0.1),
        bv=nrm(ks[8], (1, E), 0.1),
        bo=nrm(ks[9], (1, E), 0.1),
        g1=1.0 + nrm(ks[10], (1, E), 0.05),
        be1=nrm(ks[11], (1, E), 0.05),
        g2=1.0 + nrm(ks[12], (1, E), 0.05),
        be2=nrm(ks[13], (1, E), 0.05),
        b1=nrm(ks[14], (1, Hm), 0.1),
        b2=nrm(ks[15], (1, E), 0.1),
        wc=nrm(jax.random.fold_in(key, 100), (E, C), 1.0 / np.sqrt(E)),
        bc=nrm(jax.random.fold_in(key, 101), (1, C), 0.1),
    )


def reference_forward(x, params):
    hp = jax.lax.Precision.HIGHEST
    coeff = jnp.dot(params['z'], params['wg'], precision=hp) + params['bg']
    flat = jnp.dot(coeff, params['basis'], precision=hp)[0]
    wq, wk, wv, wo, w1, w2 = _split_flat(flat)

    def ln(v, g, be):
        mu = jnp.mean(v, axis=-1, keepdims=True)
        var = jnp.mean((v - mu) ** 2, axis=-1, keepdims=True)
        return (v - mu) * jax.lax.rsqrt(var + 1e-5) * g + be

    h = jnp.einsum('bti,io->bto', x, params['wp'], precision=hp) + params['bp']
    hn = ln(h, params['g1'], params['be1'])
    q = jnp.einsum('bti,io->bto', hn, wq, precision=hp) + params['bq']
    k = jnp.einsum('bti,io->bto', hn, wk, precision=hp) + params['bk']
    v = jnp.einsum('bti,io->bto', hn, wv, precision=hp) + params['bv']
    scale = 1.0 / np.sqrt(HEAD_DIM)
    attn = jnp.zeros_like(h)
    for hd in range(NUM_HEADS):
        lo = hd * HEAD_DIM
        qh, kh, vh = (t[..., lo:lo + HEAD_DIM] for t in (q, k, v))
        s = jnp.einsum('btd,bsd->bts', qh, kh, precision=hp) * scale
        p = jax.nn.softmax(s, axis=-1)
        ctx = jnp.einsum('bts,bsd->btd', p, vh, precision=hp)
        attn = attn + jnp.einsum('btd,do->bto', ctx, wo[lo:lo + HEAD_DIM, :], precision=hp)
    attn = attn + params['bo']
    h = h + attn
    hn2 = ln(h, params['g2'], params['be2'])
    m = jnp.einsum('bti,ih->bth', hn2, w1, precision=hp) + params['b1']
    m = jnp.maximum(m, 0.0)
    m = jnp.einsum('bth,ho->bto', m, w2, precision=hp) + params['b2']
    h = h + m
    return jnp.einsum('bi,io->bo', h[:, -1, :], params['wc'], precision=hp) + params['bc']


if __name__ == "__main__":
    key = jax.random.PRNGKey(0)
    kx, kp = jax.random.split(key)
    B, T = 32, 8        # 2 sub-tiles of 16 batch elements (128 rows each)
    x = jax.random.normal(kx, (B, T, IN_DIM), jnp.float32)
    params = init_params(kp)

    fwd = jax.jit(hypernet_classifier_forward)
    logits = jax.block_until_ready(fwd(x, params))
    ref = jax.block_until_ready(reference_forward(x, params))

    assert logits.shape == (B, NUM_CLASSES)
    # Kernel uses bf16 MXU operands (f32 accumulate / f32 elementwise) while the
    # reference runs f32-HIGHEST; observed discrepancies are ~1e-2 scale, so the
    # tolerance is set with headroom for the bf16 operand rounding.
    np.testing.assert_allclose(np.asarray(logits), np.asarray(ref),
                               rtol=2e-2, atol=5e-2)
    print("KERNEL_OK")
</pallas_src>

<mosaic_0001>
module attributes {stable_mosaic.version = 11 : i64} {
  func.func @kernel(%arg0: i32, %arg1: memref<256x28xf32, #tpu.memory_space<vmem>>, %arg2: memref<28x64xbf16, #tpu.memory_space<vmem>>, %arg3: memref<64x64xbf16, #tpu.memory_space<vmem>>, %arg4: memref<64x64xbf16, #tpu.memory_space<vmem>>, %arg5: memref<64x64xbf16, #tpu.memory_space<vmem>>, %arg6: memref<64x64xbf16, #tpu.memory_space<vmem>>, %arg7: memref<64x256xbf16, #tpu.memory_space<vmem>>, %arg8: memref<256x64xbf16, #tpu.memory_space<vmem>>, %arg9: memref<64x128xbf16, #tpu.memory_space<vmem>>, %arg10: memref<16x64xf32, #tpu.memory_space<vmem>>, %arg11: memref<1x256xf32, #tpu.memory_space<vmem>>, %arg12: memref<1x128xf32, #tpu.memory_space<vmem>>, %arg13: memref<32x128xf32, #tpu.memory_space<vmem>>, %arg14: memref<32x64xf32, #tpu.memory_space<vmem>>, %arg15: memref<32x128xf32, #tpu.memory_space<vmem>>) attributes {dimension_semantics = [#tpu.dimension_semantics<parallel>], iteration_bounds = array<i64: 1>, scalar_prefetch = 0 : i64, scratch_operands = 0 : i64, tpu.core_type = #tpu.core_type<tc>, window_params = [{transform_indices = @transform_0, window_bounds = array<i64: 256, 28>}, {pipeline_mode = #tpu.pipeline_mode<synchronous>, transform_indices = @transform_1, window_bounds = array<i64: 28, 64>}, {pipeline_mode = #tpu.pipeline_mode<synchronous>, transform_indices = @transform_2, window_bounds = array<i64: 64, 64>}, {pipeline_mode = #tpu.pipeline_mode<synchronous>, transform_indices = @transform_3, window_bounds = array<i64: 64, 64>}, {pipeline_mode = #tpu.pipeline_mode<synchronous>, transform_indices = @transform_4, window_bounds = array<i64: 64, 64>}, {pipeline_mode = #tpu.pipeline_mode<synchronous>, transform_indices = @transform_5, window_bounds = array<i64: 64, 64>}, {pipeline_mode = #tpu.pipeline_mode<synchronous>, transform_indices = @transform_6, window_bounds = array<i64: 64, 256>}, {pipeline_mode = #tpu.pipeline_mode<synchronous>, transform_indices = @transform_7, window_bounds = array<i64: 256, 64>}, {pipeline_mode = #tpu.pipeline_mode<synchronous>, transform_indices = @transform_8, window_bounds = array<i64: 64, 128>}, {pipeline_mode = #tpu.pipeline_mode<synchronous>, transform_indices = @transform_9, window_bounds = array<i64: 16, 64>}, {pipeline_mode = #tpu.pipeline_mode<synchronous>, transform_indices = @transform_10, window_bounds = array<i64: 1, 256>}, {pipeline_mode = #tpu.pipeline_mode<synchronous>, transform_indices = @transform_11, window_bounds = array<i64: 1, 128>}, {pipeline_mode = #tpu.pipeline_mode<synchronous>, transform_indices = @transform_12, window_bounds = array<i64: 32, 128>}, {pipeline_mode = #tpu.pipeline_mode<synchronous>, transform_indices = @transform_13, window_bounds = array<i64: 32, 64>}, {transform_indices = @transform_14, window_bounds = array<i64: 32, 128>}]} {
    %c0 = arith.constant 0 : index
    %c0_0 = arith.constant 0 : index
    %0 = vector.load %arg10[%c0, %c0_0] : memref<16x64xf32, #tpu.memory_space<vmem>>, vector<1x64xf32>
    %c1 = arith.constant 1 : index
    %c0_1 = arith.constant 0 : index
    %1 = vector.load %arg10[%c1, %c0_1] : memref<16x64xf32, #tpu.memory_space<vmem>>, vector<1x64xf32>
    %c2 = arith.constant 2 : index
    %c0_2 = arith.constant 0 : index
    %2 = vector.load %arg10[%c2, %c0_2] : memref<16x64xf32, #tpu.memory_space<vmem>>, vector<1x64xf32>
    %c3 = arith.constant 3 : index
    %c0_3 = arith.constant 0 : index
    %3 = vector.load %arg10[%c3, %c0_3] : memref<16x64xf32, #tpu.memory_space<vmem>>, vector<1x64xf32>
    %c4 = arith.constant 4 : index
    %c0_4 = arith.constant 0 : index
    %4 = vector.load %arg10[%c4, %c0_4] : memref<16x64xf32, #tpu.memory_space<vmem>>, vector<1x64xf32>
    %c5 = arith.constant 5 : index
    %c0_5 = arith.constant 0 : index
    %5 = vector.load %arg10[%c5, %c0_5] : memref<16x64xf32, #tpu.memory_space<vmem>>, vector<1x64xf32>
    %c6 = arith.constant 6 : index
    %c0_6 = arith.constant 0 : index
    %6 = vector.load %arg10[%c6, %c0_6] : memref<16x64xf32, #tpu.memory_space<vmem>>, vector<1x64xf32>
    %c7 = arith.constant 7 : index
    %c0_7 = arith.constant 0 : index
    %7 = vector.load %arg10[%c7, %c0_7] : memref<16x64xf32, #tpu.memory_space<vmem>>, vector<1x64xf32>
    %c8 = arith.constant 8 : index
    %c0_8 = arith.constant 0 : index
    %8 = vector.load %arg10[%c8, %c0_8] : memref<16x64xf32, #tpu.memory_space<vmem>>, vector<1x64xf32>
    %c9 = arith.constant 9 : index
    %c0_9 = arith.constant 0 : index
    %9 = vector.load %arg10[%c9, %c0_9] : memref<16x64xf32, #tpu.memory_space<vmem>>, vector<1x64xf32>
    %c0_10 = arith.constant 0 : index
    %c0_11 = arith.constant 0 : index
    %10 = vector.load %arg13[%c0_10, %c0_11] : memref<32x128xf32, #tpu.memory_space<vmem>>, vector<32x128xf32>
    %c0_12 = arith.constant 0 : index
    %c0_13 = arith.constant 0 : index
    %11 = vector.load %arg14[%c0_12, %c0_13] : memref<32x64xf32, #tpu.memory_space<vmem>>, vector<32x64xf32>
    %c0_i32 = arith.constant 0 : i32
    %c128_i32 = arith.constant 128 : i32
    %12 = arith.muli %c0_i32, %c128_i32 : i32
    %13 = tpu.assume_multiple %12, 128 : i32
    %14 = arith.index_cast %13 : i32 to index
    %c0_14 = arith.constant 0 : index
    %15 = vector.load %arg1[%14, %c0_14] : memref<256x28xf32, #tpu.memory_space<vmem>>, vector<128x28xf32>
    %16 = arith.truncf %15 : vector<128x28xf32> to vector<128x28xbf16>
    %c0_15 = arith.constant 0 : index
    %c0_16 = arith.constant 0 : index
    %17 = vector.load %arg2[%c0_15, %c0_16] : memref<28x64xbf16, #tpu.memory_space<vmem>>, vector<28x64xbf16>
    %cst = arith.constant dense<0.000000e+00> : vector<128x64xf32>
    %18 = tpu.matmul %16, %17, %cst {dimension_numbers = #tpu.dot_dimension_numbers<[1], [0], [0], [1], [0, 0, 1, 1], [], []>} : vector<128x28xbf16>, vector<28x64xbf16>, vector<128x64xf32> -> vector<128x64xf32>
    %19 = vector.broadcast %0 : vector<1x64xf32> to vector<128x64xf32>
    %20 = arith.addf %18, %19 : vector<128x64xf32>
    %cst_17 = arith.constant dense<0.000000e+00> : vector<128xf32>
    %21 = vector.multi_reduction <add>, %20, %cst_17 [1] : vector<128x64xf32> to vector<128xf32>
    %22 = vector.shape_cast %21 : vector<128xf32> to vector<128x1xf32>
    %cst_18 = arith.constant 6.400000e+01 : f32
    %23 = vector.broadcast %cst_18 : f32 to vector<128x1xf32>
    %24 = arith.divf %22, %23 : vector<128x1xf32>
    %25 = vector.broadcast %24 : vector<128x1xf32> to vector<128x64xf32>
    %26 = arith.subf %20, %25 : vector<128x64xf32>
    %27 = arith.mulf %26, %26 : vector<128x64xf32>
    %cst_19 = arith.constant dense<0.000000e+00> : vector<128xf32>
    %28 = vector.multi_reduction <add>, %27, %cst_19 [1] : vector<128x64xf32> to vector<128xf32>
    %29 = vector.shape_cast %28 : vector<128xf32> to vector<128x1xf32>
    %cst_20 = arith.constant 6.400000e+01 : f32
    %30 = vector.broadcast %cst_20 : f32 to vector<128x1xf32>
    %31 = arith.divf %29, %30 : vector<128x1xf32>
    %32 = vector.broadcast %24 : vector<128x1xf32> to vector<128x64xf32>
    %33 = arith.subf %20, %32 : vector<128x64xf32>
    %cst_21 = arith.constant 9.99999974E-6 : f32
    %34 = vector.broadcast %cst_21 : f32 to vector<128x1xf32>
    %35 = arith.addf %31, %34 : vector<128x1xf32>
    %36 = math.rsqrt %35 : vector<128x1xf32>
    %37 = vector.broadcast %36 : vector<128x1xf32> to vector<128x64xf32>
    %38 = arith.mulf %33, %37 : vector<128x64xf32>
    %39 = vector.broadcast %1 : vector<1x64xf32> to vector<128x64xf32>
    %40 = arith.mulf %38, %39 : vector<128x64xf32>
    %41 = vector.broadcast %2 : vector<1x64xf32> to vector<128x64xf32>
    %42 = arith.addf %40, %41 : vector<128x64xf32>
    %43 = arith.truncf %42 : vector<128x64xf32> to vector<128x64xbf16>
    %c0_22 = arith.constant 0 : index
    %c0_23 = arith.constant 0 : index
    %44 = vector.load %arg4[%c0_22, %c0_23] : memref<64x64xbf16, #tpu.memory_space<vmem>>, vector<64x64xbf16>
    %cst_24 = arith.constant dense<0.000000e+00> : vector<128x64xf32>
    %45 = tpu.matmul %43, %44, %cst_24 {dimension_numbers = #tpu.dot_dimension_numbers<[1], [0], [0], [1], [0, 0, 1, 1], [], []>} : vector<128x64xbf16>, vector<64x64xbf16>, vector<128x64xf32> -> vector<128x64xf32>
    %46 = vector.broadcast %4 : vector<1x64xf32> to vector<128x64xf32>
    %47 = arith.addf %45, %46 : vector<128x64xf32>
    %c0_25 = arith.constant 0 : index
    %c0_26 = arith.constant 0 : index
    %48 = vector.load %arg5[%c0_25, %c0_26] : memref<64x64xbf16, #tpu.memory_space<vmem>>, vector<64x64xbf16>
    %cst_27 = arith.constant dense<0.000000e+00> : vector<128x64xf32>
    %49 = tpu.matmul %43, %48, %cst_27 {dimension_numbers = #tpu.dot_dimension_numbers<[1], [0], [0], [1], [0, 0, 1, 1], [], []>} : vector<128x64xbf16>, vector<64x64xbf16>, vector<128x64xf32> -> vector<128x64xf32>
    %50 = vector.broadcast %5 : vector<1x64xf32> to vector<128x64xf32>
    %51 = arith.addf %49, %50 : vector<128x64xf32>
    %52 = vector.shape_cast %20 : vector<128x64xf32> to vector<16x8x64xf32>
    %53 = vector.extract_strided_slice %52 {offsets = [0, 7, 0], sizes = [16, 1, 64], strides = [1, 1, 1]} : vector<16x8x64xf32> to vector<16x1x64xf32>
    %54 = vector.shape_cast %53 : vector<16x1x64xf32> to vector<16x64xf32>
    %cst_28 = arith.constant dense<0.000000e+00> : vector<16xf32>
    %55 = vector.multi_reduction <add>, %54, %cst_28 [1] : vector<16x64xf32> to vector<16xf32>
    %56 = vector.shape_cast %55 : vector<16xf32> to vector<16x1xf32>
    %cst_29 = arith.constant 6.400000e+01 : f32
    %57 = vector.broadcast %cst_29 : f32 to vector<16x1xf32>
    %58 = arith.divf %56, %57 : vector<16x1xf32>
    %59 = vector.broadcast %58 : vector<16x1xf32> to vector<16x64xf32>
    %60 = arith.subf %54, %59 : vector<16x64xf32>
    %61 = arith.mulf %60, %60 : vector<16x64xf32>
    %cst_30 = arith.constant dense<0.000000e+00> : vector<16xf32>
    %62 = vector.multi_reduction <add>, %61, %cst_30 [1] : vector<16x64xf32> to vector<16xf32>
    %63 = vector.shape_cast %62 : vector<16xf32> to vector<16x1xf32>
    %cst_31 = arith.constant 6.400000e+01 : f32
    %64 = vector.broadcast %cst_31 : f32 to vector<16x1xf32>
    %65 = arith.divf %63, %64 : vector<16x1xf32>
    %66 = vector.broadcast %58 : vector<16x1xf32> to vector<16x64xf32>
    %67 = arith.subf %54, %66 : vector<16x64xf32>
    %cst_32 = arith.constant 9.99999974E-6 : f32
    %68 = vector.broadcast %cst_32 : f32 to vector<16x1xf32>
    %69 = arith.addf %65, %68 : vector<16x1xf32>
    %70 = math.rsqrt %69 : vector<16x1xf32>
    %71 = vector.broadcast %70 : vector<16x1xf32> to vector<16x64xf32>
    %72 = arith.mulf %67, %71 : vector<16x64xf32>
    %73 = vector.broadcast %1 : vector<1x64xf32> to vector<16x64xf32>
    %74 = arith.mulf %72, %73 : vector<16x64xf32>
    %75 = vector.broadcast %2 : vector<1x64xf32> to vector<16x64xf32>
    %76 = arith.addf %74, %75 : vector<16x64xf32>
    %77 = arith.truncf %76 : vector<16x64xf32> to vector<16x64xbf16>
    %c0_33 = arith.constant 0 : index
    %c0_34 = arith.constant 0 : index
    %78 = vector.load %arg3[%c0_33, %c0_34] : memref<64x64xbf16, #tpu.memory_space<vmem>>, vector<64x64xbf16>
    %cst_35 = arith.constant dense<0.000000e+00> : vector<16x64xf32>
    %79 = tpu.matmul %77, %78, %cst_35 {dimension_numbers = #tpu.dot_dimension_numbers<[1], [0], [0], [1], [0, 0, 1, 1], [], []>} : vector<16x64xbf16>, vector<64x64xbf16>, vector<16x64xf32> -> vector<16x64xf32>
    %80 = vector.broadcast %3 : vector<1x64xf32> to vector<16x64xf32>
    %81 = arith.addf %79, %80 : vector<16x64xf32>
    %82 = tpu.concatenate %81, %81 in 0 : vector<16x64xf32>, vector<16x64xf32> -> vector<32x64xf32>
    %83 = arith.mulf %82, %11 : vector<32x64xf32>
    %84 = arith.truncf %83 : vector<32x64xf32> to vector<32x64xbf16>
    %85 = arith.truncf %47 : vector<128x64xf32> to vector<128x64xbf16>
    %cst_36 = arith.constant dense<0.000000e+00> : vector<32x128xf32>
    %86 = tpu.matmul %84, %85, %cst_36 {dimension_numbers = #tpu.dot_dimension_numbers<[1], [1], [0], [0], [0, 0, 1, 0], [], []>} : vector<32x64xbf16>, vector<128x64xbf16>, vector<32x128xf32> -> vector<32x128xf32>
    %87 = arith.addf %86, %10 : vector<32x128xf32>
    %cst_37 = arith.constant dense<0xFF800000> : vector<32xf32>
    %88 = vector.multi_reduction <maximumf>, %87, %cst_37 [1] : vector<32x128xf32> to vector<32xf32>
    %89 = vector.shape_cast %88 : vector<32xf32> to vector<32x1xf32>
    %90 = vector.broadcast %89 : vector<32x1xf32> to vector<32x128xf32>
    %91 = arith.subf %87, %90 : vector<32x128xf32>
    %92 = math.exp %91 : vector<32x128xf32>
    %cst_38 = arith.constant dense<0.000000e+00> : vector<32xf32>
    %93 = vector.multi_reduction <add>, %92, %cst_38 [1] : vector<32x128xf32> to vector<32xf32>
    %94 = vector.shape_cast %93 : vector<32xf32> to vector<32x1xf32>
    %95 = tpu.reciprocal %94 {approx = true} : vector<32x1xf32> -> vector<32x1xf32>
    %96 = vector.broadcast %95 : vector<32x1xf32> to vector<32x128xf32>
    %97 = arith.mulf %92, %96 : vector<32x128xf32>
    %98 = arith.truncf %97 : vector<32x128xf32> to vector<32x128xbf16>
    %99 = arith.truncf %51 : vector<128x64xf32> to vector<128x64xbf16>
    %cst_39 = arith.constant dense<0.000000e+00> : vector<32x64xf32>
    %100 = tpu.matmul %98, %99, %cst_39 {dimension_numbers = #tpu.dot_dimension_numbers<[1], [0], [0], [1], [0, 0, 1, 1], [], []>} : vector<32x128xbf16>, vector<128x64xbf16>, vector<32x64xf32> -> vector<32x64xf32>
    %101 = arith.mulf %100, %11 : vector<32x64xf32>
    %102 = vector.extract_strided_slice %101 {offsets = [0, 0], sizes = [16, 64], strides = [1, 1]} : vector<32x64xf32> to vector<16x64xf32>
    %103 = vector.extract_strided_slice %101 {offsets = [16, 0], sizes = [16, 64], strides = [1, 1]} : vector<32x64xf32> to vector<16x64xf32>
    %104 = arith.addf %102, %103 : vector<16x64xf32>
    %105 = arith.truncf %104 : vector<16x64xf32> to vector<16x64xbf16>
    %c0_40 = arith.constant 0 : index
    %c0_41 = arith.constant 0 : index
    %106 = vector.load %arg6[%c0_40, %c0_41] : memref<64x64xbf16, #tpu.memory_space<vmem>>, vector<64x64xbf16>
    %cst_42 = arith.constant dense<0.000000e+00> : vector<16x64xf32>
    %107 = tpu.matmul %105, %106, %cst_42 {dimension_numbers = #tpu.dot_dimension_numbers<[1], [0], [0], [1], [0, 0, 1, 1], [], []>} : vector<16x64xbf16>, vector<64x64xbf16>, vector<16x64xf32> -> vector<16x64xf32>
    %108 = arith.addf %54, %107 : vector<16x64xf32>
    %109 = vector.broadcast %6 : vector<1x64xf32> to vector<16x64xf32>
    %110 = arith.addf %108, %109 : vector<16x64xf32>
    %cst_43 = arith.constant dense<0.000000e+00> : vector<16xf32>
    %111 = vector.multi_reduction <add>, %110, %cst_43 [1] : vector<16x64xf32> to vector<16xf32>
    %112 = vector.shape_cast %111 : vector<16xf32> to vector<16x1xf32>
    %cst_44 = arith.constant 6.400000e+01 : f32
    %113 = vector.broadcast %cst_44 : f32 to vector<16x1xf32>
    %114 = arith.divf %112, %113 : vector<16x1xf32>
    %115 = vector.broadcast %114 : vector<16x1xf32> to vector<16x64xf32>
    %116 = arith.subf %110, %115 : vector<16x64xf32>
    %117 = arith.mulf %116, %116 : vector<16x64xf32>
    %cst_45 = arith.constant dense<0.000000e+00> : vector<16xf32>
    %118 = vector.multi_reduction <add>, %117, %cst_45 [1] : vector<16x64xf32> to vector<16xf32>
    %119 = vector.shape_cast %118 : vector<16xf32> to vector<16x1xf32>
    %cst_46 = arith.constant 6.400000e+01 : f32
    %120 = vector.broadcast %cst_46 : f32 to vector<16x1xf32>
    %121 = arith.divf %119, %120 : vector<16x1xf32>
    %122 = vector.broadcast %114 : vector<16x1xf32> to vector<16x64xf32>
    %123 = arith.subf %110, %122 : vector<16x64xf32>
    %cst_47 = arith.constant 9.99999974E-6 : f32
    %124 = vector.broadcast %cst_47 : f32 to vector<16x1xf32>
    %125 = arith.addf %121, %124 : vector<16x1xf32>
    %126 = math.rsqrt %125 : vector<16x1xf32>
    %127 = vector.broadcast %126 : vector<16x1xf32> to vector<16x64xf32>
    %128 = arith.mulf %123, %127 : vector<16x64xf32>
    %129 = vector.broadcast %7 : vector<1x64xf32> to vector<16x64xf32>
    %130 = arith.mulf %128, %129 : vector<16x64xf32>
    %131 = vector.broadcast %8 : vector<1x64xf32> to vector<16x64xf32>
    %132 = arith.addf %130, %131 : vector<16x64xf32>
    %133 = arith.truncf %132 : vector<16x64xf32> to vector<16x64xbf16>
    %c0_48 = arith.constant 0 : index
    %c0_49 = arith.constant 0 : index
    %134 = vector.load %arg7[%c0_48, %c0_49] : memref<64x256xbf16, #tpu.memory_space<vmem>>, vector<64x256xbf16>
    %cst_50 = arith.constant dense<0.000000e+00> : vector<16x256xf32>
    %135 = tpu.matmul %133, %134, %cst_50 {dimension_numbers = #tpu.dot_dimension_numbers<[1], [0], [0], [1], [0, 0, 1, 1], [], []>} : vector<16x64xbf16>, vector<64x256xbf16>, vector<16x256xf32> -> vector<16x256xf32>
    %c0_51 = arith.constant 0 : index
    %c0_52 = arith.constant 0 : index
    %136 = vector.load %arg11[%c0_51, %c0_52] : memref<1x256xf32, #tpu.memory_space<vmem>>, vector<1x256xf32>
    %137 = vector.broadcast %136 : vector<1x256xf32> to vector<16x256xf32>
    %138 = arith.addf %135, %137 : vector<16x256xf32>
    %cst_53 = arith.constant 0.000000e+00 : f32
    %139 = vector.broadcast %cst_53 : f32 to vector<16x256xf32>
    %140 = arith.maximumf %138, %139 : vector<16x256xf32>
    %141 = arith.truncf %140 : vector<16x256xf32> to vector<16x256xbf16>
    %c0_54 = arith.constant 0 : index
    %c0_55 = arith.constant 0 : index
    %142 = vector.load %arg8[%c0_54, %c0_55] : memref<256x64xbf16, #tpu.memory_space<vmem>>, vector<256x64xbf16>
    %cst_56 = arith.constant dense<0.000000e+00> : vector<16x64xf32>
    %143 = tpu.matmul %141, %142, %cst_56 {dimension_numbers = #tpu.dot_dimension_numbers<[1], [0], [0], [1], [0, 0, 1, 1], [], []>} : vector<16x256xbf16>, vector<256x64xbf16>, vector<16x64xf32> -> vector<16x64xf32>
    %144 = arith.addf %110, %143 : vector<16x64xf32>
    %145 = vector.broadcast %9 : vector<1x64xf32> to vector<16x64xf32>
    %146 = arith.addf %144, %145 : vector<16x64xf32>
    %147 = arith.truncf %146 : vector<16x64xf32> to vector<16x64xbf16>
    %c0_57 = arith.constant 0 : index
    %c0_58 = arith.constant 0 : index
    %148 = vector.load %arg9[%c0_57, %c0_58] : memref<64x128xbf16, #tpu.memory_space<vmem>>, vector<64x128xbf16>
    %cst_59 = arith.constant dense<0.000000e+00> : vector<16x128xf32>
    %149 = tpu.matmul %147, %148, %cst_59 {dimension_numbers = #tpu.dot_dimension_numbers<[1], [0], [0], [1], [0, 0, 1, 1], [], []>} : vector<16x64xbf16>, vector<64x128xbf16>, vector<16x128xf32> -> vector<16x128xf32>
    %c0_60 = arith.constant 0 : index
    %c0_61 = arith.constant 0 : index
    %150 = vector.load %arg12[%c0_60, %c0_61] : memref<1x128xf32, #tpu.memory_space<vmem>>, vector<1x128xf32>
    %151 = vector.broadcast %150 : vector<1x128xf32> to vector<16x128xf32>
    %152 = arith.addf %149, %151 : vector<16x128xf32>
    %c16_i32 = arith.constant 16 : i32
    %153 = arith.muli %c0_i32, %c16_i32 : i32
    %154 = tpu.assume_multiple %153, 16 : i32
    %155 = arith.index_cast %154 : i32 to index
    %c0_62 = arith.constant 0 : index
    %156 = vector.load %arg15[%155, %c0_62] : memref<32x128xf32, #tpu.memory_space<vmem>>, vector<16x128xf32>
    tpu.vector_store %arg15[%155, %c0_62], %152 {strides = array<i32>} : memref<32x128xf32, #tpu.memory_space<vmem>>, vector<16x128xf32>,
    %c1_i32 = arith.constant 1 : i32
    %c128_i32_63 = arith.constant 128 : i32
    %157 = arith.muli %c1_i32, %c128_i32_63 : i32
    %158 = tpu.assume_multiple %157, 128 : i32
    %159 = arith.index_cast %158 : i32 to index
    %c0_64 = arith.constant 0 : index
    %160 = vector.load %arg1[%159, %c0_64] : memref<256x28xf32, #tpu.memory_space<vmem>>, vector<128x28xf32>
    %161 = arith.truncf %160 : vector<128x28xf32> to vector<128x28xbf16>
    %c0_65 = arith.constant 0 : index
    %c0_66 = arith.constant 0 : index
    %162 = vector.load %arg2[%c0_65, %c0_66] : memref<28x64xbf16, #tpu.memory_space<vmem>>, vector<28x64xbf16>
    %cst_67 = arith.constant dense<0.000000e+00> : vector<128x64xf32>
    %163 = tpu.matmul %161, %162, %cst_67 {dimension_numbers = #tpu.dot_dimension_numbers<[1], [0], [0], [1], [0, 0, 1, 1], [], []>} : vector<128x28xbf16>, vector<28x64xbf16>, vector<128x64xf32> -> vector<128x64xf32>
    %164 = vector.broadcast %0 : vector<1x64xf32> to vector<128x64xf32>
    %165 = arith.addf %163, %164 : vector<128x64xf32>
    %cst_68 = arith.constant dense<0.000000e+00> : vector<128xf32>
    %166 = vector.multi_reduction <add>, %165, %cst_68 [1] : vector<128x64xf32> to vector<128xf32>
    %167 = vector.shape_cast %166 : vector<128xf32> to vector<128x1xf32>
    %cst_69 = arith.constant 6.400000e+01 : f32
    %168 = vector.broadcast %cst_69 : f32 to vector<128x1xf32>
    %169 = arith.divf %167, %168 : vector<128x1xf32>
    %170 = vector.broadcast %169 : vector<128x1xf32> to vector<128x64xf32>
    %171 = arith.subf %165, %170 : vector<128x64xf32>
    %172 = arith.mulf %171, %171 : vector<128x64xf32>
    %cst_70 = arith.constant dense<0.000000e+00> : vector<128xf32>
    %173 = vector.multi_reduction <add>, %172, %cst_70 [1] : vector<128x64xf32> to vector<128xf32>
    %174 = vector.shape_cast %173 : vector<128xf32> to vector<128x1xf32>
    %cst_71 = arith.constant 6.400000e+01 : f32
    %175 = vector.broadcast %cst_71 : f32 to vector<128x1xf32>
    %176 = arith.divf %174, %175 : vector<128x1xf32>
    %177 = vector.broadcast %169 : vector<128x1xf32> to vector<128x64xf32>
    %178 = arith.subf %165, %177 : vector<128x64xf32>
    %cst_72 = arith.constant 9.99999974E-6 : f32
    %179 = vector.broadcast %cst_72 : f32 to vector<128x1xf32>
    %180 = arith.addf %176, %179 : vector<128x1xf32>
    %181 = math.rsqrt %180 : vector<128x1xf32>
    %182 = vector.broadcast %181 : vector<128x1xf32> to vector<128x64xf32>
    %183 = arith.mulf %178, %182 : vector<128x64xf32>
    %184 = vector.broadcast %1 : vector<1x64xf32> to vector<128x64xf32>
    %185 = arith.mulf %183, %184 : vector<128x64xf32>
    %186 = vector.broadcast %2 : vector<1x64xf32> to vector<128x64xf32>
    %187 = arith.addf %185, %186 : vector<128x64xf32>
    %188 = arith.truncf %187 : vector<128x64xf32> to vector<128x64xbf16>
    %c0_73 = arith.constant 0 : index
    %c0_74 = arith.constant 0 : index
    %189 = vector.load %arg4[%c0_73, %c0_74] : memref<64x64xbf16, #tpu.memory_space<vmem>>, vector<64x64xbf16>
    %cst_75 = arith.constant dense<0.000000e+00> : vector<128x64xf32>
    %190 = tpu.matmul %188, %189, %cst_75 {dimension_numbers = #tpu.dot_dimension_numbers<[1], [0], [0], [1], [0, 0, 1, 1], [], []>} : vector<128x64xbf16>, vector<64x64xbf16>, vector<128x64xf32> -> vector<128x64xf32>
    %191 = vector.broadcast %4 : vector<1x64xf32> to vector<128x64xf32>
    %192 = arith.addf %190, %191 : vector<128x64xf32>
    %c0_76 = arith.constant 0 : index
    %c0_77 = arith.constant 0 : index
    %193 = vector.load %arg5[%c0_76, %c0_77] : memref<64x64xbf16, #tpu.memory_space<vmem>>, vector<64x64xbf16>
    %cst_78 = arith.constant dense<0.000000e+00> : vector<128x64xf32>
    %194 = tpu.matmul %188, %193, %cst_78 {dimension_numbers = #tpu.dot_dimension_numbers<[1], [0], [0], [1], [0, 0, 1, 1], [], []>} : vector<128x64xbf16>, vector<64x64xbf16>, vector<128x64xf32> -> vector<128x64xf32>
    %195 = vector.broadcast %5 : vector<1x64xf32> to vector<128x64xf32>
    %196 = arith.addf %194, %195 : vector<128x64xf32>
    %197 = vector.shape_cast %165 : vector<128x64xf32> to vector<16x8x64xf32>
    %198 = vector.extract_strided_slice %197 {offsets = [0, 7, 0], sizes = [16, 1, 64], strides = [1, 1, 1]} : vector<16x8x64xf32> to vector<16x1x64xf32>
    %199 = vector.shape_cast %198 : vector<16x1x64xf32> to vector<16x64xf32>
    %cst_79 = arith.constant dense<0.000000e+00> : vector<16xf32>
    %200 = vector.multi_reduction <add>, %199, %cst_79 [1] : vector<16x64xf32> to vector<16xf32>
    %201 = vector.shape_cast %200 : vector<16xf32> to vector<16x1xf32>
    %cst_80 = arith.constant 6.400000e+01 : f32
    %202 = vector.broadcast %cst_80 : f32 to vector<16x1xf32>
    %203 = arith.divf %201, %202 : vector<16x1xf32>
    %204 = vector.broadcast %203 : vector<16x1xf32> to vector<16x64xf32>
    %205 = arith.subf %199, %204 : vector<16x64xf32>
    %206 = arith.mulf %205, %205 : vector<16x64xf32>
    %cst_81 = arith.constant dense<0.000000e+00> : vector<16xf32>
    %207 = vector.multi_reduction <add>, %206, %cst_81 [1] : vector<16x64xf32> to vector<16xf32>
    %208 = vector.shape_cast %207 : vector<16xf32> to vector<16x1xf32>
    %cst_82 = arith.constant 6.400000e+01 : f32
    %209 = vector.broadcast %cst_82 : f32 to vector<16x1xf32>
    %210 = arith.divf %208, %209 : vector<16x1xf32>
    %211 = vector.broadcast %203 : vector<16x1xf32> to vector<16x64xf32>
    %212 = arith.subf %199, %211 : vector<16x64xf32>
    %cst_83 = arith.constant 9.99999974E-6 : f32
    %213 = vector.broadcast %cst_83 : f32 to vector<16x1xf32>
    %214 = arith.addf %210, %213 : vector<16x1xf32>
    %215 = math.rsqrt %214 : vector<16x1xf32>
    %216 = vector.broadcast %215 : vector<16x1xf32> to vector<16x64xf32>
    %217 = arith.mulf %212, %216 : vector<16x64xf32>
    %218 = vector.broadcast %1 : vector<1x64xf32> to vector<16x64xf32>
    %219 = arith.mulf %217, %218 : vector<16x64xf32>
    %220 = vector.broadcast %2 : vector<1x64xf32> to vector<16x64xf32>
    %221 = arith.addf %219, %220 : vector<16x64xf32>
    %222 = arith.truncf %221 : vector<16x64xf32> to vector<16x64xbf16>
    %c0_84 = arith.constant 0 : index
    %c0_85 = arith.constant 0 : index
    %223 = vector.load %arg3[%c0_84, %c0_85] : memref<64x64xbf16, #tpu.memory_space<vmem>>, vector<64x64xbf16>
    %cst_86 = arith.constant dense<0.000000e+00> : vector<16x64xf32>
    %224 = tpu.matmul %222, %223, %cst_86 {dimension_numbers = #tpu.dot_dimension_numbers<[1], [0], [0], [1], [0, 0, 1, 1], [], []>} : vector<16x64xbf16>, vector<64x64xbf16>, vector<16x64xf32> -> vector<16x64xf32>
    %225 = vector.broadcast %3 : vector<1x64xf32> to vector<16x64xf32>
    %226 = arith.addf %224, %225 : vector<16x64xf32>
    %227 = tpu.concatenate %226, %226 in 0 : vector<16x64xf32>, vector<16x64xf32> -> vector<32x64xf32>
    %228 = arith.mulf %227, %11 : vector<32x64xf32>
    %229 = arith.truncf %228 : vector<32x64xf32> to vector<32x64xbf16>
    %230 = arith.truncf %192 : vector<128x64xf32> to vector<128x64xbf16>
    %cst_87 = arith.constant dense<0.000000e+00> : vector<32x128xf32>
    %231 = tpu.matmul %229, %230, %cst_87 {dimension_numbers = #tpu.dot_dimension_numbers<[1], [1], [0], [0], [0, 0, 1, 0], [], []>} : vector<32x64xbf16>, vector<128x64xbf16>, vector<32x128xf32> -> vector<32x128xf32>
    %232 = arith.addf %231, %10 : vector<32x128xf32>
    %cst_88 = arith.constant dense<0xFF800000> : vector<32xf32>
    %233 = vector.multi_reduction <maximumf>, %232, %cst_88 [1] : vector<32x128xf32> to vector<32xf32>
    %234 = vector.shape_cast %233 : vector<32xf32> to vector<32x1xf32>
    %235 = vector.broadcast %234 : vector<32x1xf32> to vector<32x128xf32>
    %236 = arith.subf %232, %235 : vector<32x128xf32>
    %237 = math.exp %236 : vector<32x128xf32>
    %cst_89 = arith.constant dense<0.000000e+00> : vector<32xf32>
    %238 = vector.multi_reduction <add>, %237, %cst_89 [1] : vector<32x128xf32> to vector<32xf32>
    %239 = vector.shape_cast %238 : vector<32xf32> to vector<32x1xf32>
    %240 = tpu.reciprocal %239 {approx = true} : vector<32x1xf32> -> vector<32x1xf32>
    %241 = vector.broadcast %240 : vector<32x1xf32> to vector<32x128xf32>
    %242 = arith.mulf %237, %241 : vector<32x128xf32>
    %243 = arith.truncf %242 : vector<32x128xf32> to vector<32x128xbf16>
    %244 = arith.truncf %196 : vector<128x64xf32> to vector<128x64xbf16>
    %cst_90 = arith.constant dense<0.000000e+00> : vector<32x64xf32>
    %245 = tpu.matmul %243, %244, %cst_90 {dimension_numbers = #tpu.dot_dimension_numbers<[1], [0], [0], [1], [0, 0, 1, 1], [], []>} : vector<32x128xbf16>, vector<128x64xbf16>, vector<32x64xf32> -> vector<32x64xf32>
    %246 = arith.mulf %245, %11 : vector<32x64xf32>
    %247 = vector.extract_strided_slice %246 {offsets = [0, 0], sizes = [16, 64], strides = [1, 1]} : vector<32x64xf32> to vector<16x64xf32>
    %248 = vector.extract_strided_slice %246 {offsets = [16, 0], sizes = [16, 64], strides = [1, 1]} : vector<32x64xf32> to vector<16x64xf32>
    %249 = arith.addf %247, %248 : vector<16x64xf32>
    %250 = arith.truncf %249 : vector<16x64xf32> to vector<16x64xbf16>
    %c0_91 = arith.constant 0 : index
    %c0_92 = arith.constant 0 : index
    %251 = vector.load %arg6[%c0_91, %c0_92] : memref<64x64xbf16, #tpu.memory_space<vmem>>, vector<64x64xbf16>
    %cst_93 = arith.constant dense<0.000000e+00> : vector<16x64xf32>
    %252 = tpu.matmul %250, %251, %cst_93 {dimension_numbers = #tpu.dot_dimension_numbers<[1], [0], [0], [1], [0, 0, 1, 1], [], []>} : vector<16x64xbf16>, vector<64x64xbf16>, vector<16x64xf32> -> vector<16x64xf32>
    %253 = arith.addf %199, %252 : vector<16x64xf32>
    %254 = vector.broadcast %6 : vector<1x64xf32> to vector<16x64xf32>
    %255 = arith.addf %253, %254 : vector<16x64xf32>
    %cst_94 = arith.constant dense<0.000000e+00> : vector<16xf32>
    %256 = vector.multi_reduction <add>, %255, %cst_94 [1] : vector<16x64xf32> to vector<16xf32>
    %257 = vector.shape_cast %256 : vector<16xf32> to vector<16x1xf32>
    %cst_95 = arith.constant 6.400000e+01 : f32
    %258 = vector.broadcast %cst_95 : f32 to vector<16x1xf32>
    %259 = arith.divf %257, %258 : vector<16x1xf32>
    %260 = vector.broadcast %259 : vector<16x1xf32> to vector<16x64xf32>
    %261 = arith.subf %255, %260 : vector<16x64xf32>
    %262 = arith.mulf %261, %261 : vector<16x64xf32>
    %cst_96 = arith.constant dense<0.000000e+00> : vector<16xf32>
    %263 = vector.multi_reduction <add>, %262, %cst_96 [1] : vector<16x64xf32> to vector<16xf32>
    %264 = vector.shape_cast %263 : vector<16xf32> to vector<16x1xf32>
    %cst_97 = arith.constant 6.400000e+01 : f32
    %265 = vector.broadcast %cst_97 : f32 to vector<16x1xf32>
    %266 = arith.divf %264, %265 : vector<16x1xf32>
    %267 = vector.broadcast %259 : vector<16x1xf32> to vector<16x64xf32>
    %268 = arith.subf %255, %267 : vector<16x64xf32>
    %cst_98 = arith.constant 9.99999974E-6 : f32
    %269 = vector.broadcast %cst_98 : f32 to vector<16x1xf32>
    %270 = arith.addf %266, %269 : vector<16x1xf32>
    %271 = math.rsqrt %270 : vector<16x1xf32>
    %272 = vector.broadcast %271 : vector<16x1xf32> to vector<16x64xf32>
    %273 = arith.mulf %268, %272 : vector<16x64xf32>
    %274 = vector.broadcast %7 : vector<1x64xf32> to vector<16x64xf32>
    %275 = arith.mulf %273, %274 : vector<16x64xf32>
    %276 = vector.broadcast %8 : vector<1x64xf32> to vector<16x64xf32>
    %277 = arith.addf %275, %276 : vector<16x64xf32>
    %278 = arith.truncf %277 : vector<16x64xf32> to vector<16x64xbf16>
    %c0_99 = arith.constant 0 : index
    %c0_100 = arith.constant 0 : index
    %279 = vector.load %arg7[%c0_99, %c0_100] : memref<64x256xbf16, #tpu.memory_space<vmem>>, vector<64x256xbf16>
    %cst_101 = arith.constant dense<0.000000e+00> : vector<16x256xf32>
    %280 = tpu.matmul %278, %279, %cst_101 {dimension_numbers = #tpu.dot_dimension_numbers<[1], [0], [0], [1], [0, 0, 1, 1], [], []>} : vector<16x64xbf16>, vector<64x256xbf16>, vector<16x256xf32> -> vector<16x256xf32>
    %c0_102 = arith.constant 0 : index
    %c0_103 = arith.constant 0 : index
    %281 = vector.load %arg11[%c0_102, %c0_103] : memref<1x256xf32, #tpu.memory_space<vmem>>, vector<1x256xf32>
    %282 = vector.broadcast %281 : vector<1x256xf32> to vector<16x256xf32>
    %283 = arith.addf %280, %282 : vector<16x256xf32>
    %cst_104 = arith.constant 0.000000e+00 : f32
    %284 = vector.broadcast %cst_104 : f32 to vector<16x256xf32>
    %285 = arith.maximumf %283, %284 : vector<16x256xf32>
    %286 = arith.truncf %285 : vector<16x256xf32> to vector<16x256xbf16>
    %c0_105 = arith.constant 0 : index
    %c0_106 = arith.constant 0 : index
    %287 = vector.load %arg8[%c0_105, %c0_106] : memref<256x64xbf16, #tpu.memory_space<vmem>>, vector<256x64xbf16>
    %cst_107 = arith.constant dense<0.000000e+00> : vector<16x64xf32>
    %288 = tpu.matmul %286, %287, %cst_107 {dimension_numbers = #tpu.dot_dimension_numbers<[1], [0], [0], [1], [0, 0, 1, 1], [], []>} : vector<16x256xbf16>, vector<256x64xbf16>, vector<16x64xf32> -> vector<16x64xf32>
    %289 = arith.addf %255, %288 : vector<16x64xf32>
    %290 = vector.broadcast %9 : vector<1x64xf32> to vector<16x64xf32>
    %291 = arith.addf %289, %290 : vector<16x64xf32>
    %292 = arith.truncf %291 : vector<16x64xf32> to vector<16x64xbf16>
    %c0_108 = arith.constant 0 : index
    %c0_109 = arith.constant 0 : index
    %293 = vector.load %arg9[%c0_108, %c0_109] : memref<64x128xbf16, #tpu.memory_space<vmem>>, vector<64x128xbf16>
    %cst_110 = arith.constant dense<0.000000e+00> : vector<16x128xf32>
    %294 = tpu.matmul %292, %293, %cst_110 {dimension_numbers = #tpu.dot_dimension_numbers<[1], [0], [0], [1], [0, 0, 1, 1], [], []>} : vector<16x64xbf16>, vector<64x128xbf16>, vector<16x128xf32> -> vector<16x128xf32>
    %c0_111 = arith.constant 0 : index
    %c0_112 = arith.constant 0 : index
    %295 = vector.load %arg12[%c0_111, %c0_112] : memref<1x128xf32, #tpu.memory_space<vmem>>, vector<1x128xf32>
    %296 = vector.broadcast %295 : vector<1x128xf32> to vector<16x128xf32>
    %297 = arith.addf %294, %296 : vector<16x128xf32>
    %c16_i32_113 = arith.constant 16 : i32
    %298 = arith.muli %c1_i32, %c16_i32_113 : i32
    %299 = tpu.assume_multiple %298, 16 : i32
    %300 = arith.index_cast %299 : i32 to index
    %c0_114 = arith.constant 0 : index
    %301 = vector.load %arg15[%300, %c0_114] : memref<32x128xf32, #tpu.memory_space<vmem>>, vector<16x128xf32>
    tpu.vector_store %arg15[%300, %c0_114], %297 {strides = array<i32>} : memref<32x128xf32, #tpu.memory_space<vmem>>, vector<16x128xf32>,
    %c2_i32 = arith.constant 2 : i32
    return
  }
  func.func @transform_0(%arg0: i32) -> (i32, i32) {
    %c0_i32 = arith.constant 0 : i32
    %c0_i32_0 = arith.constant 0 : i32
    return %arg0, %c0_i32 : i32, i32
  }
  func.func @transform_1(%arg0: i32) -> (i32, i32) {
    %c0_i32 = arith.constant 0 : i32
    %c0_i32_0 = arith.constant 0 : i32
    %c0_i32_1 = arith.constant 0 : i32
    return %c0_i32, %c0_i32_0 : i32, i32
  }
  func.func @transform_2(%arg0: i32) -> (i32, i32) {
    %c0_i32 = arith.constant 0 : i32
    %c0_i32_0 = arith.constant 0 : i32
    %c0_i32_1 = arith.constant 0 : i32
    return %c0_i32, %c0_i32_0 : i32, i32
  }
  func.func @transform_3(%arg0: i32) -> (i32, i32) {
    %c0_i32 = arith.constant 0 : i32
    %c0_i32_0 = arith.constant 0 : i32
    %c0_i32_1 = arith.constant 0 : i32
    return %c0_i32, %c0_i32_0 : i32, i32
  }
  func.func @transform_4(%arg0: i32) -> (i32, i32) {
    %c0_i32 = arith.constant 0 : i32
    %c0_i32_0 = arith.constant 0 : i32
    %c0_i32_1 = arith.constant 0 : i32
    return %c0_i32, %c0_i32_0 : i32, i32
  }
  func.func @transform_5(%arg0: i32) -> (i32, i32) {
    %c0_i32 = arith.constant 0 : i32
    %c0_i32_0 = arith.constant 0 : i32
    %c0_i32_1 = arith.constant 0 : i32
    return %c0_i32, %c0_i32_0 : i32, i32
  }
  func.func @transform_6(%arg0: i32) -> (i32, i32) {
    %c0_i32 = arith.constant 0 : i32
    %c0_i32_0 = arith.constant 0 : i32
    %c0_i32_1 = arith.constant 0 : i32
    return %c0_i32, %c0_i32_0 : i32, i32
  }
  func.func @transform_7(%arg0: i32) -> (i32, i32) {
    %c0_i32 = arith.constant 0 : i32
    %c0_i32_0 = arith.constant 0 : i32
    %c0_i32_1 = arith.constant 0 : i32
    return %c0_i32, %c0_i32_0 : i32, i32
  }
  func.func @transform_8(%arg0: i32) -> (i32, i32) {
    %c0_i32 = arith.constant 0 : i32
    %c0_i32_0 = arith.constant 0 : i32
    %c0_i32_1 = arith.constant 0 : i32
    return %c0_i32, %c0_i32_0 : i32, i32
  }
  func.func @transform_9(%arg0: i32) -> (i32, i32) {
    %c0_i32 = arith.constant 0 : i32
    %c0_i32_0 = arith.constant 0 : i32
    %c0_i32_1 = arith.constant 0 : i32
    return %c0_i32, %c0_i32_0 : i32, i32
  }
  func.func @transform_10(%arg0: i32) -> (i32, i32) {
    %c0_i32 = arith.constant 0 : i32
    %c0_i32_0 = arith.constant 0 : i32
    %c0_i32_1 = arith.constant 0 : i32
    return %c0_i32, %c0_i32_0 : i32, i32
  }
  func.func @transform_11(%arg0: i32) -> (i32, i32) {
    %c0_i32 = arith.constant 0 : i32
    %c0_i32_0 = arith.constant 0 : i32
    %c0_i32_1 = arith.constant 0 : i32
    return %c0_i32, %c0_i32_0 : i32, i32
  }
  func.func @transform_12(%arg0: i32) -> (i32, i32) {
    %c0_i32 = arith.constant 0 : i32
    %c0_i32_0 = arith.constant 0 : i32
    %c0_i32_1 = arith.constant 0 : i32
    return %c0_i32, %c0_i32_0 : i32, i32
  }
  func.func @transform_13(%arg0: i32) -> (i32, i32) {
    %c0_i32 = arith.constant 0 : i32
    %c0_i32_0 = arith.constant 0 : i32
    %c0_i32_1 = arith.constant 0 : i32
    return %c0_i32, %c0_i32_0 : i32, i32
  }
  func.func @transform_14(%arg0: i32) -> (i32, i32) {
    %c0_i32 = arith.constant 0 : i32
    %c0_i32_0 = arith.constant 0 : i32
    return %arg0, %c0_i32 : i32, i32
  }
}

</mosaic_0001>

<llo_original>
// kernel: hypernet_classifier_forward.1
$region0: #{hypernet_classifier_forward.1}
  #allocation0 [shape = 'u32[]', space=smem, size = 0x4, offset = 0x4, fixed_abs, tag = 'smem constant byte address 0x4 - core index']
  #allocation1 [shape = 'u32[144,128]{1,0:T(1,128)}', space=vmem, size = 0x12000, scoped, tag = 'internal scratch']
  %s0 = inlined_call_operand.vmem [shape: f32[256,28], index: 0, kind: input, shape index: {}]
  %s1 = inlined_call_operand.vmem [shape: bf16[28,64], index: 1, kind: input, shape index: {}]
  %s2 = inlined_call_operand.vmem [shape: bf16[64,64], index: 2, kind: input, shape index: {}]
  %s3 = inlined_call_operand.vmem [shape: bf16[64,64], index: 3, kind: input, shape index: {}]
  %s4 = inlined_call_operand.vmem [shape: bf16[64,64], index: 4, kind: input, shape index: {}]
  %s5 = inlined_call_operand.vmem [shape: bf16[64,64], index: 5, kind: input, shape index: {}]
  %s6 = inlined_call_operand.vmem [shape: bf16[64,256], index: 6, kind: input, shape index: {}]
  %s7 = inlined_call_operand.vmem [shape: bf16[256,64], index: 7, kind: input, shape index: {}]
  %s8 = inlined_call_operand.vmem [shape: bf16[64,128], index: 8, kind: input, shape index: {}]
  %s9 = inlined_call_operand.vmem [shape: f32[16,64], index: 9, kind: input, shape index: {}]
  %s10 = inlined_call_operand.vmem [shape: f32[1,256], index: 10, kind: input, shape index: {}]
  %s11 = inlined_call_operand.vmem [shape: f32[1,128], index: 11, kind: input, shape index: {}]
  %s12 = inlined_call_operand.vmem [shape: f32[32,128], index: 12, kind: input, shape index: {}]
  %s13 = inlined_call_operand.vmem [shape: f32[32,64], index: 13, kind: input, shape index: {}]
  %s14 = inlined_call_operand.vmem [shape: f32[32,128], index: 14, kind: output, shape index: {}]
  %s15 = sld [smem:[#allocation0]]
  $region66: #{hypernet_classifier_forward.1} parent=0
    _
  %s17 = ssub.s32 1, %s15
  %s18 = scalar_select 0, %s17, %s15
  // Predicated region
  $region2: #{hypernet_classifier_forward.1} parent=0 // pred_check
    _
  $region3: #{hypernet_classifier_forward.1} parent=0 // pred_check_branch
    %20 = sbr.rel (0) target = $region5
  $region4: #{hypernet_classifier_forward.1} parent=0 // pred_region
    _
  $region5: #{hypernet_classifier_forward.1} parent=0 // pred_fallthru
    _
  // Predicated region
  $region6: #{hypernet_classifier_forward.1} parent=0 // pred_check
    _
  $region7: #{hypernet_classifier_forward.1} parent=0 // pred_check_branch
    %22 = sbr.rel (0) target = $region9
  $region8: #{hypernet_classifier_forward.1} parent=0 // pred_region
    _
  $region9: #{hypernet_classifier_forward.1} parent=0 // pred_fallthru
    _
  // Predicated region
  $region10: #{hypernet_classifier_forward.1} parent=0 // pred_check
    _
  $region11: #{hypernet_classifier_forward.1} parent=0 // pred_check_branch
    %24 = sbr.rel (0) target = $region13
  $region12: #{hypernet_classifier_forward.1} parent=0 // pred_region
    _
  $region13: #{hypernet_classifier_forward.1} parent=0 // pred_fallthru
    _
  // Predicated region
  $region14: #{hypernet_classifier_forward.1} parent=0 // pred_check
    _
  $region15: #{hypernet_classifier_forward.1} parent=0 // pred_check_branch
    %26 = sbr.rel (0) target = $region17
  $region16: #{hypernet_classifier_forward.1} parent=0 // pred_region
    _
  $region17: #{hypernet_classifier_forward.1} parent=0 // pred_fallthru
    _
  // Predicated region
  $region18: #{hypernet_classifier_forward.1} parent=0 // pred_check
    _
  $region19: #{hypernet_classifier_forward.1} parent=0 // pred_check_branch
    %28 = sbr.rel (0) target = $region21
  $region20: #{hypernet_classifier_forward.1} parent=0 // pred_region
    _
  $region21: #{hypernet_classifier_forward.1} parent=0 // pred_fallthru
    _
  // Predicated region
  $region22: #{hypernet_classifier_forward.1} parent=0 // pred_check
    _
  $region23: #{hypernet_classifier_forward.1} parent=0 // pred_check_branch
    %30 = sbr.rel (0) target = $region25
  $region24: #{hypernet_classifier_forward.1} parent=0 // pred_region
    _
  $region25: #{hypernet_classifier_forward.1} parent=0 // pred_fallthru
    _
  // Predicated region
  $region26: #{hypernet_classifier_forward.1} parent=0 // pred_check
    _
  $region27: #{hypernet_classifier_forward.1} parent=0 // pred_check_branch
    %32 = sbr.rel (0) target = $region29
  $region28: #{hypernet_classifier_forward.1} parent=0 // pred_region
    _
  $region29: #{hypernet_classifier_forward.1} parent=0 // pred_fallthru
    _
  // Predicated region
  $region30: #{hypernet_classifier_forward.1} parent=0 // pred_check
    _
  $region31: #{hypernet_classifier_forward.1} parent=0 // pred_check_branch
    %34 = sbr.rel (0) target = $region33
  $region32: #{hypernet_classifier_forward.1} parent=0 // pred_region
    _
  $region33: #{hypernet_classifier_forward.1} parent=0 // pred_fallthru
    _
  // Predicated region
  $region34: #{hypernet_classifier_forward.1} parent=0 // pred_check
    _
  $region35: #{hypernet_classifier_forward.1} parent=0 // pred_check_branch
    %36 = sbr.rel (0) target = $region37
  $region36: #{hypernet_classifier_forward.1} parent=0 // pred_region
    _
  $region37: #{hypernet_classifier_forward.1} parent=0 // pred_fallthru
    _
  // Predicated region
  $region38: #{hypernet_classifier_forward.1} parent=0 // pred_check
    _
  $region39: #{hypernet_classifier_forward.1} parent=0 // pred_check_branch
    %38 = sbr.rel (0) target = $region41
  $region40: #{hypernet_classifier_forward.1} parent=0 // pred_region
    _
  $region41: #{hypernet_classifier_forward.1} parent=0 // pred_fallthru
    _
  // Predicated region
  $region42: #{hypernet_classifier_forward.1} parent=0 // pred_check
    _
  $region43: #{hypernet_classifier_forward.1} parent=0 // pred_check_branch
    %40 = sbr.rel (0) target = $region45
  $region44: #{hypernet_classifier_forward.1} parent=0 // pred_region
    _
  $region45: #{hypernet_classifier_forward.1} parent=0 // pred_fallthru
    _
  // Predicated region
  $region46: #{hypernet_classifier_forward.1} parent=0 // pred_check
    _
  $region47: #{hypernet_classifier_forward.1} parent=0 // pred_check_branch
    %42 = sbr.rel (0) target = $region49
  $region48: #{hypernet_classifier_forward.1} parent=0 // pred_region
    _
  $region49: #{hypernet_classifier_forward.1} parent=0 // pred_fallthru
    _
  // Predicated region
  $region50: #{hypernet_classifier_forward.1} parent=0 // pred_check
    _
  $region51: #{hypernet_classifier_forward.1} parent=0 // pred_check_branch
    %44 = sbr.rel (0) target = $region53
  $region52: #{hypernet_classifier_forward.1} parent=0 // pred_region
    _
  $region53: #{hypernet_classifier_forward.1} parent=0 // pred_fallthru
    _
  // Predicated region
  $region54: #{hypernet_classifier_forward.1} parent=0 // pred_check
    _
  $region55: #{hypernet_classifier_forward.1} parent=0 // pred_check_branch
    %46 = sbr.rel (0) target = $region57
  $region56: #{hypernet_classifier_forward.1} parent=0 // pred_region
    _
  $region57: #{hypernet_classifier_forward.1} parent=0 // pred_fallthru
    _
  %v48 = vld [vmem:[%s9] sm:$0x1]
  %v49 = vld [vmem:[%s9 + $0x1] sm:$0x1]
  %v50 = vld [vmem:[%s9 + $0x2] sm:$0x1]
  %v51 = vld [vmem:[%s9 + $0x3] sm:$0x1]
  %v52 = vld [vmem:[%s9 + $0x4] sm:$0x1]
  %v53 = vld [vmem:[%s9 + $0x5] sm:$0x1]
  %v54 = vld [vmem:[%s9 + $0x6] sm:$0x1]
  %v55 = vld [vmem:[%s9 + $0x7] sm:$0x1]
  %v56 = vld [vmem:[%s9 + $0x8] sm:$0x1]
  %v57 = vld [vmem:[%s9 + $0x9] sm:$0x1]
  %v58 = vld [vmem:[%s12] sm:$0xff]
  %v59 = vld [vmem:[%s12 + $0x8] sm:$0xff]
  %v60 = vld [vmem:[%s12 + $0x10] sm:$0xff]
  %v61 = vld [vmem:[%s12 + $0x18] sm:$0xff]
  %v62 = vld [vmem:[%s13] sm:$0xff]
  %v63 = vld [vmem:[%s13 + $0x8] sm:$0xff]
  %v64 = vld [vmem:[%s13 + $0x10] sm:$0xff]
  %v65 = vld [vmem:[%s13 + $0x18] sm:$0xff]
  %v66 = vld [vmem:[%s0] sm:$0xff]
  %v67 = vld [vmem:[%s0 + $0x8] sm:$0xff]
  %v68 = vld [vmem:[%s0 + $0x10] sm:$0xff]
  %v69 = vld [vmem:[%s0 + $0x18] sm:$0xff]
  %v70 = vld [vmem:[%s0 + $0x20] sm:$0xff]
  %v71 = vld [vmem:[%s0 + $0x28] sm:$0xff]
  %v72 = vld [vmem:[%s0 + $0x30] sm:$0xff]
  %v73 = vld [vmem:[%s0 + $0x38] sm:$0xff]
  %v74 = vld [vmem:[%s0 + $0x40] sm:$0xff]
  %v75 = vld [vmem:[%s0 + $0x48] sm:$0xff]
  %v76 = vld [vmem:[%s0 + $0x50] sm:$0xff]
  %v77 = vld [vmem:[%s0 + $0x58] sm:$0xff]
  %v78 = vld [vmem:[%s0 + $0x60] sm:$0xff]
  %v79 = vld [vmem:[%s0 + $0x68] sm:$0xff]
  %v80 = vld [vmem:[%s0 + $0x70] sm:$0xff]
  %v81 = vld [vmem:[%s0 + $0x78] sm:$0xff]
  %v82 = vpack.c.bf16 %v67, %v66
  %v83 = vpack.c.bf16 %v69, %v68
  %v84 = vpack.c.bf16 %v71, %v70
  %v85 = vpack.c.bf16 %v73, %v72
  %v86 = vpack.c.bf16 %v75, %v74
  %v87 = vpack.c.bf16 %v77, %v76
  %v88 = vpack.c.bf16 %v79, %v78
  %v89 = vpack.c.bf16 %v81, %v80
  %v90 = vld [vmem:[%s1] sm:$0xf]
  %v91 = vld [vmem:[%s1 + $0x4] sm:$0xf]
  %v92 = vld [vmem:[%s1 + $0x8] sm:$0xf]
  %v93 = vld [vmem:[%s1 + $0xc] sm:$0x3]
  %v94 = vlaneseq
  %v95 = vshrl.u32 %v94, 7
  %v96 = vsub.s32 0, %v95
  %v97 = vrot.slane %v48, %v96
  %v102 = vunpack.c.l.b16 %v90
  %v103 = vunpack.c.l.b16 %v91
  %v104 = vunpack.c.l.b16 %v92
  %v105 = vunpack.c.l.b16 %v93
  %v106 = vpack.c.b16 %v103, %v102
  %v107 = vpack.c.b16 %v105, %v104
  %vm109 = vcmask 228352
  %v111 = vsel %vm109, %v82, 0
  %v114 = vsel %vm109, %v83, 0
  %v117 = vsel %vm109, %v84, 0
  %v120 = vsel %vm109, %v85, 0
  %v123 = vsel %vm109, %v86, 0
  %v126 = vsel %vm109, %v87, 0
  %v129 = vsel %vm109, %v88, 0
  %v132 = vsel %vm109, %v89, 0
  %vm134 = vcmask 1045504
  %v136 = vsel %vm134, %v107, 0
  %138 = vmatprep.subr.bf16.mxu0 0
  %139 = vmatpush1.bf16.msra.mxu0 0
  %140 = vmatprep.subr.bf16.mxu0 0
  %141 = vmatpush1.bf16.msra.mxu0 0
  %142 = vmatprep.subr.bf16.mxu0 0
  %143 = vmatpush1.bf16.msra.mxu0 0
  %144 = vmatprep.subr.bf16.mxu0 0
  %145 = vmatpush1.bf16.msra.mxu0 0
  %146 = vmatprep.subr.bf16.mxu0 0
  %147 = vmatpush1.bf16.msra.mxu0 0
  %148 = vmatprep.subr.bf16.mxu0 0
  %149 = vmatpush1.bf16.msra.mxu0 0
  %150 = vmatprep.subr.bf16.mxu0 0
  %151 = vmatpush1.bf16.msra.mxu0 %v136
  %152 = vmatprep.subr.bf16.mxu0 0
  %153 = vmatpush1.bf16.msra.mxu0 %v106
  %154 = vmatprep.subr.bf16.mxu0 0
  %155 = vmatpush2.bf16.msra.mxu0 0
  %156 = vmatprep.subr.bf16.mxu0 0
  %157 = vmatpush2.bf16.msra.mxu0 0
  %158 = vmatprep.subr.bf16.mxu0 0
  %159 = vmatpush2.bf16.msra.mxu0 0
  %160 = vmatprep.subr.bf16.mxu0 0
  %161 = vmatpush2.bf16.msra.mxu0 0
  %162 = vmatprep.subr.bf16.mxu0 0
  %163 = vmatpush2.bf16.msra.mxu0 0
  %164 = vmatprep.subr.bf16.mxu0 0
  %165 = vmatpush2.bf16.msra.mxu0 0
  %166 = vmatprep.subr.bf16.mxu0 0
  %167 = vmatpush2.bf16.msra.mxu0 0
  %168 = vmatprep.subr.bf16.mxu0 0
  %169 = vmatpush2.bf16.msra.mxu0 0
  %170 = vmatprep.mubr.bf16.mxu0 0
  %171 = vmatmul.mubr.bf16.gmra.mxu0 %v111
  %v172 = vpop.f32.mrf.mxu0
  %v173 = vadd.f32 %v97, %v172
  %v174 = vpop.f32.mrf.mxu0
  %v175 = vpop.f32.mrf.mxu0
  %v176 = vadd.f32 %v97, %v175
  %v177 = vpop.f32.mrf.mxu0
  %178 = vmatprep.mubr.bf16.mxu0 0
  %179 = vmatmul.mubr.bf16.gmra.mxu0 %v114
  %v180 = vpop.f32.mrf.mxu0
  %v181 = vadd.f32 %v97, %v180
  %v182 = vpop.f32.mrf.mxu0
  %v183 = vpop.f32.mrf.mxu0
  %v184 = vadd.f32 %v97, %v183
  %v185 = vpop.f32.mrf.mxu0
  %186 = vmatprep.mubr.bf16.mxu0 0
  %187 = vmatmul.mubr.bf16.gmra.mxu0 %v117
  %v188 = vpop.f32.mrf.mxu0
  %v189 = vadd.f32 %v97, %v188
  %v190 = vpop.f32.mrf.mxu0
  %v191 = vpop.f32.mrf.mxu0
  %v192 = vadd.f32 %v97, %v191
  %v193 = vpop.f32.mrf.mxu0
  %194 = vmatprep.mubr.bf16.mxu0 0
  %195 = vmatmul.mubr.bf16.gmra.mxu0 %v120
  %v196 = vpop.f32.mrf.mxu0
  %v197 = vadd.f32 %v97, %v196
  %v198 = vpop.f32.mrf.mxu0
  %v199 = vpop.f32.mrf.mxu0
  %v200 = vadd.f32 %v97, %v199
  %v201 = vpop.f32.mrf.mxu0
  %202 = vmatprep.mubr.bf16.mxu0 0
  %203 = vmatmul.mubr.bf16.gmra.mxu0 %v123
  %v204 = vpop.f32.mrf.mxu0
  %v205 = vadd.f32 %v97, %v204
  %v206 = vpop.f32.mrf.mxu0
  %v207 = vpop.f32.mrf.mxu0
  %v208 = vadd.f32 %v97, %v207
  %v209 = vpop.f32.mrf.mxu0
  %210 = vmatprep.mubr.bf16.mxu0 0
  %211 = vmatmul.mubr.bf16.gmra.mxu0 %v126
  %v212 = vpop.f32.mrf.mxu0
  %v213 = vadd.f32 %v97, %v212
  %v214 = vpop.f32.mrf.mxu0
  %v215 = vpop.f32.mrf.mxu0
  %v216 = vadd.f32 %v97, %v215
  %v217 = vpop.f32.mrf.mxu0
  %218 = vmatprep.mubr.bf16.mxu0 0
  %219 = vmatmul.mubr.bf16.gmra.mxu0 %v129
  %v220 = vpop.f32.mrf.mxu0
  %v221 = vadd.f32 %v97, %v220
  %v222 = vpop.f32.mrf.mxu0
  %v223 = vpop.f32.mrf.mxu0
  %v224 = vadd.f32 %v97, %v223
  %v225 = vpop.f32.mrf.mxu0
  %226 = vmatprep.mubr.bf16.mxu0 0
  %227 = vmatmul.mubr.bf16.gmra.mxu0 %v132
  %v228 = vpop.f32.mrf.mxu0
  %v229 = vadd.f32 %v97, %v228
  %v230 = vpop.f32.mrf.mxu0
  %v231 = vpop.f32.mrf.mxu0
  %v232 = vadd.f32 %v97, %v231
  %v233 = vpop.f32.mrf.mxu0
  %234 = vdwg.mxu0
  %vm235 = vcmask 523264
  %v236 = vsel %vm235, %v173, 0.0
  %237 = vadd.xlane.f32.xlu0 %v236
  %v238 = vpop.xlane.xlu0 %237
  %v239 = vsel %vm235, %v176, 0.0
  %240 = vadd.xlane.f32.xlu0 %v239
  %v241 = vpop.xlane.xlu0 %240
  %v242 = vsel %vm235, %v181, 0.0
  %243 = vadd.xlane.f32.xlu0 %v242
  %v244 = vpop.xlane.xlu0 %243
  %v245 = vsel %vm235, %v184, 0.0
  %246 = vadd.xlane.f32.xlu0 %v245
  %v247 = vpop.xlane.xlu0 %246
  %v248 = vsel %vm235, %v189, 0.0
  %249 = vadd.xlane.f32.xlu0 %v248
  %v250 = vpop.xlane.xlu0 %249
  %v251 = vsel %vm235, %v192, 0.0
  %252 = vadd.xlane.f32.xlu0 %v251
  %v253 = vpop.xlane.xlu0 %252
  %v254 = vsel %vm235, %v197, 0.0
  %255 = vadd.xlane.f32.xlu0 %v254
  %v256 = vpop.xlane.xlu0 %255
  %v257 = vsel %vm235, %v200, 0.0
  %258 = vadd.xlane.f32.xlu0 %v257
  %v259 = vpop.xlane.xlu0 %258
  %v260 = vsel %vm235, %v205, 0.0
  %261 = vadd.xlane.f32.xlu0 %v260
  %v262 = vpop.xlane.xlu0 %261
  %v263 = vsel %vm235, %v208, 0.0
  %264 = vadd.xlane.f32.xlu0 %v263
  %v265 = vpop.xlane.xlu0 %264
  %v266 = vsel %vm235, %v213, 0.0
  %267 = vadd.xlane.f32.xlu0 %v266
  %v268 = vpop.xlane.xlu0 %267
  %v269 = vsel %vm235, %v216, 0.0
  %270 = vadd.xlane.f32.xlu0 %v269
  %v271 = vpop.xlane.xlu0 %270
  %v272 = vsel %vm235, %v221, 0.0
  %273 = vadd.xlane.f32.xlu0 %v272
  %v274 = vpop.xlane.xlu0 %273
  %v275 = vsel %vm235, %v224, 0.0
  %276 = vadd.xlane.f32.xlu0 %v275
  %v277 = vpop.xlane.xlu0 %276
  %v278 = vsel %vm235, %v229, 0.0
  %279 = vadd.xlane.f32.xlu0 %v278
  %v280 = vpop.xlane.xlu0 %279
  %v281 = vsel %vm235, %v232, 0.0
  %282 = vadd.xlane.f32.xlu0 %v281
  %v283 = vpop.xlane.xlu0 %282
  %v284 = vrcp.pop 64.0
  %v285 = vmul.f32 %v238, %v284
  %v286 = vmul.f32 %v241, %v284
  %v287 = vmul.f32 %v244, %v284
  %v288 = vmul.f32 %v247, %v284
  %v289 = vmul.f32 %v250, %v284
  %v290 = vmul.f32 %v253, %v284
  %v291 = vmul.f32 %v256, %v284
  %v292 = vmul.f32 %v259, %v284
  %v293 = vmul.f32 %v262, %v284
  %v294 = vmul.f32 %v265, %v284
  %v295 = vmul.f32 %v268, %v284
  %v296 = vmul.f32 %v271, %v284
  %v297 = vmul.f32 %v274, %v284
  %v298 = vmul.f32 %v277, %v284
  %v299 = vmul.f32 %v280, %v284
  %v300 = vmul.f32 %v283, %v284
  %v301 = vsub.f32 %v173, %v285
  %v302 = vsub.f32 %v176, %v286
  %v303 = vsub.f32 %v181, %v287
  %v304 = vsub.f32 %v184, %v288
  %v305 = vsub.f32 %v189, %v289
  %v306 = vsub.f32 %v192, %v290
  %v307 = vsub.f32 %v197, %v291
  %v308 = vsub.f32 %v200, %v292
  %v309 = vsub.f32 %v205, %v293
  %v310 = vsub.f32 %v208, %v294
  %v311 = vsub.f32 %v213, %v295
  %v312 = vsub.f32 %v216, %v296
  %v313 = vsub.f32 %v221, %v297
  %v314 = vsub.f32 %v224, %v298
  %v315 = vsub.f32 %v229, %v299
  %v316 = vsub.f32 %v232, %v300
  %v317 = vmul.f32 %v301, %v301
  %v318 = vmul.f32 %v302, %v302
  %v319 = vmul.f32 %v303, %v303
  %v320 = vmul.f32 %v304, %v304
  %v321 = vmul.f32 %v305, %v305
  %v322 = vmul.f32 %v306, %v306
  %v323 = vmul.f32 %v307, %v307
  %v324 = vmul.f32 %v308, %v308
  %v325 = vmul.f32 %v309, %v309
  %v326 = vmul.f32 %v310, %v310
  %v327 = vmul.f32 %v311, %v311
  %v328 = vmul.f32 %v312, %v312
  %v329 = vmul.f32 %v313, %v313
  %v330 = vmul.f32 %v314, %v314
  %v331 = vmul.f32 %v315, %v315
  %v332 = vmul.f32 %v316, %v316
  %v333 = vsel %vm235, %v317, 0.0
  %334 = vadd.xlane.f32.xlu0 %v333
  %v335 = vpop.xlane.xlu0 %334
  %v336 = vsel %vm235, %v318, 0.0
  %337 = vadd.xlane.f32.xlu0 %v336
  %v338 = vpop.xlane.xlu0 %337
  %v339 = vsel %vm235, %v319, 0.0
  %340 = vadd.xlane.f32.xlu0 %v339
  %v341 = vpop.xlane.xlu0 %340
  %v342 = vsel %vm235, %v320, 0.0
  %343 = vadd.xlane.f32.xlu0 %v342
  %v344 = vpop.xlane.xlu0 %343
  %v345 = vsel %vm235, %v321, 0.0
  %346 = vadd.xlane.f32.xlu0 %v345
  %v347 = vpop.xlane.xlu0 %346
  %v348 = vsel %vm235, %v322, 0.0
  %349 = vadd.xlane.f32.xlu0 %v348
  %v350 = vpop.xlane.xlu0 %349
  %v351 = vsel %vm235, %v323, 0.0
  %352 = vadd.xlane.f32.xlu0 %v351
  %v353 = vpop.xlane.xlu0 %352
  %v354 = vsel %vm235, %v324, 0.0
  %355 = vadd.xlane.f32.xlu0 %v354
  %v356 = vpop.xlane.xlu0 %355
  %v357 = vsel %vm235, %v325, 0.0
  %358 = vadd.xlane.f32.xlu0 %v357
  %v359 = vpop.xlane.xlu0 %358
  %v360 = vsel %vm235, %v326, 0.0
  %361 = vadd.xlane.f32.xlu0 %v360
  %v362 = vpop.xlane.xlu0 %361
  %v363 = vsel %vm235, %v327, 0.0
  %364 = vadd.xlane.f32.xlu0 %v363
  %v365 = vpop.xlane.xlu0 %364
  %v366 = vsel %vm235, %v328, 0.0
  %367 = vadd.xlane.f32.xlu0 %v366
  %v368 = vpop.xlane.xlu0 %367
  %v369 = vsel %vm235, %v329, 0.0
  %370 = vadd.xlane.f32.xlu0 %v369
  %v371 = vpop.xlane.xlu0 %370
  %v372 = vsel %vm235, %v330, 0.0
  %373 = vadd.xlane.f32.xlu0 %v372
  %v374 = vpop.xlane.xlu0 %373
  %v375 = vsel %vm235, %v331, 0.0
  %376 = vadd.xlane.f32.xlu0 %v375
  %v377 = vpop.xlane.xlu0 %376
  %v378 = vsel %vm235, %v332, 0.0
  %379 = vadd.xlane.f32.xlu0 %v378
  %v380 = vpop.xlane.xlu0 %379
  %v381 = vmul.f32 %v335, %v284
  %v382 = vmul.f32 %v338, %v284
  %v383 = vmul.f32 %v341, %v284
  %v384 = vmul.f32 %v344, %v284
  %v385 = vmul.f32 %v347, %v284
  %v386 = vmul.f32 %v350, %v284
  %v387 = vmul.f32 %v353, %v284
  %v388 = vmul.f32 %v356, %v284
  %v389 = vmul.f32 %v359, %v284
  %v390 = vmul.f32 %v362, %v284
  %v391 = vmul.f32 %v365, %v284
  %v392 = vmul.f32 %v368, %v284
  %v393 = vmul.f32 %v371, %v284
  %v394 = vmul.f32 %v374, %v284
  %v395 = vmul.f32 %v377, %v284
  %v396 = vmul.f32 %v380, %v284
  %v397 = vadd.f32 %v381, 1e-05
  %v398 = vadd.f32 %v382, 1e-05
  %v399 = vadd.f32 %v383, 1e-05
  %v400 = vadd.f32 %v384, 1e-05
  %v401 = vadd.f32 %v385, 1e-05
  %v402 = vadd.f32 %v386, 1e-05
  %v403 = vadd.f32 %v387, 1e-05
  %v404 = vadd.f32 %v388, 1e-05
  %v405 = vadd.f32 %v389, 1e-05
  %v406 = vadd.f32 %v390, 1e-05
  %v407 = vadd.f32 %v391, 1e-05
  %v408 = vadd.f32 %v392, 1e-05
  %v409 = vadd.f32 %v393, 1e-05
  %v410 = vadd.f32 %v394, 1e-05
  %v411 = vadd.f32 %v395, 1e-05
  %v412 = vadd.f32 %v396, 1e-05
  %v413 = vrsqrt.pop %v397
  %v414 = vrsqrt.pop %v398
  %v415 = vrsqrt.pop %v399
  %v416 = vrsqrt.pop %v400
  %v417 = vrsqrt.pop %v401
  %v418 = vrsqrt.pop %v402
  %v419 = vrsqrt.pop %v403
  %v420 = vrsqrt.pop %v404
  %v421 = vrsqrt.pop %v405
  %v422 = vrsqrt.pop %v406
  %v423 = vrsqrt.pop %v407
  %v424 = vrsqrt.pop %v408
  %v425 = vrsqrt.pop %v409
  %v426 = vrsqrt.pop %v410
  %v427 = vrsqrt.pop %v411
  %v428 = vrsqrt.pop %v412
  %v429 = vmul.f32 %v301, %v413
  %v430 = vmul.f32 %v302, %v414
  %v431 = vmul.f32 %v303, %v415
  %v432 = vmul.f32 %v304, %v416
  %v433 = vmul.f32 %v305, %v417
  %v434 = vmul.f32 %v306, %v418
  %v435 = vmul.f32 %v307, %v419
  %v436 = vmul.f32 %v308, %v420
  %v437 = vmul.f32 %v309, %v421
  %v438 = vmul.f32 %v310, %v422
  %v439 = vmul.f32 %v311, %v423
  %v440 = vmul.f32 %v312, %v424
  %v441 = vmul.f32 %v313, %v425
  %v442 = vmul.f32 %v314, %v426
  %v443 = vmul.f32 %v315, %v427
  %v444 = vmul.f32 %v316, %v428
  %v445 = vlaneseq
  %v446 = vshrl.u32 %v445, 7
  %v447 = vsub.s32 0, %v446
  %v448 = vrot.slane %v49, %v447
  %v449 = vmul.f32 %v429, %v448
  %v450 = vmul.f32 %v430, %v448
  %v451 = vmul.f32 %v431, %v448
  %v452 = vmul.f32 %v432, %v448
  %v453 = vmul.f32 %v433, %v448
  %v454 = vmul.f32 %v434, %v448
  %v455 = vmul.f32 %v435, %v448
  %v456 = vmul.f32 %v436, %v448
  %v457 = vmul.f32 %v437, %v448
  %v458 = vmul.f32 %v438, %v448
  %v459 = vmul.f32 %v439, %v448
  %v460 = vmul.f32 %v440, %v448
  %v461 = vmul.f32 %v441, %v448
  %v462 = vmul.f32 %v442, %v448
  %v463 = vmul.f32 %v443, %v448
  %v464 = vmul.f32 %v444, %v448
  %v465 = vlaneseq
  %v466 = vshrl.u32 %v465, 7
  %v467 = vsub.s32 0, %v466
  %v468 = vrot.slane %v50, %v467
  %v469 = vadd.f32 %v449, %v468
  %v470 = vadd.f32 %v450, %v468
  %v471 = vadd.f32 %v451, %v468
  %v472 = vadd.f32 %v452, %v468
  %v473 = vadd.f32 %v453, %v468
  %v474 = vadd.f32 %v454, %v468
  %v475 = vadd.f32 %v455, %v468
  %v476 = vadd.f32 %v456, %v468
  %v477 = vadd.f32 %v457, %v468
  %v478 = vadd.f32 %v458, %v468
  %v479 = vadd.f32 %v459, %v468
  %v480 = vadd.f32 %v460, %v468
  %v481 = vadd.f32 %v461, %v468
  %v482 = vadd.f32 %v462, %v468
  %v483 = vadd.f32 %v463, %v468
  %v484 = vadd.f32 %v464, %v468
  %v485 = vpack.c.bf16 %v470, %v469
  %v486 = vpack.c.bf16 %v472, %v471
  %v487 = vpack.c.bf16 %v474, %v473
  %v488 = vpack.c.bf16 %v476, %v475
  %v489 = vpack.c.bf16 %v478, %v477
  %v490 = vpack.c.bf16 %v480, %v479
  %v491 = vpack.c.bf16 %v482, %v481
  %v492 = vpack.c.bf16 %v484, %v483
  %v493 = vld [vmem:[%s3] sm:$0xf]
  %v494 = vld [vmem:[%s3 + $0x4] sm:$0xf]
  %v495 = vld [vmem:[%s3 + $0x8] sm:$0xf]
  %v496 = vld [vmem:[%s3 + $0xc] sm:$0xf]
  %v497 = vld [vmem:[%s3 + $0x10] sm:$0xf]
  %v498 = vld [vmem:[%s3 + $0x14] sm:$0xf]
  %v499 = vld [vmem:[%s3 + $0x18] sm:$0xf]
  %v500 = vld [vmem:[%s3 + $0x1c] sm:$0xf]
  %v501 = vlaneseq
  %v502 = vshrl.u32 %v501, 7
  %v503 = vsub.s32 0, %v502
  %v504 = vrot.slane %v52, %v503
  %v513 = vunpack.c.l.b16 %v493
  %v514 = vunpack.c.l.b16 %v494
  %v515 = vunpack.c.l.b16 %v495
  %v516 = vunpack.c.l.b16 %v496
  %v517 = vunpack.c.l.b16 %v497
  %v518 = vunpack.c.l.b16 %v498
  %v519 = vunpack.c.l.b16 %v499
  %v520 = vunpack.c.l.b16 %v500
  %v521 = vpack.c.b16 %v514, %v513
  %v522 = vpack.c.b16 %v516, %v515
  %v523 = vpack.c.b16 %v518, %v517
  %v524 = vpack.c.b16 %v520, %v519
  %v530 = vsel %vm235, %v485, 0
  %v533 = vsel %vm235, %v486, 0
  %v536 = vsel %vm235, %v487, 0
  %v539 = vsel %vm235, %v488, 0
  %v542 = vsel %vm235, %v489, 0
  %v545 = vsel %vm235, %v490, 0
  %v548 = vsel %vm235, %v491, 0
  %v551 = vsel %vm235, %v492, 0
  %553 = vmatprep.subr.bf16.mxu0 0
  %554 = vmatpush1.bf16.msra.mxu0 0
  %555 = vmatprep.subr.bf16.mxu0 0
  %556 = vmatpush1.bf16.msra.mxu0 0
  %557 = vmatprep.subr.bf16.mxu0 0
  %558 = vmatpush1.bf16.msra.mxu0 0
  %559 = vmatprep.subr.bf16.mxu0 0
  %560 = vmatpush1.bf16.msra.mxu0 0
  %561 = vmatprep.subr.bf16.mxu0 0
  %562 = vmatpush1.bf16.msra.mxu0 %v524
  %563 = vmatprep.subr.bf16.mxu0 0
  %564 = vmatpush1.bf16.msra.mxu0 %v523
  %565 = vmatprep.subr.bf16.mxu0 0
  %566 = vmatpush1.bf16.msra.mxu0 %v522
  %567 = vmatprep.subr.bf16.mxu0 0
  %568 = vmatpush1.bf16.msra.mxu0 %v521
  %569 = vmatprep.subr.bf16.mxu0 0
  %570 = vmatpush2.bf16.msra.mxu0 0
  %571 = vmatprep.subr.bf16.mxu0 0
  %572 = vmatpush2.bf16.msra.mxu0 0
  %573 = vmatprep.subr.bf16.mxu0 0
  %574 = vmatpush2.bf16.msra.mxu0 0
  %575 = vmatprep.subr.bf16.mxu0 0
  %576 = vmatpush2.bf16.msra.mxu0 0
  %577 = vmatprep.subr.bf16.mxu0 0
  %578 = vmatpush2.bf16.msra.mxu0 0
  %579 = vmatprep.subr.bf16.mxu0 0
  %580 = vmatpush2.bf16.msra.mxu0 0
  %581 = vmatprep.subr.bf16.mxu0 0
  %582 = vmatpush2.bf16.msra.mxu0 0
  %583 = vmatprep.subr.bf16.mxu0 0
  %584 = vmatpush2.bf16.msra.mxu0 0
  %585 = vmatprep.mubr.bf16.mxu0 0
  %586 = vmatmul.mubr.bf16.gmra.mxu0 %v530
  %v587 = vpop.f32.mrf.mxu0
  %v588 = vadd.f32 %v504, %v587
  %v589 = vpop.f32.mrf.mxu0
  %v590 = vpop.f32.mrf.mxu0
  %v591 = vadd.f32 %v504, %v590
  %v592 = vpop.f32.mrf.mxu0
  %593 = vmatprep.mubr.bf16.mxu0 0
  %594 = vmatmul.mubr.bf16.gmra.mxu0 %v533
  %v595 = vpop.f32.mrf.mxu0
  %v596 = vadd.f32 %v504, %v595
  %v597 = vpop.f32.mrf.mxu0
  %v598 = vpop.f32.mrf.mxu0
  %v599 = vadd.f32 %v504, %v598
  %v600 = vpop.f32.mrf.mxu0
  %601 = vmatprep.mubr.bf16.mxu0 0
  %602 = vmatmul.mubr.bf16.gmra.mxu0 %v536
  %v603 = vpop.f32.mrf.mxu0
  %v604 = vadd.f32 %v504, %v603
  %v605 = vpop.f32.mrf.mxu0
  %v606 = vpop.f32.mrf.mxu0
  %v607 = vadd.f32 %v504, %v606
  %v608 = vpop.f32.mrf.mxu0
  %609 = vmatprep.mubr.bf16.mxu0 0
  %610 = vmatmul.mubr.bf16.gmra.mxu0 %v539
  %v611 = vpop.f32.mrf.mxu0
  %v612 = vadd.f32 %v504, %v611
  %v613 = vpop.f32.mrf.mxu0
  %v614 = vpop.f32.mrf.mxu0
  %v615 = vadd.f32 %v504, %v614
  %v616 = vpop.f32.mrf.mxu0
  %617 = vmatprep.mubr.bf16.mxu0 0
  %618 = vmatmul.mubr.bf16.gmra.mxu0 %v542
  %v619 = vpop.f32.mrf.mxu0
  %v620 = vadd.f32 %v504, %v619
  %v621 = vpop.f32.mrf.mxu0
  %v622 = vpop.f32.mrf.mxu0
  %v623 = vadd.f32 %v504, %v622
  %v624 = vpop.f32.mrf.mxu0
  %625 = vmatprep.mubr.bf16.mxu0 0
  %626 = vmatmul.mubr.bf16.gmra.mxu0 %v545
  %v627 = vpop.f32.mrf.mxu0
  %v628 = vadd.f32 %v504, %v627
  %v629 = vpop.f32.mrf.mxu0
  %v630 = vpop.f32.mrf.mxu0
  %v631 = vadd.f32 %v504, %v630
  %v632 = vpop.f32.mrf.mxu0
  %633 = vmatprep.mubr.bf16.mxu0 0
  %634 = vmatmul.mubr.bf16.gmra.mxu0 %v548
  %v635 = vpop.f32.mrf.mxu0
  %v636 = vadd.f32 %v504, %v635
  %v637 = vpop.f32.mrf.mxu0
  %v638 = vpop.f32.mrf.mxu0
  %v639 = vadd.f32 %v504, %v638
  %v640 = vpop.f32.mrf.mxu0
  %641 = vmatprep.mubr.bf16.mxu0 0
  %642 = vmatmul.mubr.bf16.gmra.mxu0 %v551
  %v643 = vpop.f32.mrf.mxu0
  %v644 = vadd.f32 %v504, %v643
  %v645 = vpop.f32.mrf.mxu0
  %v646 = vpop.f32.mrf.mxu0
  %v647 = vadd.f32 %v504, %v646
  %v648 = vpop.f32.mrf.mxu0
  %649 = vdwg.mxu0
  %v650 = vld [vmem:[%s4] sm:$0xf]
  %v651 = vld [vmem:[%s4 + $0x4] sm:$0xf]
  %v652 = vld [vmem:[%s4 + $0x8] sm:$0xf]
  %v653 = vld [vmem:[%s4 + $0xc] sm:$0xf]
  %v654 = vld [vmem:[%s4 + $0x10] sm:$0xf]
  %v655 = vld [vmem:[%s4 + $0x14] sm:$0xf]
  %v656 = vld [vmem:[%s4 + $0x18] sm:$0xf]
  %v657 = vld [vmem:[%s4 + $0x1c] sm:$0xf]
  %v658 = vlaneseq
  %v659 = vshrl.u32 %v658, 7
  %v660 = vsub.s32 0, %v659
  %v661 = vrot.slane %v53, %v660
  %v670 = vunpack.c.l.b16 %v650
  %v671 = vunpack.c.l.b16 %v651
  %v672 = vunpack.c.l.b16 %v652
  %v673 = vunpack.c.l.b16 %v653
  %v674 = vunpack.c.l.b16 %v654
  %v675 = vunpack.c.l.b16 %v655
  %v676 = vunpack.c.l.b16 %v656
  %v677 = vunpack.c.l.b16 %v657
  %v678 = vpack.c.b16 %v671, %v670
  %v679 = vpack.c.b16 %v673, %v672
  %v680 = vpack.c.b16 %v675, %v674
  %v681 = vpack.c.b16 %v677, %v676
  %686 = vmatprep.subr.bf16.mxu0 0
  %687 = vmatpush1.bf16.msra.mxu0 0
  %688 = vmatprep.subr.bf16.mxu0 0
  %689 = vmatpush1.bf16.msra.mxu0 0
  %690 = vmatprep.subr.bf16.mxu0 0
  %691 = vmatpush1.bf16.msra.mxu0 0
  %692 = vmatprep.subr.bf16.mxu0 0
  %693 = vmatpush1.bf16.msra.mxu0 0
  %694 = vmatprep.subr.bf16.mxu0 0
  %695 = vmatpush1.bf16.msra.mxu0 %v681
  %696 = vmatprep.subr.bf16.mxu0 0
  %697 = vmatpush1.bf16.msra.mxu0 %v680
  %698 = vmatprep.subr.bf16.mxu0 0
  %699 = vmatpush1.bf16.msra.mxu0 %v679
  %700 = vmatprep.subr.bf16.mxu0 0
  %701 = vmatpush1.bf16.msra.mxu0 %v678
  %702 = vmatprep.subr.bf16.mxu0 0
  %703 = vmatpush2.bf16.msra.mxu0 0
  %704 = vmatprep.subr.bf16.mxu0 0
  %705 = vmatpush2.bf16.msra.mxu0 0
  %706 = vmatprep.subr.bf16.mxu0 0
  %707 = vmatpush2.bf16.msra.mxu0 0
  %708 = vmatprep.subr.bf16.mxu0 0
  %709 = vmatpush2.bf16.msra.mxu0 0
  %710 = vmatprep.subr.bf16.mxu0 0
  %711 = vmatpush2.bf16.msra.mxu0 0
  %712 = vmatprep.subr.bf16.mxu0 0
  %713 = vmatpush2.bf16.msra.mxu0 0
  %714 = vmatprep.subr.bf16.mxu0 0
  %715 = vmatpush2.bf16.msra.mxu0 0
  %716 = vmatprep.subr.bf16.mxu0 0
  %717 = vmatpush2.bf16.msra.mxu0 0
  %718 = vmatprep.mubr.bf16.mxu0 0
  %719 = vmatmul.mubr.bf16.gmra.mxu0 %v530
  %v720 = vpop.f32.mrf.mxu0
  %v721 = vadd.f32 %v661, %v720
  %v722 = vpop.f32.mrf.mxu0
  %v723 = vpop.f32.mrf.mxu0
  %v724 = vadd.f32 %v661, %v723
  %v725 = vpop.f32.mrf.mxu0
  %726 = vmatprep.mubr.bf16.mxu0 0
  %727 = vmatmul.mubr.bf16.gmra.mxu0 %v533
  %v728 = vpop.f32.mrf.mxu0
  %v729 = vadd.f32 %v661, %v728
  %v730 = vpop.f32.mrf.mxu0
  %v731 = vpop.f32.mrf.mxu0
  %v732 = vadd.f32 %v661, %v731
  %v733 = vpop.f32.mrf.mxu0
  %734 = vmatprep.mubr.bf16.mxu0 0
  %735 = vmatmul.mubr.bf16.gmra.mxu0 %v536
  %v736 = vpop.f32.mrf.mxu0
  %v737 = vadd.f32 %v661, %v736
  %v738 = vpop.f32.mrf.mxu0
  %v739 = vpop.f32.mrf.mxu0
  %v740 = vadd.f32 %v661, %v739
  %v741 = vpop.f32.mrf.mxu0
  %742 = vmatprep.mubr.bf16.mxu0 0
  %743 = vmatmul.mubr.bf16.gmra.mxu0 %v539
  %v744 = vpop.f32.mrf.mxu0
  %v745 = vadd.f32 %v661, %v744
  %v746 = vpop.f32.mrf.mxu0
  %v747 = vpop.f32.mrf.mxu0
  %v748 = vadd.f32 %v661, %v747
  %v749 = vpop.f32.mrf.mxu0
  %750 = vmatprep.mubr.bf16.mxu0 0
  %751 = vmatmul.mubr.bf16.gmra.mxu0 %v542
  %v752 = vpop.f32.mrf.mxu0
  %v753 = vadd.f32 %v661, %v752
  %v754 = vpop.f32.mrf.mxu0
  %v755 = vpop.f32.mrf.mxu0
  %v756 = vadd.f32 %v661, %v755
  %v757 = vpop.f32.mrf.mxu0
  %758 = vmatprep.mubr.bf16.mxu0 0
  %759 = vmatmul.mubr.bf16.gmra.mxu0 %v545
  %v760 = vpop.f32.mrf.mxu0
  %v761 = vadd.f32 %v661, %v760
  %v762 = vpop.f32.mrf.mxu0
  %v763 = vpop.f32.mrf.mxu0
  %v764 = vadd.f32 %v661, %v763
  %v765 = vpop.f32.mrf.mxu0
  %766 = vmatprep.mubr.bf16.mxu0 0
  %767 = vmatmul.mubr.bf16.gmra.mxu0 %v548
  %v768 = vpop.f32.mrf.mxu0
  %v769 = vadd.f32 %v661, %v768
  %v770 = vpop.f32.mrf.mxu0
  %v771 = vpop.f32.mrf.mxu0
  %v772 = vadd.f32 %v661, %v771
  %v773 = vpop.f32.mrf.mxu0
  %774 = vmatprep.mubr.bf16.mxu0 0
  %775 = vmatmul.mubr.bf16.gmra.mxu0 %v551
  %v776 = vpop.f32.mrf.mxu0
  %v777 = vadd.f32 %v661, %v776
  %v778 = vpop.f32.mrf.mxu0
  %v779 = vpop.f32.mrf.mxu0
  %v780 = vadd.f32 %v661, %v779
  %v781 = vpop.f32.mrf.mxu0
  %782 = vdwg.mxu0
  %v799 = vrot.slane %v176, 7
  %v800 = vrot.slane %v181, 6
  %vm801 = vcmask 1041409
  %v802 = vsel %vm801, %v800, %v799
  %v803 = vrot.slane %v184, 5
  %vm804 = vcmask 1042434
  %v805 = vsel %vm804, %v803, %v802
  %v806 = vrot.slane %v189, 4
  %vm807 = vcmask 1043459
  %v808 = vsel %vm807, %v806, %v805
  %v809 = vrot.slane %v192, 3
  %vm810 = vcmask 1044484
  %v811 = vsel %vm810, %v809, %v808
  %v812 = vrot.slane %v197, 2
  %vm813 = vcmask 1045509
  %v814 = vsel %vm813, %v812, %v811
  %v815 = vrot.slane %v200, 1
  %vm816 = vcmask 1046534
  %v817 = vsel %vm816, %v815, %v814
  %vm818 = vcmask 1047559
  %v819 = vsel %vm818, %v205, %v817
  %v820 = vrot.slane %v208, 7
  %v821 = vrot.slane %v213, 6
  %v822 = vsel %vm801, %v821, %v820
  %v823 = vrot.slane %v216, 5
  %v824 = vsel %vm804, %v823, %v822
  %v825 = vrot.slane %v221, 4
  %v826 = vsel %vm807, %v825, %v824
  %v827 = vrot.slane %v224, 3
  %v828 = vsel %vm810, %v827, %v826
  %v829 = vrot.slane %v229, 2
  %v830 = vsel %vm813, %v829, %v828
  %v831 = vrot.slane %v232, 1
  %v832 = vsel %vm816, %v831, %v830
  %vm836 = vcmask 523271
  %v837 = vsel %vm836, %v173, 0.0
  %838 = vadd.xlane.f32.xlu0 %v837
  %v839 = vpop.xlane.xlu0 %838
  %v840 = vsel %vm235, %v819, 0.0
  %841 = vadd.xlane.f32.xlu0 %v840
  %v842 = vpop.xlane.xlu0 %841
  %vm843 = vcmask 522240
  %v844 = vsel %vm843, %v832, 0.0
  %845 = vadd.xlane.f32.xlu0 %v844
  %v846 = vpop.xlane.xlu0 %845
  %v847 = vmul.f32 %v839, %v284
  %v848 = vmul.f32 %v842, %v284
  %v849 = vmul.f32 %v846, %v284
  %v853 = vrot.slane %v848, 1
  %v854 = vrot.slane %v848, 2
  %v855 = vrot.slane %v848, 3
  %v856 = vrot.slane %v848, 4
  %v857 = vrot.slane %v848, 5
  %v858 = vrot.slane %v848, 6
  %v859 = vrot.slane %v848, 7
  %v860 = vrot.slane %v849, 1
  %v861 = vrot.slane %v849, 2
  %v862 = vrot.slane %v849, 3
  %v863 = vrot.slane %v849, 4
  %v864 = vrot.slane %v849, 5
  %v865 = vrot.slane %v849, 6
  %v866 = vrot.slane %v849, 7
  %v883 = vsub.f32 %v173, %v847
  %v884 = vsub.f32 %v176, %v853
  %v885 = vsub.f32 %v181, %v854
  %v886 = vsub.f32 %v184, %v855
  %v887 = vsub.f32 %v189, %v856
  %v888 = vsub.f32 %v192, %v857
  %v889 = vsub.f32 %v197, %v858
  %v890 = vsub.f32 %v200, %v859
  %v891 = vsub.f32 %v205, %v848
  %v892 = vsub.f32 %v208, %v860
  %v893 = vsub.f32 %v213, %v861
  %v894 = vsub.f32 %v216, %v862
  %v895 = vsub.f32 %v221, %v863
  %v896 = vsub.f32 %v224, %v864
  %v897 = vsub.f32 %v229, %v865
  %v898 = vsub.f32 %v232, %v866
  %v899 = vmul.f32 %v883, %v883
  %v900 = vmul.f32 %v884, %v884
  %v901 = vmul.f32 %v885, %v885
  %v902 = vmul.f32 %v886, %v886
  %v903 = vmul.f32 %v887, %v887
  %v904 = vmul.f32 %v888, %v888
  %v905 = vmul.f32 %v889, %v889
  %v906 = vmul.f32 %v890, %v890
  %v907 = vmul.f32 %v891, %v891
  %v908 = vmul.f32 %v892, %v892
  %v909 = vmul.f32 %v893, %v893
  %v910 = vmul.f32 %v894, %v894
  %v911 = vmul.f32 %v895, %v895
  %v912 = vmul.f32 %v896, %v896
  %v913 = vmul.f32 %v897, %v897
  %v914 = vmul.f32 %v898, %v898
  %v931 = vrot.slane %v900, 7
  %v932 = vrot.slane %v901, 6
  %v933 = vsel %vm801, %v932, %v931
  %v934 = vrot.slane %v902, 5
  %v935 = vsel %vm804, %v934, %v933
  %v936 = vrot.slane %v903, 4
  %v937 = vsel %vm807, %v936, %v935
  %v938 = vrot.slane %v904, 3
  %v939 = vsel %vm810, %v938, %v937
  %v940 = vrot.slane %v905, 2
  %v941 = vsel %vm813, %v940, %v939
  %v942 = vrot.slane %v906, 1
  %v943 = vsel %vm816, %v942, %v941
  %v944 = vsel %vm818, %v907, %v943
  %v945 = vrot.slane %v908, 7
  %v946 = vrot.slane %v909, 6
  %v947 = vsel %vm801, %v946, %v945
  %v948 = vrot.slane %v910, 5
  %v949 = vsel %vm804, %v948, %v947
  %v950 = vrot.slane %v911, 4
  %v951 = vsel %vm807, %v950, %v949
  %v952 = vrot.slane %v912, 3
  %v953 = vsel %vm810, %v952, %v951
  %v954 = vrot.slane %v913, 2
  %v955 = vsel %vm813, %v954, %v953
  %v956 = vrot.slane %v914, 1
  %v957 = vsel %vm816, %v956, %v955
  %v961 = vsel %vm836, %v899, 0.0
  %962 = vadd.xlane.f32.xlu0 %v961
  %v963 = vpop.xlane.xlu0 %962
  %v964 = vsel %vm235, %v944, 0.0
  %965 = vadd.xlane.f32.xlu0 %v964
  %v966 = vpop.xlane.xlu0 %965
  %v967 = vsel %vm843, %v957, 0.0
  %968 = vadd.xlane.f32.xlu0 %v967
  %v969 = vpop.xlane.xlu0 %968
  %v970 = vmul.f32 %v963, %v284
  %v971 = vmul.f32 %v966, %v284
  %v972 = vmul.f32 %v969, %v284
  %v973 = vadd.f32 %v970, 1e-05
  %v974 = vadd.f32 %v971, 1e-05
  %v975 = vadd.f32 %v972, 1e-05
  %v976 = vrsqrt.pop %v973
  %v977 = vrsqrt.pop %v974
  %v978 = vrsqrt.pop %v975
  %v982 = vrot.slane %v977, 1
  %v983 = vrot.slane %v977, 2
  %v984 = vrot.slane %v977, 3
  %v985 = vrot.slane %v977, 4
  %v986 = vrot.slane %v977, 5
  %v987 = vrot.slane %v977, 6
  %v988 = vrot.slane %v977, 7
  %v989 = vrot.slane %v978, 1
  %v990 = vrot.slane %v978, 2
  %v991 = vrot.slane %v978, 3
  %v992 = vrot.slane %v978, 4
  %v993 = vrot.slane %v978, 5
  %v994 = vrot.slane %v978, 6
  %v995 = vrot.slane %v978, 7
  %v1012 = vmul.f32 %v883, %v976
  %v1013 = vmul.f32 %v884, %v982
  %v1014 = vmul.f32 %v885, %v983
  %v1015 = vmul.f32 %v886, %v984
  %v1016 = vmul.f32 %v887, %v985
  %v1017 = vmul.f32 %v888, %v986
  %v1018 = vmul.f32 %v889, %v987
  %v1019 = vmul.f32 %v890, %v988
  %v1020 = vmul.f32 %v891, %v977
  %v1021 = vmul.f32 %v892, %v989
  %v1022 = vmul.f32 %v893, %v990
  %v1023 = vmul.f32 %v894, %v991
  %v1024 = vmul.f32 %v895, %v992
  %v1025 = vmul.f32 %v896, %v993
  %v1026 = vmul.f32 %v897, %v994
  %v1027 = vmul.f32 %v898, %v995
  %v1028 = vmul.f32 %v1012, %v448
  %v1029 = vmul.f32 %v1013, %v448
  %v1030 = vmul.f32 %v1014, %v448
  %v1031 = vmul.f32 %v1015, %v448
  %v1032 = vmul.f32 %v1016, %v448
  %v1033 = vmul.f32 %v1017, %v448
  %v1034 = vmul.f32 %v1018, %v448
  %v1035 = vmul.f32 %v1019, %v448
  %v1036 = vmul.f32 %v1020, %v448
  %v1037 = vmul.f32 %v1021, %v448
  %v1038 = vmul.f32 %v1022, %v448
  %v1039 = vmul.f32 %v1023, %v448
  %v1040 = vmul.f32 %v1024, %v448
  %v1041 = vmul.f32 %v1025, %v448
  %v1042 = vmul.f32 %v1026, %v448
  %v1043 = vmul.f32 %v1027, %v448
  %v1044 = vadd.f32 %v1028, %v468
  %v1045 = vadd.f32 %v1029, %v468
  %v1046 = vadd.f32 %v1030, %v468
  %v1047 = vadd.f32 %v1031, %v468
  %v1048 = vadd.f32 %v1032, %v468
  %v1049 = vadd.f32 %v1033, %v468
  %v1050 = vadd.f32 %v1034, %v468
  %v1051 = vadd.f32 %v1035, %v468
  %v1052 = vadd.f32 %v1036, %v468
  %v1053 = vadd.f32 %v1037, %v468
  %v1054 = vadd.f32 %v1038, %v468
  %v1055 = vadd.f32 %v1039, %v468
  %v1056 = vadd.f32 %v1040, %v468
  %v1057 = vadd.f32 %v1041, %v468
  %v1058 = vadd.f32 %v1042, %v468
  %v1059 = vadd.f32 %v1043, %v468
  %v1060 = vpack.c.bf16 %v1044, %v1044
  %v1061 = vpack.c.bf16 %v1045, %v1045
  %v1062 = vpack.c.bf16 %v1046, %v1046
  %v1063 = vpack.c.bf16 %v1047, %v1047
  %v1064 = vpack.c.bf16 %v1048, %v1048
  %v1065 = vpack.c.bf16 %v1049, %v1049
  %v1066 = vpack.c.bf16 %v1050, %v1050
  %v1067 = vpack.c.bf16 %v1051, %v1051
  %v1068 = vpack.c.bf16 %v1052, %v1052
  %v1069 = vpack.c.bf16 %v1053, %v1053
  %v1070 = vpack.c.bf16 %v1054, %v1054
  %v1071 = vpack.c.bf16 %v1055, %v1055
  %v1072 = vpack.c.bf16 %v1056, %v1056
  %v1073 = vpack.c.bf16 %v1057, %v1057
  %v1074 = vpack.c.bf16 %v1058, %v1058
  %v1075 = vpack.c.bf16 %v1059, %v1059
  %v1076 = vld [vmem:[%s2] sm:$0xf]
  %v1077 = vld [vmem:[%s2 + $0x4] sm:$0xf]
  %v1078 = vld [vmem:[%s2 + $0x8] sm:$0xf]
  %v1079 = vld [vmem:[%s2 + $0xc] sm:$0xf]
  %v1080 = vld [vmem:[%s2 + $0x10] sm:$0xf]
  %v1081 = vld [vmem:[%s2 + $0x14] sm:$0xf]
  %v1082 = vld [vmem:[%s2 + $0x18] sm:$0xf]
  %v1083 = vld [vmem:[%s2 + $0x1c] sm:$0xf]
  %v1084 = vlaneseq
  %v1085 = vshrl.u32 %v1084, 7
  %v1086 = vsub.s32 0, %v1085
  %v1087 = vrot.slane %v51, %v1086
  %v1104 = vunpack.c.l.b16 %v1060
  %v1105 = vunpack.c.l.b16 %v1061
  %v1106 = vunpack.c.l.b16 %v1062
  %v1107 = vunpack.c.l.b16 %v1063
  %v1108 = vunpack.c.l.b16 %v1064
  %v1109 = vunpack.c.l.b16 %v1065
  %v1110 = vunpack.c.l.b16 %v1066
  %v1111 = vunpack.c.l.b16 %v1067
  %v1112 = vunpack.c.l.b16 %v1068
  %v1113 = vunpack.c.l.b16 %v1069
  %v1114 = vunpack.c.l.b16 %v1070
  %v1115 = vunpack.c.l.b16 %v1071
  %v1116 = vunpack.c.l.b16 %v1072
  %v1117 = vunpack.c.l.b16 %v1073
  %v1118 = vunpack.c.l.b16 %v1074
  %v1119 = vunpack.c.l.b16 %v1075
  %v1120 = vrot.slane %v1104, 7
  %v1121 = vrot.slane %v1105, 6
  %v1122 = vsel %vm801, %v1121, %v1120
  %v1123 = vrot.slane %v1106, 5
  %v1124 = vsel %vm804, %v1123, %v1122
  %v1125 = vrot.slane %v1107, 4
  %v1126 = vsel %vm807, %v1125, %v1124
  %v1127 = vrot.slane %v1108, 3
  %v1128 = vsel %vm810, %v1127, %v1126
  %v1129 = vrot.slane %v1109, 2
  %v1130 = vsel %vm813, %v1129, %v1128
  %v1131 = vrot.slane %v1110, 1
  %v1132 = vsel %vm816, %v1131, %v1130
  %v1133 = vsel %vm818, %v1111, %v1132
  %v1134 = vrot.slane %v1112, 7
  %v1135 = vrot.slane %v1113, 6
  %v1136 = vsel %vm801, %v1135, %v1134
  %v1137 = vrot.slane %v1114, 5
  %v1138 = vsel %vm804, %v1137, %v1136
  %v1139 = vrot.slane %v1115, 4
  %v1140 = vsel %vm807, %v1139, %v1138
  %v1141 = vrot.slane %v1116, 3
  %v1142 = vsel %vm810, %v1141, %v1140
  %v1143 = vrot.slane %v1117, 2
  %v1144 = vsel %vm813, %v1143, %v1142
  %v1145 = vrot.slane %v1118, 1
  %v1146 = vsel %vm816, %v1145, %v1144
  %v1147 = vsel %vm818, %v1119, %v1146
  %v1148 = vpack.c.b16 %v1147, %v1133
  %v1157 = vunpack.c.l.b16 %v1076
  %v1158 = vunpack.c.l.b16 %v1077
  %v1159 = vunpack.c.l.b16 %v1078
  %v1160 = vunpack.c.l.b16 %v1079
  %v1161 = vunpack.c.l.b16 %v1080
  %v1162 = vunpack.c.l.b16 %v1081
  %v1163 = vunpack.c.l.b16 %v1082
  %v1164 = vunpack.c.l.b16 %v1083
  %v1165 = vpack.c.b16 %v1158, %v1157
  %v1166 = vpack.c.b16 %v1160, %v1159
  %v1167 = vpack.c.b16 %v1162, %v1161
  %v1168 = vpack.c.b16 %v1164, %v1163
  %v1174 = vsel %vm235, %v1148, 0
  %1176 = vmatprep.subr.bf16.mxu0 0
  %1177 = vmatpush1.bf16.msra.mxu0 0
  %1178 = vmatprep.subr.bf16.mxu0 0
  %1179 = vmatpush1.bf16.msra.mxu0 0
  %1180 = vmatprep.subr.bf16.mxu0 0
  %1181 = vmatpush1.bf16.msra.mxu0 0
  %1182 = vmatprep.subr.bf16.mxu0 0
  %1183 = vmatpush1.bf16.msra.mxu0 0
  %1184 = vmatprep.subr.bf16.mxu0 0
  %1185 = vmatpush1.bf16.msra.mxu0 %v1168
  %1186 = vmatprep.subr.bf16.mxu0 0
  %1187 = vmatpush1.bf16.msra.mxu0 %v1167
  %1188 = vmatprep.subr.bf16.mxu0 0
  %1189 = vmatpush1.bf16.msra.mxu0 %v1166
  %1190 = vmatprep.subr.bf16.mxu0 0
  %1191 = vmatpush1.bf16.msra.mxu0 %v1165
  %1192 = vmatprep.subr.bf16.mxu0 0
  %1193 = vmatpush2.bf16.msra.mxu0 0
  %1194 = vmatprep.subr.bf16.mxu0 0
  %1195 = vmatpush2.bf16.msra.mxu0 0
  %1196 = vmatprep.subr.bf16.mxu0 0
  %1197 = vmatpush2.bf16.msra.mxu0 0
  %1198 = vmatprep.subr.bf16.mxu0 0
  %1199 = vmatpush2.bf16.msra.mxu0 0
  %1200 = vmatprep.subr.bf16.mxu0 0
  %1201 = vmatpush2.bf16.msra.mxu0 0
  %1202 = vmatprep.subr.bf16.mxu0 0
  %1203 = vmatpush2.bf16.msra.mxu0 0
  %1204 = vmatprep.subr.bf16.mxu0 0
  %1205 = vmatpush2.bf16.msra.mxu0 0
  %1206 = vmatprep.subr.bf16.mxu0 0
  %1207 = vmatpush2.bf16.msra.mxu0 0
  %1208 = vmatprep.mubr.bf16.mxu0 0
  %1209 = vmatmul.mubr.bf16.gmra.mxu0 %v1174
  %v1210 = vpop.f32.mrf.mxu0
  %v1211 = vadd.f32 %v1087, %v1210
  %v1212 = vpop.f32.mrf.mxu0
  %v1213 = vpop.f32.mrf.mxu0
  %v1214 = vadd.f32 %v1087, %v1213
  %v1215 = vpop.f32.mrf.mxu0
  %1216 = vdwg.mxu0
  %v1217 = vmul.f32 %v1211, %v62
  %v1218 = vmul.f32 %v1214, %v63
  %v1219 = vmul.f32 %v1211, %v64
  %v1220 = vmul.f32 %v1214, %v65
  %v1221 = vpack.c.bf16 %v1218, %v1217
  %v1222 = vpack.c.bf16 %v1220, %v1219
  %v1223 = vpack.c.bf16 %v591, %v588
  %v1224 = vpack.c.bf16 %v599, %v596
  %v1225 = vpack.c.bf16 %v607, %v604
  %v1226 = vpack.c.bf16 %v615, %v612
  %v1227 = vpack.c.bf16 %v623, %v620
  %v1228 = vpack.c.bf16 %v631, %v628
  %v1229 = vpack.c.bf16 %v639, %v636
  %v1230 = vpack.c.bf16 %v647, %v644
  %v1232 = vsel %vm235, %v1221, 0
  %v1235 = vsel %vm235, %v1222, 0
  %v1238 = vsel %vm235, %v1223, 0
  %v1241 = vsel %vm235, %v1224, 0
  %v1244 = vsel %vm235, %v1225, 0
  %v1247 = vsel %vm235, %v1226, 0
  %v1250 = vsel %vm235, %v1227, 0
  %v1253 = vsel %vm235, %v1228, 0
  %v1256 = vsel %vm235, %v1229, 0
  %v1259 = vsel %vm235, %v1230, 0
  %1261 = vmatprep.subr.bf16.mxu0 0
  %1262 = vmatpush1.bf16.xpose.msra.mxu0 %v1259
  %1263 = vmatprep.subr.bf16.mxu0 0
  %1264 = vmatpush1.bf16.xpose.msra.mxu0 %v1256
  %1265 = vmatprep.subr.bf16.mxu0 0
  %1266 = vmatpush1.bf16.xpose.msra.mxu0 %v1253
  %1267 = vmatprep.subr.bf16.mxu0 0
  %1268 = vmatpush1.bf16.xpose.msra.mxu0 %v1250
  %1269 = vmatprep.subr.bf16.mxu0 0
  %1270 = vmatpush1.bf16.xpose.msra.mxu0 %v1247
  %1271 = vmatprep.subr.bf16.mxu0 0
  %1272 = vmatpush1.bf16.xpose.msra.mxu0 %v1244
  %1273 = vmatprep.subr.bf16.mxu0 0
  %1274 = vmatpush1.bf16.xpose.msra.mxu0 %v1241
  %1275 = vmatprep.subr.bf16.mxu0 0
  %1276 = vmatpush1.bf16.xpose.msra.mxu0 %v1238
  %1277 = vmatprep.subr.bf16.mxu0 0
  %1278 = vmatpush2.bf16.xpose.msra.mxu0 0
  %1279 = vmatprep.subr.bf16.mxu0 0
  %1280 = vmatpush2.bf16.xpose.msra.mxu0 0
  %1281 = vmatprep.subr.bf16.mxu0 0
  %1282 = vmatpush2.bf16.xpose.msra.mxu0 0
  %1283 = vmatprep.subr.bf16.mxu0 0
  %1284 = vmatpush2.bf16.xpose.msra.mxu0 0
  %1285 = vmatprep.subr.bf16.mxu0 0
  %1286 = vmatpush2.bf16.xpose.msra.mxu0 0
  %1287 = vmatprep.subr.bf16.mxu0 0
  %1288 = vmatpush2.bf16.xpose.msra.mxu0 0
  %1289 = vmatprep.subr.bf16.mxu0 0
  %1290 = vmatpush2.bf16.xpose.msra.mxu0 0
  %1291 = vmatprep.subr.bf16.mxu0 0
  %1292 = vmatpush2.bf16.xpose.msra.mxu0 0
  %1293 = vmatprep.mubr.bf16.mxu0 0
  %1294 = vmatmul.mubr.bf16.gmra.mxu0 %v1232
  %v1295 = vpop.f32.mrf.mxu0
  %v1296 = vadd.f32 %v58, %v1295
  %v1297 = vpop.f32.mrf.mxu0
  %v1298 = vpop.f32.mrf.mxu0
  %v1299 = vadd.f32 %v59, %v1298
  %v1300 = vpop.f32.mrf.mxu0
  %1301 = vmatprep.mubr.bf16.mxu0 0
  %1302 = vmatmul.mubr.bf16.gmra.mxu0 %v1235
  %v1303 = vpop.f32.mrf.mxu0
  %v1304 = vadd.f32 %v60, %v1303
  %v1305 = vpop.f32.mrf.mxu0
  %v1306 = vpop.f32.mrf.mxu0
  %v1307 = vadd.f32 %v61, %v1306
  %v1308 = vpop.f32.mrf.mxu0
  %1309 = vdwg.mxu0
  %1310 = vmax.xlane.f32.xlu0 %v1296
  %v1311 = vpop.xlane.xlu0 %1310
  %1312 = vmax.xlane.f32.xlu0 %v1299
  %v1313 = vpop.xlane.xlu0 %1312
  %1314 = vmax.xlane.f32.xlu0 %v1304
  %v1315 = vpop.xlane.xlu0 %1314
  %1316 = vmax.xlane.f32.xlu0 %v1307
  %v1317 = vpop.xlane.xlu0 %1316
  %v1318 = vsub.f32 %v1296, %v1311
  %v1319 = vsub.f32 %v1299, %v1313
  %v1320 = vsub.f32 %v1304, %v1315
  %v1321 = vsub.f32 %v1307, %v1317
  %v1322 = vmul.f32 %v1318, 1.442695
  %v1323 = vpow.pop %v1322
  %v1324 = vmul.f32 %v1319, 1.442695
  %v1325 = vpow.pop %v1324
  %v1326 = vmul.f32 %v1320, 1.442695
  %v1327 = vpow.pop %v1326
  %v1328 = vmul.f32 %v1321, 1.442695
  %v1329 = vpow.pop %v1328
  %1330 = vadd.xlane.f32.xlu0 %v1323
  %v1331 = vpop.xlane.xlu0 %1330
  %1332 = vadd.xlane.f32.xlu0 %v1325
  %v1333 = vpop.xlane.xlu0 %1332
  %1334 = vadd.xlane.f32.xlu0 %v1327
  %v1335 = vpop.xlane.xlu0 %1334
  %1336 = vadd.xlane.f32.xlu0 %v1329
  %v1337 = vpop.xlane.xlu0 %1336
  %v1338 = vrcp.pop %v1331
  %v1339 = vrcp.pop %v1333
  %v1340 = vrcp.pop %v1335
  %v1341 = vrcp.pop %v1337
  %v1342 = vmul.f32 %v1323, %v1338
  %v1343 = vmul.f32 %v1325, %v1339
  %v1344 = vmul.f32 %v1327, %v1340
  %v1345 = vmul.f32 %v1329, %v1341
  %v1346 = vpack.c.bf16 %v1343, %v1342
  %v1347 = vpack.c.bf16 %v1345, %v1344
  %v1348 = vpack.c.bf16 %v724, %v721
  %v1349 = vpack.c.bf16 %v732, %v729
  %v1350 = vpack.c.bf16 %v740, %v737
  %v1351 = vpack.c.bf16 %v748, %v745
  %v1352 = vpack.c.bf16 %v756, %v753
  %v1353 = vpack.c.bf16 %v764, %v761
  %v1354 = vpack.c.bf16 %v772, %v769
  %v1355 = vpack.c.bf16 %v780, %v777
  %1356 = vmatprep.subr.bf16.mxu0 0
  %1357 = vmatpush1.bf16.msra.mxu0 %v1355
  %1358 = vmatprep.subr.bf16.mxu0 0
  %1359 = vmatpush1.bf16.msra.mxu0 %v1354
  %1360 = vmatprep.subr.bf16.mxu0 0
  %1361 = vmatpush1.bf16.msra.mxu0 %v1353
  %1362 = vmatprep.subr.bf16.mxu0 0
  %1363 = vmatpush1.bf16.msra.mxu0 %v1352
  %1364 = vmatprep.subr.bf16.mxu0 0
  %1365 = vmatpush1.bf16.msra.mxu0 %v1351
  %1366 = vmatprep.subr.bf16.mxu0 0
  %1367 = vmatpush1.bf16.msra.mxu0 %v1350
  %1368 = vmatprep.subr.bf16.mxu0 0
  %1369 = vmatpush1.bf16.msra.mxu0 %v1349
  %1370 = vmatprep.subr.bf16.mxu0 0
  %1371 = vmatpush1.bf16.msra.mxu0 %v1348
  %1372 = vmatprep.subr.bf16.mxu0 0
  %1373 = vmatpush2.bf16.msra.mxu0 0
  %1374 = vmatprep.subr.bf16.mxu0 0
  %1375 = vmatpush2.bf16.msra.mxu0 0
  %1376 = vmatprep.subr.bf16.mxu0 0
  %1377 = vmatpush2.bf16.msra.mxu0 0
  %1378 = vmatprep.subr.bf16.mxu0 0
  %1379 = vmatpush2.bf16.msra.mxu0 0
  %1380 = vmatprep.subr.bf16.mxu0 0
  %1381 = vmatpush2.bf16.msra.mxu0 0
  %1382 = vmatprep.subr.bf16.mxu0 0
  %1383 = vmatpush2.bf16.msra.mxu0 0
  %1384 = vmatprep.subr.bf16.mxu0 0
  %1385 = vmatpush2.bf16.msra.mxu0 0
  %1386 = vmatprep.subr.bf16.mxu0 0
  %1387 = vmatpush2.bf16.msra.mxu0 0
  %1388 = vmatprep.mubr.bf16.mxu0 0
  %1389 = vmatmul.mubr.bf16.gmra.mxu0 %v1346
  %v1390 = vpop.f32.mrf.mxu0
  %v1391 = vadd.f32 0.0, %v1390
  %v1392 = vpop.f32.mrf.mxu0
  %v1393 = vpop.f32.mrf.mxu0
  %v1394 = vadd.f32 0.0, %v1393
  %v1395 = vpop.f32.mrf.mxu0
  %1396 = vmatprep.mubr.bf16.mxu0 0
  %1397 = vmatmul.mubr.bf16.gmra.mxu0 %v1347
  %v1398 = vpop.f32.mrf.mxu0
  %v1399 = vadd.f32 0.0, %v1398
  %v1400 = vpop.f32.mrf.mxu0
  %v1401 = vpop.f32.mrf.mxu0
  %v1402 = vadd.f32 0.0, %v1401
  %v1403 = vpop.f32.mrf.mxu0
  %1404 = vdwg.mxu0
  %v1405 = vmul.f32 %v1391, %v62
  %v1406 = vmul.f32 %v1394, %v63
  %v1407 = vmul.f32 %v1399, %v64
  %v1408 = vmul.f32 %v1402, %v65
  %v1409 = vadd.f32 %v1405, %v1407
  %v1410 = vadd.f32 %v1406, %v1408
  %v1411 = vpack.c.bf16 %v1410, %v1409
  %v1412 = vld [vmem:[%s5] sm:$0xf]
  %v1413 = vld [vmem:[%s5 + $0x4] sm:$0xf]
  %v1414 = vld [vmem:[%s5 + $0x8] sm:$0xf]
  %v1415 = vld [vmem:[%s5 + $0xc] sm:$0xf]
  %v1416 = vld [vmem:[%s5 + $0x10] sm:$0xf]
  %v1417 = vld [vmem:[%s5 + $0x14] sm:$0xf]
  %v1418 = vld [vmem:[%s5 + $0x18] sm:$0xf]
  %v1419 = vld [vmem:[%s5 + $0x1c] sm:$0xf]
  %v1428 = vunpack.c.l.b16 %v1412
  %v1429 = vunpack.c.l.b16 %v1413
  %v1430 = vunpack.c.l.b16 %v1414
  %v1431 = vunpack.c.l.b16 %v1415
  %v1432 = vunpack.c.l.b16 %v1416
  %v1433 = vunpack.c.l.b16 %v1417
  %v1434 = vunpack.c.l.b16 %v1418
  %v1435 = vunpack.c.l.b16 %v1419
  %v1436 = vpack.c.b16 %v1429, %v1428
  %v1437 = vpack.c.b16 %v1431, %v1430
  %v1438 = vpack.c.b16 %v1433, %v1432
  %v1439 = vpack.c.b16 %v1435, %v1434
  %v1445 = vsel %vm235, %v1411, 0
  %1447 = vmatprep.subr.bf16.mxu0 0
  %1448 = vmatpush1.bf16.msra.mxu0 0
  %1449 = vmatprep.subr.bf16.mxu0 0
  %1450 = vmatpush1.bf16.msra.mxu0 0
  %1451 = vmatprep.subr.bf16.mxu0 0
  %1452 = vmatpush1.bf16.msra.mxu0 0
  %1453 = vmatprep.subr.bf16.mxu0 0
  %1454 = vmatpush1.bf16.msra.mxu0 0
  %1455 = vmatprep.subr.bf16.mxu0 0
  %1456 = vmatpush1.bf16.msra.mxu0 %v1439
  %1457 = vmatprep.subr.bf16.mxu0 0
  %1458 = vmatpush1.bf16.msra.mxu0 %v1438
  %1459 = vmatprep.subr.bf16.mxu0 0
  %1460 = vmatpush1.bf16.msra.mxu0 %v1437
  %1461 = vmatprep.subr.bf16.mxu0 0
  %1462 = vmatpush1.bf16.msra.mxu0 %v1436
  %1463 = vmatprep.subr.bf16.mxu0 0
  %1464 = vmatpush2.bf16.msra.mxu0 0
  %1465 = vmatprep.subr.bf16.mxu0 0
  %1466 = vmatpush2.bf16.msra.mxu0 0
  %1467 = vmatprep.subr.bf16.mxu0 0
  %1468 = vmatpush2.bf16.msra.mxu0 0
  %1469 = vmatprep.subr.bf16.mxu0 0
  %1470 = vmatpush2.bf16.msra.mxu0 0
  %1471 = vmatprep.subr.bf16.mxu0 0
  %1472 = vmatpush2.bf16.msra.mxu0 0
  %1473 = vmatprep.subr.bf16.mxu0 0
  %1474 = vmatpush2.bf16.msra.mxu0 0
  %1475 = vmatprep.subr.bf16.mxu0 0
  %1476 = vmatpush2.bf16.msra.mxu0 0
  %1477 = vmatprep.subr.bf16.mxu0 0
  %1478 = vmatpush2.bf16.msra.mxu0 0
  %1479 = vmatprep.mubr.bf16.mxu0 0
  %1480 = vmatmul.mubr.bf16.gmra.mxu0 %v1445
  %v1481 = vpop.f32.mrf.mxu0
  %v1482 = vadd.f32 0.0, %v1481
  %v1483 = vpop.f32.mrf.mxu0
  %v1484 = vpop.f32.mrf.mxu0
  %v1485 = vadd.f32 0.0, %v1484
  %v1486 = vpop.f32.mrf.mxu0
  %1487 = vdwg.mxu0
  %v1490 = vrot.slane %v1482, 1
  %v1491 = vrot.slane %v1482, 2
  %v1492 = vrot.slane %v1482, 3
  %v1493 = vrot.slane %v1482, 4
  %v1494 = vrot.slane %v1482, 5
  %v1495 = vrot.slane %v1482, 6
  %v1496 = vrot.slane %v1482, 7
  %v1497 = vrot.slane %v1485, 1
  %v1498 = vrot.slane %v1485, 2
  %v1499 = vrot.slane %v1485, 3
  %v1500 = vrot.slane %v1485, 4
  %v1501 = vrot.slane %v1485, 5
  %v1502 = vrot.slane %v1485, 6
  %v1503 = vrot.slane %v1485, 7
  %v1520 = vadd.f32 %v173, %v1490
  %v1521 = vadd.f32 %v176, %v1491
  %v1522 = vadd.f32 %v181, %v1492
  %v1523 = vadd.f32 %v184, %v1493
  %v1524 = vadd.f32 %v189, %v1494
  %v1525 = vadd.f32 %v192, %v1495
  %v1526 = vadd.f32 %v197, %v1496
  %v1527 = vadd.f32 %v200, %v1482
  %v1528 = vadd.f32 %v205, %v1497
  %v1529 = vadd.f32 %v208, %v1498
  %v1530 = vadd.f32 %v213, %v1499
  %v1531 = vadd.f32 %v216, %v1500
  %v1532 = vadd.f32 %v221, %v1501
  %v1533 = vadd.f32 %v224, %v1502
  %v1534 = vadd.f32 %v229, %v1503
  %v1535 = vadd.f32 %v232, %v1485
  %v1536 = vlaneseq
  %v1537 = vshrl.u32 %v1536, 7
  %v1538 = vsub.s32 0, %v1537
  %v1539 = vrot.slane %v54, %v1538
  %v1540 = vadd.f32 %v1520, %v1539
  %v1541 = vadd.f32 %v1521, %v1539
  %v1542 = vadd.f32 %v1522, %v1539
  %v1543 = vadd.f32 %v1523, %v1539
  %v1544 = vadd.f32 %v1524, %v1539
  %v1545 = vadd.f32 %v1525, %v1539
  %v1546 = vadd.f32 %v1526, %v1539
  %v1547 = vadd.f32 %v1527, %v1539
  %v1548 = vadd.f32 %v1528, %v1539
  %v1549 = vadd.f32 %v1529, %v1539
  %v1550 = vadd.f32 %v1530, %v1539
  %v1551 = vadd.f32 %v1531, %v1539
  %v1552 = vadd.f32 %v1532, %v1539
  %v1553 = vadd.f32 %v1533, %v1539
  %v1554 = vadd.f32 %v1534, %v1539
  %v1555 = vadd.f32 %v1535, %v1539
  %v1572 = vrot.slane %v1541, 7
  %v1573 = vrot.slane %v1542, 6
  %v1574 = vsel %vm801, %v1573, %v1572
  %v1575 = vrot.slane %v1543, 5
  %v1576 = vsel %vm804, %v1575, %v1574
  %v1577 = vrot.slane %v1544, 4
  %v1578 = vsel %vm807, %v1577, %v1576
  %v1579 = vrot.slane %v1545, 3
  %v1580 = vsel %vm810, %v1579, %v1578
  %v1581 = vrot.slane %v1546, 2
  %v1582 = vsel %vm813, %v1581, %v1580
  %v1583 = vrot.slane %v1547, 1
  %v1584 = vsel %vm816, %v1583, %v1582
  %v1585 = vsel %vm818, %v1548, %v1584
  %v1586 = vrot.slane %v1549, 7
  %v1587 = vrot.slane %v1550, 6
  %v1588 = vsel %vm801, %v1587, %v1586
  %v1589 = vrot.slane %v1551, 5
  %v1590 = vsel %vm804, %v1589, %v1588
  %v1591 = vrot.slane %v1552, 4
  %v1592 = vsel %vm807, %v1591, %v1590
  %v1593 = vrot.slane %v1553, 3
  %v1594 = vsel %vm810, %v1593, %v1592
  %v1595 = vrot.slane %v1554, 2
  %v1596 = vsel %vm813, %v1595, %v1594
  %v1597 = vrot.slane %v1555, 1
  %v1598 = vsel %vm816, %v1597, %v1596
  %v1602 = vsel %vm836, %v1540, 0.0
  %1603 = vadd.xlane.f32.xlu0 %v1602
  %v1604 = vpop.xlane.xlu0 %1603
  %v1605 = vsel %vm235, %v1585, 0.0
  %1606 = vadd.xlane.f32.xlu0 %v1605
  %v1607 = vpop.xlane.xlu0 %1606
  %v1608 = vsel %vm843, %v1598, 0.0
  %1609 = vadd.xlane.f32.xlu0 %v1608
  %v1610 = vpop.xlane.xlu0 %1609
  %v1611 = vmul.f32 %v1604, %v284
  %v1612 = vmul.f32 %v1607, %v284
  %v1613 = vmul.f32 %v1610, %v284
  %v1617 = vrot.slane %v1612, 1
  %v1618 = vrot.slane %v1612, 2
  %v1619 = vrot.slane %v1612, 3
  %v1620 = vrot.slane %v1612, 4
  %v1621 = vrot.slane %v1612, 5
  %v1622 = vrot.slane %v1612, 6
  %v1623 = vrot.slane %v1612, 7
  %v1624 = vrot.slane %v1613, 1
  %v1625 = vrot.slane %v1613, 2
  %v1626 = vrot.slane %v1613, 3
  %v1627 = vrot.slane %v1613, 4
  %v1628 = vrot.slane %v1613, 5
  %v1629 = vrot.slane %v1613, 6
  %v1630 = vrot.slane %v1613, 7
  %v1647 = vsub.f32 %v1540, %v1611
  %v1648 = vsub.f32 %v1541, %v1617
  %v1649 = vsub.f32 %v1542, %v1618
  %v1650 = vsub.f32 %v1543, %v1619
  %v1651 = vsub.f32 %v1544, %v1620
  %v1652 = vsub.f32 %v1545, %v1621
  %v1653 = vsub.f32 %v1546, %v1622
  %v1654 = vsub.f32 %v1547, %v1623
  %v1655 = vsub.f32 %v1548, %v1612
  %v1656 = vsub.f32 %v1549, %v1624
  %v1657 = vsub.f32 %v1550, %v1625
  %v1658 = vsub.f32 %v1551, %v1626
  %v1659 = vsub.f32 %v1552, %v1627
  %v1660 = vsub.f32 %v1553, %v1628
  %v1661 = vsub.f32 %v1554, %v1629
  %v1662 = vsub.f32 %v1555, %v1630
  %v1663 = vmul.f32 %v1647, %v1647
  %v1664 = vmul.f32 %v1648, %v1648
  %v1665 = vmul.f32 %v1649, %v1649
  %v1666 = vmul.f32 %v1650, %v1650
  %v1667 = vmul.f32 %v1651, %v1651
  %v1668 = vmul.f32 %v1652, %v1652
  %v1669 = vmul.f32 %v1653, %v1653
  %v1670 = vmul.f32 %v1654, %v1654
  %v1671 = vmul.f32 %v1655, %v1655
  %v1672 = vmul.f32 %v1656, %v1656
  %v1673 = vmul.f32 %v1657, %v1657
  %v1674 = vmul.f32 %v1658, %v1658
  %v1675 = vmul.f32 %v1659, %v1659
  %v1676 = vmul.f32 %v1660, %v1660
  %v1677 = vmul.f32 %v1661, %v1661
  %v1678 = vmul.f32 %v1662, %v1662
  %v1695 = vrot.slane %v1664, 7
  %v1696 = vrot.slane %v1665, 6
  %v1697 = vsel %vm801, %v1696, %v1695
  %v1698 = vrot.slane %v1666, 5
  %v1699 = vsel %vm804, %v1698, %v1697
  %v1700 = vrot.slane %v1667, 4
  %v1701 = vsel %vm807, %v1700, %v1699
  %v1702 = vrot.slane %v1668, 3
  %v1703 = vsel %vm810, %v1702, %v1701
  %v1704 = vrot.slane %v1669, 2
  %v1705 = vsel %vm813, %v1704, %v1703
  %v1706 = vrot.slane %v1670, 1
  %v1707 = vsel %vm816, %v1706, %v1705
  %v1708 = vsel %vm818, %v1671, %v1707
  %v1709 = vrot.slane %v1672, 7
  %v1710 = vrot.slane %v1673, 6
  %v1711 = vsel %vm801, %v1710, %v1709
  %v1712 = vrot.slane %v1674, 5
  %v1713 = vsel %vm804, %v1712, %v1711
  %v1714 = vrot.slane %v1675, 4
  %v1715 = vsel %vm807, %v1714, %v1713
  %v1716 = vrot.slane %v1676, 3
  %v1717 = vsel %vm810, %v1716, %v1715
  %v1718 = vrot.slane %v1677, 2
  %v1719 = vsel %vm813, %v1718, %v1717
  %v1720 = vrot.slane %v1678, 1
  %v1721 = vsel %vm816, %v1720, %v1719
  %v1725 = vsel %vm836, %v1663, 0.0
  %1726 = vadd.xlane.f32.xlu0 %v1725
  %v1727 = vpop.xlane.xlu0 %1726
  %v1728 = vsel %vm235, %v1708, 0.0
  %1729 = vadd.xlane.f32.xlu0 %v1728
  %v1730 = vpop.xlane.xlu0 %1729
  %v1731 = vsel %vm843, %v1721, 0.0
  %1732 = vadd.xlane.f32.xlu0 %v1731
  %v1733 = vpop.xlane.xlu0 %1732
  %v1734 = vmul.f32 %v1727, %v284
  %v1735 = vmul.f32 %v1730, %v284
  %v1736 = vmul.f32 %v1733, %v284
  %v1737 = vadd.f32 %v1734, 1e-05
  %v1738 = vadd.f32 %v1735, 1e-05
  %v1739 = vadd.f32 %v1736, 1e-05
  %v1740 = vrsqrt.pop %v1737
  %v1741 = vrsqrt.pop %v1738
  %v1742 = vrsqrt.pop %v1739
  %v1746 = vrot.slane %v1741, 1
  %v1747 = vrot.slane %v1741, 2
  %v1748 = vrot.slane %v1741, 3
  %v1749 = vrot.slane %v1741, 4
  %v1750 = vrot.slane %v1741, 5
  %v1751 = vrot.slane %v1741, 6
  %v1752 = vrot.slane %v1741, 7
  %v1753 = vrot.slane %v1742, 1
  %v1754 = vrot.slane %v1742, 2
  %v1755 = vrot.slane %v1742, 3
  %v1756 = vrot.slane %v1742, 4
  %v1757 = vrot.slane %v1742, 5
  %v1758 = vrot.slane %v1742, 6
  %v1759 = vrot.slane %v1742, 7
  %v1776 = vmul.f32 %v1647, %v1740
  %v1777 = vmul.f32 %v1648, %v1746
  %v1778 = vmul.f32 %v1649, %v1747
  %v1779 = vmul.f32 %v1650, %v1748
  %v1780 = vmul.f32 %v1651, %v1749
  %v1781 = vmul.f32 %v1652, %v1750
  %v1782 = vmul.f32 %v1653, %v1751
  %v1783 = vmul.f32 %v1654, %v1752
  %v1784 = vmul.f32 %v1655, %v1741
  %v1785 = vmul.f32 %v1656, %v1753
  %v1786 = vmul.f32 %v1657, %v1754
  %v1787 = vmul.f32 %v1658, %v1755
  %v1788 = vmul.f32 %v1659, %v1756
  %v1789 = vmul.f32 %v1660, %v1757
  %v1790 = vmul.f32 %v1661, %v1758
  %v1791 = vmul.f32 %v1662, %v1759
  %v1792 = vlaneseq
  %v1793 = vshrl.u32 %v1792, 7
  %v1794 = vsub.s32 0, %v1793
  %v1795 = vrot.slane %v55, %v1794
  %v1796 = vmul.f32 %v1776, %v1795
  %v1797 = vmul.f32 %v1777, %v1795
  %v1798 = vmul.f32 %v1778, %v1795
  %v1799 = vmul.f32 %v1779, %v1795
  %v1800 = vmul.f32 %v1780, %v1795
  %v1801 = vmul.f32 %v1781, %v1795
  %v1802 = vmul.f32 %v1782, %v1795
  %v1803 = vmul.f32 %v1783, %v1795
  %v1804 = vmul.f32 %v1784, %v1795
  %v1805 = vmul.f32 %v1785, %v1795
  %v1806 = vmul.f32 %v1786, %v1795
  %v1807 = vmul.f32 %v1787, %v1795
  %v1808 = vmul.f32 %v1788, %v1795
  %v1809 = vmul.f32 %v1789, %v1795
  %v1810 = vmul.f32 %v1790, %v1795
  %v1811 = vmul.f32 %v1791, %v1795
  %v1812 = vlaneseq
  %v1813 = vshrl.u32 %v1812, 7
  %v1814 = vsub.s32 0, %v1813
  %v1815 = vrot.slane %v56, %v1814
  %v1816 = vadd.f32 %v1796, %v1815
  %v1817 = vadd.f32 %v1797, %v1815
  %v1818 = vadd.f32 %v1798, %v1815
  %v1819 = vadd.f32 %v1799, %v1815
  %v1820 = vadd.f32 %v1800, %v1815
  %v1821 = vadd.f32 %v1801, %v1815
  %v1822 = vadd.f32 %v1802, %v1815
  %v1823 = vadd.f32 %v1803, %v1815
  %v1824 = vadd.f32 %v1804, %v1815
  %v1825 = vadd.f32 %v1805, %v1815
  %v1826 = vadd.f32 %v1806, %v1815
  %v1827 = vadd.f32 %v1807, %v1815
  %v1828 = vadd.f32 %v1808, %v1815
  %v1829 = vadd.f32 %v1809, %v1815
  %v1830 = vadd.f32 %v1810, %v1815
  %v1831 = vadd.f32 %v1811, %v1815
  %v1832 = vpack.c.bf16 %v1816, %v1816
  %v1833 = vpack.c.bf16 %v1817, %v1817
  %v1834 = vpack.c.bf16 %v1818, %v1818
  %v1835 = vpack.c.bf16 %v1819, %v1819
  %v1836 = vpack.c.bf16 %v1820, %v1820
  %v1837 = vpack.c.bf16 %v1821, %v1821
  %v1838 = vpack.c.bf16 %v1822, %v1822
  %v1839 = vpack.c.bf16 %v1823, %v1823
  %v1840 = vpack.c.bf16 %v1824, %v1824
  %v1841 = vpack.c.bf16 %v1825, %v1825
  %v1842 = vpack.c.bf16 %v1826, %v1826
  %v1843 = vpack.c.bf16 %v1827, %v1827
  %v1844 = vpack.c.bf16 %v1828, %v1828
  %v1845 = vpack.c.bf16 %v1829, %v1829
  %v1846 = vpack.c.bf16 %v1830, %v1830
  %v1847 = vpack.c.bf16 %v1831, %v1831
  %v1848 = vld [vmem:[%s6] sm:$0xff]
  %v1849 = vld [vmem:[%s6 + $0x8] sm:$0xff]
  %v1850 = vld [vmem:[%s6 + $0x10] sm:$0xff]
  %v1851 = vld [vmem:[%s6 + $0x18] sm:$0xff]
  %v1852 = vld [vmem:[%s6 + $0x20] sm:$0xff]
  %v1853 = vld [vmem:[%s6 + $0x28] sm:$0xff]
  %v1854 = vld [vmem:[%s6 + $0x30] sm:$0xff]
  %v1855 = vld [vmem:[%s6 + $0x38] sm:$0xff]
  %v1856 = vld [vmem:[%s10] sm:$0x3]
  %v1858 = vlaneseq
  %v1859 = vshrl.u32 %v1858, 7
  %v1860 = vsub.s32 0, %v1859
  %v1861 = vrot.slane %v1856, %v1860
  %v1862 = vlaneseq
  %v1863 = vshrl.u32 %v1862, 7
  %v1864 = vsub.s32 1, %v1863
  %v1865 = vrot.slane %v1856, %v1864
  %v1884 = vunpack.c.l.b16 %v1832
  %v1885 = vunpack.c.l.b16 %v1833
  %v1886 = vunpack.c.l.b16 %v1834
  %v1887 = vunpack.c.l.b16 %v1835
  %v1888 = vunpack.c.l.b16 %v1836
  %v1889 = vunpack.c.l.b16 %v1837
  %v1890 = vunpack.c.l.b16 %v1838
  %v1891 = vunpack.c.l.b16 %v1839
  %v1892 = vunpack.c.l.b16 %v1840
  %v1893 = vunpack.c.l.b16 %v1841
  %v1894 = vunpack.c.l.b16 %v1842
  %v1895 = vunpack.c.l.b16 %v1843
  %v1896 = vunpack.c.l.b16 %v1844
  %v1897 = vunpack.c.l.b16 %v1845
  %v1898 = vunpack.c.l.b16 %v1846
  %v1899 = vunpack.c.l.b16 %v1847
  %v1900 = vrot.slane %v1884, 7
  %v1901 = vrot.slane %v1885, 6
  %v1902 = vsel %vm801, %v1901, %v1900
  %v1903 = vrot.slane %v1886, 5
  %v1904 = vsel %vm804, %v1903, %v1902
  %v1905 = vrot.slane %v1887, 4
  %v1906 = vsel %vm807, %v1905, %v1904
  %v1907 = vrot.slane %v1888, 3
  %v1908 = vsel %vm810, %v1907, %v1906
  %v1909 = vrot.slane %v1889, 2
  %v1910 = vsel %vm813, %v1909, %v1908
  %v1911 = vrot.slane %v1890, 1
  %v1912 = vsel %vm816, %v1911, %v1910
  %v1913 = vsel %vm818, %v1891, %v1912
  %v1914 = vrot.slane %v1892, 7
  %v1915 = vrot.slane %v1893, 6
  %v1916 = vsel %vm801, %v1915, %v1914
  %v1917 = vrot.slane %v1894, 5
  %v1918 = vsel %vm804, %v1917, %v1916
  %v1919 = vrot.slane %v1895, 4
  %v1920 = vsel %vm807, %v1919, %v1918
  %v1921 = vrot.slane %v1896, 3
  %v1922 = vsel %vm810, %v1921, %v1920
  %v1923 = vrot.slane %v1897, 2
  %v1924 = vsel %vm813, %v1923, %v1922
  %v1925 = vrot.slane %v1898, 1
  %v1926 = vsel %vm816, %v1925, %v1924
  %v1927 = vsel %vm818, %v1899, %v1926
  %v1928 = vpack.c.b16 %v1927, %v1913
  %v1937 = vunpack.c.l.b16 %v1848
  %v1938 = vunpack.c.h.b16 %v1848
  %v1939 = vunpack.c.l.b16 %v1849
  %v1940 = vunpack.c.h.b16 %v1849
  %v1941 = vunpack.c.l.b16 %v1850
  %v1942 = vunpack.c.h.b16 %v1850
  %v1943 = vunpack.c.l.b16 %v1851
  %v1944 = vunpack.c.h.b16 %v1851
  %v1945 = vunpack.c.l.b16 %v1852
  %v1946 = vunpack.c.h.b16 %v1852
  %v1947 = vunpack.c.l.b16 %v1853
  %v1948 = vunpack.c.h.b16 %v1853
  %v1949 = vunpack.c.l.b16 %v1854
  %v1950 = vunpack.c.h.b16 %v1854
  %v1951 = vunpack.c.l.b16 %v1855
  %v1952 = vunpack.c.h.b16 %v1855
  %v1953 = vpack.c.b16 %v1939, %v1937
  %v1954 = vpack.c.b16 %v1940, %v1938
  %v1955 = vpack.c.b16 %v1943, %v1941
  %v1956 = vpack.c.b16 %v1944, %v1942
  %v1957 = vpack.c.b16 %v1947, %v1945
  %v1958 = vpack.c.b16 %v1948, %v1946
  %v1959 = vpack.c.b16 %v1951, %v1949
  %v1960 = vpack.c.b16 %v1952, %v1950
  %v1970 = vsel %vm235, %v1928, 0
  %1972 = vmatprep.subr.bf16.mxu0 0
  %1973 = vmatpush1.bf16.msra.mxu0 0
  %1974 = vmatprep.subr.bf16.mxu0 0
  %1975 = vmatpush1.bf16.msra.mxu0 0
  %1976 = vmatprep.subr.bf16.mxu0 0
  %1977 = vmatpush1.bf16.msra.mxu0 0
  %1978 = vmatprep.subr.bf16.mxu0 0
  %1979 = vmatpush1.bf16.msra.mxu0 0
  %1980 = vmatprep.subr.bf16.mxu0 %v1960
  %1981 = vmatpush1.bf16.msra.mxu0 %v1959
  %1982 = vmatprep.subr.bf16.mxu0 %v1958
  %1983 = vmatpush1.bf16.msra.mxu0 %v1957
  %1984 = vmatprep.subr.bf16.mxu0 %v1956
  %1985 = vmatpush1.bf16.msra.mxu0 %v1955
  %1986 = vmatprep.subr.bf16.mxu0 %v1954
  %1987 = vmatpush1.bf16.msra.mxu0 %v1953
  %1988 = vmatprep.subr.bf16.mxu0 0
  %1989 = vmatpush2.bf16.msra.mxu0 0
  %1990 = vmatprep.subr.bf16.mxu0 0
  %1991 = vmatpush2.bf16.msra.mxu0 0
  %1992 = vmatprep.subr.bf16.mxu0 0
  %1993 = vmatpush2.bf16.msra.mxu0 0
  %1994 = vmatprep.subr.bf16.mxu0 0
  %1995 = vmatpush2.bf16.msra.mxu0 0
  %1996 = vmatprep.subr.bf16.mxu0 0
  %1997 = vmatpush2.bf16.msra.mxu0 0
  %1998 = vmatprep.subr.bf16.mxu0 0
  %1999 = vmatpush2.bf16.msra.mxu0 0
  %2000 = vmatprep.subr.bf16.mxu0 0
  %2001 = vmatpush2.bf16.msra.mxu0 0
  %2002 = vmatprep.subr.bf16.mxu0 0
  %2003 = vmatpush2.bf16.msra.mxu0 0
  %2004 = vmatprep.mubr.bf16.mxu0 0
  %2005 = vmatmul.mubr.bf16.gmra.mxu0 %v1970
  %v2006 = vpop.f32.mrf.mxu0
  %v2007 = vadd.f32 %v1861, %v2006
  %v2008 = vpop.f32.mrf.mxu0
  %v2009 = vadd.f32 %v1865, %v2008
  %v2010 = vpop.f32.mrf.mxu0
  %v2011 = vadd.f32 %v1861, %v2010
  %v2012 = vpop.f32.mrf.mxu0
  %v2013 = vadd.f32 %v1865, %v2012
  %2014 = vdwg.mxu0
  %v2015 = vmax.f32 %v2007, 0.0
  %v2016 = vmax.f32 %v2009, 0.0
  %v2017 = vmax.f32 %v2011, 0.0
  %v2018 = vmax.f32 %v2013, 0.0
  %v2019 = vpack.c.bf16 %v2017, %v2015
  %v2020 = vpack.c.bf16 %v2018, %v2016
  %v2021 = vld [vmem:[%s7] sm:$0xf]
  %v2022 = vld [vmem:[%s7 + $0x4] sm:$0xf]
  %v2023 = vld [vmem:[%s7 + $0x8] sm:$0xf]
  %v2024 = vld [vmem:[%s7 + $0xc] sm:$0xf]
  %v2025 = vld [vmem:[%s7 + $0x10] sm:$0xf]
  %v2026 = vld [vmem:[%s7 + $0x14] sm:$0xf]
  %v2027 = vld [vmem:[%s7 + $0x18] sm:$0xf]
  %v2028 = vld [vmem:[%s7 + $0x1c] sm:$0xf]
  %v2029 = vld [vmem:[%s7 + $0x20] sm:$0xf]
  %v2030 = vld [vmem:[%s7 + $0x24] sm:$0xf]
  %v2031 = vld [vmem:[%s7 + $0x28] sm:$0xf]
  %v2032 = vld [vmem:[%s7 + $0x2c] sm:$0xf]
  %v2033 = vld [vmem:[%s7 + $0x30] sm:$0xf]
  %v2034 = vld [vmem:[%s7 + $0x34] sm:$0xf]
  %v2035 = vld [vmem:[%s7 + $0x38] sm:$0xf]
  %v2036 = vld [vmem:[%s7 + $0x3c] sm:$0xf]
  %v2037 = vld [vmem:[%s7 + $0x40] sm:$0xf]
  %v2038 = vld [vmem:[%s7 + $0x44] sm:$0xf]
  %v2039 = vld [vmem:[%s7 + $0x48] sm:$0xf]
  %v2040 = vld [vmem:[%s7 + $0x4c] sm:$0xf]
  %v2041 = vld [vmem:[%s7 + $0x50] sm:$0xf]
  %v2042 = vld [vmem:[%s7 + $0x54] sm:$0xf]
  %v2043 = vld [vmem:[%s7 + $0x58] sm:$0xf]
  %v2044 = vld [vmem:[%s7 + $0x5c] sm:$0xf]
  %v2045 = vld [vmem:[%s7 + $0x60] sm:$0xf]
  %v2046 = vld [vmem:[%s7 + $0x64] sm:$0xf]
  %v2047 = vld [vmem:[%s7 + $0x68] sm:$0xf]
  %v2048 = vld [vmem:[%s7 + $0x6c] sm:$0xf]
  %v2049 = vld [vmem:[%s7 + $0x70] sm:$0xf]
  %v2050 = vld [vmem:[%s7 + $0x74] sm:$0xf]
  %v2051 = vld [vmem:[%s7 + $0x78] sm:$0xf]
  %v2052 = vld [vmem:[%s7 + $0x7c] sm:$0xf]
  %v2085 = vunpack.c.l.b16 %v2021
  %v2086 = vunpack.c.l.b16 %v2022
  %v2087 = vunpack.c.l.b16 %v2023
  %v2088 = vunpack.c.l.b16 %v2024
  %v2089 = vunpack.c.l.b16 %v2025
  %v2090 = vunpack.c.l.b16 %v2026
  %v2091 = vunpack.c.l.b16 %v2027
  %v2092 = vunpack.c.l.b16 %v2028
  %v2093 = vunpack.c.l.b16 %v2029
  %v2094 = vunpack.c.l.b16 %v2030
  %v2095 = vunpack.c.l.b16 %v2031
  %v2096 = vunpack.c.l.b16 %v2032
  %v2097 = vunpack.c.l.b16 %v2033
  %v2098 = vunpack.c.l.b16 %v2034
  %v2099 = vunpack.c.l.b16 %v2035
  %v2100 = vunpack.c.l.b16 %v2036
  %v2101 = vunpack.c.l.b16 %v2037
  %v2102 = vunpack.c.l.b16 %v2038
  %v2103 = vunpack.c.l.b16 %v2039
  %v2104 = vunpack.c.l.b16 %v2040
  %v2105 = vunpack.c.l.b16 %v2041
  %v2106 = vunpack.c.l.b16 %v2042
  %v2107 = vunpack.c.l.b16 %v2043
  %v2108 = vunpack.c.l.b16 %v2044
  %v2109 = vunpack.c.l.b16 %v2045
  %v2110 = vunpack.c.l.b16 %v2046
  %v2111 = vunpack.c.l.b16 %v2047
  %v2112 = vunpack.c.l.b16 %v2048
  %v2113 = vunpack.c.l.b16 %v2049
  %v2114 = vunpack.c.l.b16 %v2050
  %v2115 = vunpack.c.l.b16 %v2051
  %v2116 = vunpack.c.l.b16 %v2052
  %v2117 = vpack.c.b16 %v2086, %v2085
  %v2118 = vpack.c.b16 %v2088, %v2087
  %v2119 = vpack.c.b16 %v2090, %v2089
  %v2120 = vpack.c.b16 %v2092, %v2091
  %v2121 = vpack.c.b16 %v2094, %v2093
  %v2122 = vpack.c.b16 %v2096, %v2095
  %v2123 = vpack.c.b16 %v2098, %v2097
  %v2124 = vpack.c.b16 %v2100, %v2099
  %v2125 = vpack.c.b16 %v2102, %v2101
  %v2126 = vpack.c.b16 %v2104, %v2103
  %v2127 = vpack.c.b16 %v2106, %v2105
  %v2128 = vpack.c.b16 %v2108, %v2107
  %v2129 = vpack.c.b16 %v2110, %v2109
  %v2130 = vpack.c.b16 %v2112, %v2111
  %v2131 = vpack.c.b16 %v2114, %v2113
  %v2132 = vpack.c.b16 %v2116, %v2115
  %2149 = vmatprep.subr.bf16.mxu0 0
  %2150 = vmatpush1.bf16.msra.mxu0 %v2124
  %2151 = vmatprep.subr.bf16.mxu0 0
  %2152 = vmatpush1.bf16.msra.mxu0 %v2123
  %2153 = vmatprep.subr.bf16.mxu0 0
  %2154 = vmatpush1.bf16.msra.mxu0 %v2122
  %2155 = vmatprep.subr.bf16.mxu0 0
  %2156 = vmatpush1.bf16.msra.mxu0 %v2121
  %2157 = vmatprep.subr.bf16.mxu0 0
  %2158 = vmatpush1.bf16.msra.mxu0 %v2120
  %2159 = vmatprep.subr.bf16.mxu0 0
  %2160 = vmatpush1.bf16.msra.mxu0 %v2119
  %2161 = vmatprep.subr.bf16.mxu0 0
  %2162 = vmatpush1.bf16.msra.mxu0 %v2118
  %2163 = vmatprep.subr.bf16.mxu0 0
  %2164 = vmatpush1.bf16.msra.mxu0 %v2117
  %2165 = vmatprep.subr.bf16.mxu0 0
  %2166 = vmatpush2.bf16.msra.mxu0 %v2132
  %2167 = vmatprep.subr.bf16.mxu0 0
  %2168 = vmatpush2.bf16.msra.mxu0 %v2131
  %2169 = vmatprep.subr.bf16.mxu0 0
  %2170 = vmatpush2.bf16.msra.mxu0 %v2130
  %2171 = vmatprep.subr.bf16.mxu0 0
  %2172 = vmatpush2.bf16.msra.mxu0 %v2129
  %2173 = vmatprep.subr.bf16.mxu0 0
  %2174 = vmatpush2.bf16.msra.mxu0 %v2128
  %2175 = vmatprep.subr.bf16.mxu0 0
  %2176 = vmatpush2.bf16.msra.mxu0 %v2127
  %2177 = vmatprep.subr.bf16.mxu0 0
  %2178 = vmatpush2.bf16.msra.mxu0 %v2126
  %2179 = vmatprep.subr.bf16.mxu0 0
  %2180 = vmatpush2.bf16.msra.mxu0 %v2125
  %2181 = vmatprep.mubr.bf16.mxu0 %v2020
  %2182 = vmatmul.mubr.bf16.gmra.mxu0 %v2019
  %v2183 = vpop.f32.mrf.mxu0
  %v2184 = vadd.f32 0.0, %v2183
  %v2185 = vpop.f32.mrf.mxu0
  %v2186 = vpop.f32.mrf.mxu0
  %v2187 = vadd.f32 0.0, %v2186
  %v2188 = vpop.f32.mrf.mxu0
  %2189 = vdwg.mxu0
  %v2192 = vrot.slane %v2184, 1
  %v2193 = vrot.slane %v2184, 2
  %v2194 = vrot.slane %v2184, 3
  %v2195 = vrot.slane %v2184, 4
  %v2196 = vrot.slane %v2184, 5
  %v2197 = vrot.slane %v2184, 6
  %v2198 = vrot.slane %v2184, 7
  %v2199 = vrot.slane %v2187, 1
  %v2200 = vrot.slane %v2187, 2
  %v2201 = vrot.slane %v2187, 3
  %v2202 = vrot.slane %v2187, 4
  %v2203 = vrot.slane %v2187, 5
  %v2204 = vrot.slane %v2187, 6
  %v2205 = vrot.slane %v2187, 7
  %v2222 = vadd.f32 %v1540, %v2192
  %v2223 = vadd.f32 %v1541, %v2193
  %v2224 = vadd.f32 %v1542, %v2194
  %v2225 = vadd.f32 %v1543, %v2195
  %v2226 = vadd.f32 %v1544, %v2196
  %v2227 = vadd.f32 %v1545, %v2197
  %v2228 = vadd.f32 %v1546, %v2198
  %v2229 = vadd.f32 %v1547, %v2184
  %v2230 = vadd.f32 %v1548, %v2199
  %v2231 = vadd.f32 %v1549, %v2200
  %v2232 = vadd.f32 %v1550, %v2201
  %v2233 = vadd.f32 %v1551, %v2202
  %v2234 = vadd.f32 %v1552, %v2203
  %v2235 = vadd.f32 %v1553, %v2204
  %v2236 = vadd.f32 %v1554, %v2205
  %v2237 = vadd.f32 %v1555, %v2187
  %v2238 = vlaneseq
  %v2239 = vshrl.u32 %v2238, 7
  %v2240 = vsub.s32 0, %v2239
  %v2241 = vrot.slane %v57, %v2240
  %v2242 = vadd.f32 %v2222, %v2241
  %v2243 = vadd.f32 %v2223, %v2241
  %v2244 = vadd.f32 %v2224, %v2241
  %v2245 = vadd.f32 %v2225, %v2241
  %v2246 = vadd.f32 %v2226, %v2241
  %v2247 = vadd.f32 %v2227, %v2241
  %v2248 = vadd.f32 %v2228, %v2241
  %v2249 = vadd.f32 %v2229, %v2241
  %v2250 = vadd.f32 %v2230, %v2241
  %v2251 = vadd.f32 %v2231, %v2241
  %v2252 = vadd.f32 %v2232, %v2241
  %v2253 = vadd.f32 %v2233, %v2241
  %v2254 = vadd.f32 %v2234, %v2241
  %v2255 = vadd.f32 %v2235, %v2241
  %v2256 = vadd.f32 %v2236, %v2241
  %v2257 = vadd.f32 %v2237, %v2241
  %v2258 = vpack.c.bf16 %v2242, %v2242
  %v2259 = vpack.c.bf16 %v2243, %v2243
  %v2260 = vpack.c.bf16 %v2244, %v2244
  %v2261 = vpack.c.bf16 %v2245, %v2245
  %v2262 = vpack.c.bf16 %v2246, %v2246
  %v2263 = vpack.c.bf16 %v2247, %v2247
  %v2264 = vpack.c.bf16 %v2248, %v2248
  %v2265 = vpack.c.bf16 %v2249, %v2249
  %v2266 = vpack.c.bf16 %v2250, %v2250
  %v2267 = vpack.c.bf16 %v2251, %v2251
  %v2268 = vpack.c.bf16 %v2252, %v2252
  %v2269 = vpack.c.bf16 %v2253, %v2253
  %v2270 = vpack.c.bf16 %v2254, %v2254
  %v2271 = vpack.c.bf16 %v2255, %v2255
  %v2272 = vpack.c.bf16 %v2256, %v2256
  %v2273 = vpack.c.bf16 %v2257, %v2257
  %v2274 = vld [vmem:[%s8] sm:$0xf]
  %v2275 = vld [vmem:[%s8 + $0x4] sm:$0xf]
  %v2276 = vld [vmem:[%s8 + $0x8] sm:$0xf]
  %v2277 = vld [vmem:[%s8 + $0xc] sm:$0xf]
  %v2278 = vld [vmem:[%s8 + $0x10] sm:$0xf]
  %v2279 = vld [vmem:[%s8 + $0x14] sm:$0xf]
  %v2280 = vld [vmem:[%s8 + $0x18] sm:$0xf]
  %v2281 = vld [vmem:[%s8 + $0x1c] sm:$0xf]
  %v2282 = vld [vmem:[%s11] sm:$0x1]
  %v2284 = vlaneseq
  %v2285 = vshrl.u32 %v2284, 7
  %v2286 = vsub.s32 0, %v2285
  %v2287 = vrot.slane %v2282, %v2286
  %v2305 = vunpack.c.l.b16 %v2258
  %v2306 = vunpack.c.l.b16 %v2259
  %v2307 = vunpack.c.l.b16 %v2260
  %v2308 = vunpack.c.l.b16 %v2261
  %v2309 = vunpack.c.l.b16 %v2262
  %v2310 = vunpack.c.l.b16 %v2263
  %v2311 = vunpack.c.l.b16 %v2264
  %v2312 = vunpack.c.l.b16 %v2265
  %v2313 = vunpack.c.l.b16 %v2266
  %v2314 = vunpack.c.l.b16 %v2267
  %v2315 = vunpack.c.l.b16 %v2268
  %v2316 = vunpack.c.l.b16 %v2269
  %v2317 = vunpack.c.l.b16 %v2270
  %v2318 = vunpack.c.l.b16 %v2271
  %v2319 = vunpack.c.l.b16 %v2272
  %v2320 = vunpack.c.l.b16 %v2273
  %v2321 = vrot.slane %v2305, 7
  %v2322 = vrot.slane %v2306, 6
  %v2323 = vsel %vm801, %v2322, %v2321
  %v2324 = vrot.slane %v2307, 5
  %v2325 = vsel %vm804, %v2324, %v2323
  %v2326 = vrot.slane %v2308, 4
  %v2327 = vsel %vm807, %v2326, %v2325
  %v2328 = vrot.slane %v2309, 3
  %v2329 = vsel %vm810, %v2328, %v2327
  %v2330 = vrot.slane %v2310, 2
  %v2331 = vsel %vm813, %v2330, %v2329
  %v2332 = vrot.slane %v2311, 1
  %v2333 = vsel %vm816, %v2332, %v2331
  %v2334 = vsel %vm818, %v2312, %v2333
  %v2335 = vrot.slane %v2313, 7
  %v2336 = vrot.slane %v2314, 6
  %v2337 = vsel %vm801, %v2336, %v2335
  %v2338 = vrot.slane %v2315, 5
  %v2339 = vsel %vm804, %v2338, %v2337
  %v2340 = vrot.slane %v2316, 4
  %v2341 = vsel %vm807, %v2340, %v2339
  %v2342 = vrot.slane %v2317, 3
  %v2343 = vsel %vm810, %v2342, %v2341
  %v2344 = vrot.slane %v2318, 2
  %v2345 = vsel %vm813, %v2344, %v2343
  %v2346 = vrot.slane %v2319, 1
  %v2347 = vsel %vm816, %v2346, %v2345
  %v2348 = vsel %vm818, %v2320, %v2347
  %v2349 = vpack.c.b16 %v2348, %v2334
  %v2358 = vunpack.c.l.b16 %v2274
  %v2359 = vunpack.c.l.b16 %v2275
  %v2360 = vunpack.c.l.b16 %v2276
  %v2361 = vunpack.c.l.b16 %v2277
  %v2362 = vunpack.c.l.b16 %v2278
  %v2363 = vunpack.c.l.b16 %v2279
  %v2364 = vunpack.c.l.b16 %v2280
  %v2365 = vunpack.c.l.b16 %v2281
  %v2366 = vpack.c.b16 %v2359, %v2358
  %v2367 = vpack.c.b16 %v2361, %v2360
  %v2368 = vpack.c.b16 %v2363, %v2362
  %v2369 = vpack.c.b16 %v2365, %v2364
  %v2375 = vsel %vm235, %v2349, 0
  %2377 = vmatprep.subr.bf16.mxu0 0
  %2378 = vmatpush1.bf16.msra.mxu0 0
  %2379 = vmatprep.subr.bf16.mxu0 0
  %2380 = vmatpush1.bf16.msra.mxu0 0
  %2381 = vmatprep.subr.bf16.mxu0 0
  %2382 = vmatpush1.bf16.msra.mxu0 0
  %2383 = vmatprep.subr.bf16.mxu0 0
  %2384 = vmatpush1.bf16.msra.mxu0 0
  %2385 = vmatprep.subr.bf16.mxu0 0
  %2386 = vmatpush1.bf16.msra.mxu0 %v2369
  %2387 = vmatprep.subr.bf16.mxu0 0
  %2388 = vmatpush1.bf16.msra.mxu0 %v2368
  %2389 = vmatprep.subr.bf16.mxu0 0
  %2390 = vmatpush1.bf16.msra.mxu0 %v2367
  %2391 = vmatprep.subr.bf16.mxu0 0
  %2392 = vmatpush1.bf16.msra.mxu0 %v2366
  %2393 = vmatprep.subr.bf16.mxu0 0
  %2394 = vmatpush2.bf16.msra.mxu0 0
  %2395 = vmatprep.subr.bf16.mxu0 0
  %2396 = vmatpush2.bf16.msra.mxu0 0
  %2397 = vmatprep.subr.bf16.mxu0 0
  %2398 = vmatpush2.bf16.msra.mxu0 0
  %2399 = vmatprep.subr.bf16.mxu0 0
  %2400 = vmatpush2.bf16.msra.mxu0 0
  %2401 = vmatprep.subr.bf16.mxu0 0
  %2402 = vmatpush2.bf16.msra.mxu0 0
  %2403 = vmatprep.subr.bf16.mxu0 0
  %2404 = vmatpush2.bf16.msra.mxu0 0
  %2405 = vmatprep.subr.bf16.mxu0 0
  %2406 = vmatpush2.bf16.msra.mxu0 0
  %2407 = vmatprep.subr.bf16.mxu0 0
  %2408 = vmatpush2.bf16.msra.mxu0 0
  %2409 = vmatprep.mubr.bf16.mxu0 0
  %2410 = vmatmul.mubr.bf16.gmra.mxu0 %v2375
  %v2411 = vpop.f32.mrf.mxu0
  %v2412 = vadd.f32 %v2287, %v2411
  %v2413 = vpop.f32.mrf.mxu0
  %v2414 = vpop.f32.mrf.mxu0
  %v2415 = vadd.f32 %v2287, %v2414
  %v2416 = vpop.f32.mrf.mxu0
  %2417 = vdwg.mxu0
  %2418 = vst [vmem:[%s14] sm:$0xff] %v2412
  %2419 = vst [vmem:[%s14 + $0x8] sm:$0xff] %v2415
  %s2420 = scalar_lea.vmem %s0, 128
  %v2421 = vld [vmem:[%s2420] sm:$0xff]
  %v2422 = vld [vmem:[%s2420 + $0x8] sm:$0xff]
  %v2423 = vld [vmem:[%s2420 + $0x10] sm:$0xff]
  %v2424 = vld [vmem:[%s2420 + $0x18] sm:$0xff]
  %v2425 = vld [vmem:[%s2420 + $0x20] sm:$0xff]
  %v2426 = vld [vmem:[%s2420 + $0x28] sm:$0xff]
  %v2427 = vld [vmem:[%s2420 + $0x30] sm:$0xff]
  %v2428 = vld [vmem:[%s2420 + $0x38] sm:$0xff]
  %v2429 = vld [vmem:[%s2420 + $0x40] sm:$0xff]
  %v2430 = vld [vmem:[%s2420 + $0x48] sm:$0xff]
  %v2431 = vld [vmem:[%s2420 + $0x50] sm:$0xff]
  %v2432 = vld [vmem:[%s2420 + $0x58] sm:$0xff]
  %v2433 = vld [vmem:[%s2420 + $0x60] sm:$0xff]
  %v2434 = vld [vmem:[%s2420 + $0x68] sm:$0xff]
  %v2435 = vld [vmem:[%s2420 + $0x70] sm:$0xff]
  %v2436 = vld [vmem:[%s2420 + $0x78] sm:$0xff]
  %v2437 = vpack.c.bf16 %v2422, %v2421
  %v2438 = vpack.c.bf16 %v2424, %v2423
  %v2439 = vpack.c.bf16 %v2426, %v2425
  %v2440 = vpack.c.bf16 %v2428, %v2427
  %v2441 = vpack.c.bf16 %v2430, %v2429
  %v2442 = vpack.c.bf16 %v2432, %v2431
  %v2443 = vpack.c.bf16 %v2434, %v2433
  %v2444 = vpack.c.bf16 %v2436, %v2435
  %v2445 = vld [vmem:[%s1] sm:$0xf]
  %v2446 = vld [vmem:[%s1 + $0x4] sm:$0xf]
  %v2447 = vld [vmem:[%s1 + $0x8] sm:$0xf]
  %v2448 = vld [vmem:[%s1 + $0xc] sm:$0x3]
  %v2453 = vunpack.c.l.b16 %v2445
  %v2454 = vunpack.c.l.b16 %v2446
  %v2455 = vunpack.c.l.b16 %v2447
  %v2456 = vunpack.c.l.b16 %v2448
  %v2457 = vpack.c.b16 %v2454, %v2453
  %v2458 = vpack.c.b16 %v2456, %v2455
  %v2461 = vsel %vm109, %v2437, 0
  %v2464 = vsel %vm109, %v2438, 0
  %v2467 = vsel %vm109, %v2439, 0
  %v2470 = vsel %vm109, %v2440, 0
  %v2473 = vsel %vm109, %v2441, 0
  %v2476 = vsel %vm109, %v2442, 0
  %v2479 = vsel %vm109, %v2443, 0
  %v2482 = vsel %vm109, %v2444, 0
  %v2485 = vsel %vm134, %v2458, 0
  %2487 = vmatprep.subr.bf16.mxu0 0
  %2488 = vmatpush1.bf16.msra.mxu0 0
  %2489 = vmatprep.subr.bf16.mxu0 0
  %2490 = vmatpush1.bf16.msra.mxu0 0
  %2491 = vmatprep.subr.bf16.mxu0 0
  %2492 = vmatpush1.bf16.msra.mxu0 0
  %2493 = vmatprep.subr.bf16.mxu0 0
  %2494 = vmatpush1.bf16.msra.mxu0 0
  %2495 = vmatprep.subr.bf16.mxu0 0
  %2496 = vmatpush1.bf16.msra.mxu0 0
  %2497 = vmatprep.subr.bf16.mxu0 0
  %2498 = vmatpush1.bf16.msra.mxu0 0
  %2499 = vmatprep.subr.bf16.mxu0 0
  %2500 = vmatpush1.bf16.msra.mxu0 %v2485
  %2501 = vmatprep.subr.bf16.mxu0 0
  %2502 = vmatpush1.bf16.msra.mxu0 %v2457
  %2503 = vmatprep.subr.bf16.mxu0 0
  %2504 = vmatpush2.bf16.msra.mxu0 0
  %2505 = vmatprep.subr.bf16.mxu0 0
  %2506 = vmatpush2.bf16.msra.mxu0 0
  %2507 = vmatprep.subr.bf16.mxu0 0
  %2508 = vmatpush2.bf16.msra.mxu0 0
  %2509 = vmatprep.subr.bf16.mxu0 0
  %2510 = vmatpush2.bf16.msra.mxu0 0
  %2511 = vmatprep.subr.bf16.mxu0 0
  %2512 = vmatpush2.bf16.msra.mxu0 0
  %2513 = vmatprep.subr.bf16.mxu0 0
  %2514 = vmatpush2.bf16.msra.mxu0 0
  %2515 = vmatprep.subr.bf16.mxu0 0
  %2516 = vmatpush2.bf16.msra.mxu0 0
  %2517 = vmatprep.subr.bf16.mxu0 0
  %2518 = vmatpush2.bf16.msra.mxu0 0
  %2519 = vmatprep.mubr.bf16.mxu0 0
  %2520 = vmatmul.mubr.bf16.gmra.mxu0 %v2461
  %v2521 = vpop.f32.mrf.mxu0
  %v2522 = vadd.f32 %v97, %v2521
  %v2523 = vpop.f32.mrf.mxu0
  %v2524 = vpop.f32.mrf.mxu0
  %v2525 = vadd.f32 %v97, %v2524
  %v2526 = vpop.f32.mrf.mxu0
  %2527 = vmatprep.mubr.bf16.mxu0 0
  %2528 = vmatmul.mubr.bf16.gmra.mxu0 %v2464
  %v2529 = vpop.f32.mrf.mxu0
  %v2530 = vadd.f32 %v97, %v2529
  %v2531 = vpop.f32.mrf.mxu0
  %v2532 = vpop.f32.mrf.mxu0
  %v2533 = vadd.f32 %v97, %v2532
  %v2534 = vpop.f32.mrf.mxu0
  %2535 = vmatprep.mubr.bf16.mxu0 0
  %2536 = vmatmul.mubr.bf16.gmra.mxu0 %v2467
  %v2537 = vpop.f32.mrf.mxu0
  %v2538 = vadd.f32 %v97, %v2537
  %v2539 = vpop.f32.mrf.mxu0
  %v2540 = vpop.f32.mrf.mxu0
  %v2541 = vadd.f32 %v97, %v2540
  %v2542 = vpop.f32.mrf.mxu0
  %2543 = vmatprep.mubr.bf16.mxu0 0
  %2544 = vmatmul.mubr.bf16.gmra.mxu0 %v2470
  %v2545 = vpop.f32.mrf.mxu0
  %v2546 = vadd.f32 %v97, %v2545
  %v2547 = vpop.f32.mrf.mxu0
  %v2548 = vpop.f32.mrf.mxu0
  %v2549 = vadd.f32 %v97, %v2548
  %v2550 = vpop.f32.mrf.mxu0
  %2551 = vmatprep.mubr.bf16.mxu0 0
  %2552 = vmatmul.mubr.bf16.gmra.mxu0 %v2473
  %v2553 = vpop.f32.mrf.mxu0
  %v2554 = vadd.f32 %v97, %v2553
  %v2555 = vpop.f32.mrf.mxu0
  %v2556 = vpop.f32.mrf.mxu0
  %v2557 = vadd.f32 %v97, %v2556
  %v2558 = vpop.f32.mrf.mxu0
  %2559 = vmatprep.mubr.bf16.mxu0 0
  %2560 = vmatmul.mubr.bf16.gmra.mxu0 %v2476
  %v2561 = vpop.f32.mrf.mxu0
  %v2562 = vadd.f32 %v97, %v2561
  %v2563 = vpop.f32.mrf.mxu0
  %v2564 = vpop.f32.mrf.mxu0
  %v2565 = vadd.f32 %v97, %v2564
  %v2566 = vpop.f32.mrf.mxu0
  %2567 = vmatprep.mubr.bf16.mxu0 0
  %2568 = vmatmul.mubr.bf16.gmra.mxu0 %v2479
  %v2569 = vpop.f32.mrf.mxu0
  %v2570 = vadd.f32 %v97, %v2569
  %v2571 = vpop.f32.mrf.mxu0
  %v2572 = vpop.f32.mrf.mxu0
  %v2573 = vadd.f32 %v97, %v2572
  %v2574 = vpop.f32.mrf.mxu0
  %2575 = vmatprep.mubr.bf16.mxu0 0
  %2576 = vmatmul.mubr.bf16.gmra.mxu0 %v2482
  %v2577 = vpop.f32.mrf.mxu0
  %v2578 = vadd.f32 %v97, %v2577
  %v2579 = vpop.f32.mrf.mxu0
  %v2580 = vpop.f32.mrf.mxu0
  %v2581 = vadd.f32 %v97, %v2580
  %v2582 = vpop.f32.mrf.mxu0
  %2583 = vdwg.mxu0
  %v2584 = vsel %vm235, %v2522, 0.0
  %2585 = vadd.xlane.f32.xlu0 %v2584
  %v2586 = vpop.xlane.xlu0 %2585
  %v2587 = vsel %vm235, %v2525, 0.0
  %2588 = vadd.xlane.f32.xlu0 %v2587
  %v2589 = vpop.xlane.xlu0 %2588
  %v2590 = vsel %vm235, %v2530, 0.0
  %2591 = vadd.xlane.f32.xlu0 %v2590
  %v2592 = vpop.xlane.xlu0 %2591
  %v2593 = vsel %vm235, %v2533, 0.0
  %2594 = vadd.xlane.f32.xlu0 %v2593
  %v2595 = vpop.xlane.xlu0 %2594
  %v2596 = vsel %vm235, %v2538, 0.0
  %2597 = vadd.xlane.f32.xlu0 %v2596
  %v2598 = vpop.xlane.xlu0 %2597
  %v2599 = vsel %vm235, %v2541, 0.0
  %2600 = vadd.xlane.f32.xlu0 %v2599
  %v2601 = vpop.xlane.xlu0 %2600
  %v2602 = vsel %vm235, %v2546, 0.0
  %2603 = vadd.xlane.f32.xlu0 %v2602
  %v2604 = vpop.xlane.xlu0 %2603
  %v2605 = vsel %vm235, %v2549, 0.0
  %2606 = vadd.xlane.f32.xlu0 %v2605
  %v2607 = vpop.xlane.xlu0 %2606
  %v2608 = vsel %vm235, %v2554, 0.0
  %2609 = vadd.xlane.f32.xlu0 %v2608
  %v2610 = vpop.xlane.xlu0 %2609
  %v2611 = vsel %vm235, %v2557, 0.0
  %2612 = vadd.xlane.f32.xlu0 %v2611
  %v2613 = vpop.xlane.xlu0 %2612
  %v2614 = vsel %vm235, %v2562, 0.0
  %2615 = vadd.xlane.f32.xlu0 %v2614
  %v2616 = vpop.xlane.xlu0 %2615
  %v2617 = vsel %vm235, %v2565, 0.0
  %2618 = vadd.xlane.f32.xlu0 %v2617
  %v2619 = vpop.xlane.xlu0 %2618
  %v2620 = vsel %vm235, %v2570, 0.0
  %2621 = vadd.xlane.f32.xlu0 %v2620
  %v2622 = vpop.xlane.xlu0 %2621
  %v2623 = vsel %vm235, %v2573, 0.0
  %2624 = vadd.xlane.f32.xlu0 %v2623
  %v2625 = vpop.xlane.xlu0 %2624
  %v2626 = vsel %vm235, %v2578, 0.0
  %2627 = vadd.xlane.f32.xlu0 %v2626
  %v2628 = vpop.xlane.xlu0 %2627
  %v2629 = vsel %vm235, %v2581, 0.0
  %2630 = vadd.xlane.f32.xlu0 %v2629
  %v2631 = vpop.xlane.xlu0 %2630
  %v2632 = vmul.f32 %v2586, %v284
  %v2633 = vmul.f32 %v2589, %v284
  %v2634 = vmul.f32 %v2592, %v284
  %v2635 = vmul.f32 %v2595, %v284
  %v2636 = vmul.f32 %v2598, %v284
  %v2637 = vmul.f32 %v2601, %v284
  %v2638 = vmul.f32 %v2604, %v284
  %v2639 = vmul.f32 %v2607, %v284
  %v2640 = vmul.f32 %v2610, %v284
  %v2641 = vmul.f32 %v2613, %v284
  %v2642 = vmul.f32 %v2616, %v284
  %v2643 = vmul.f32 %v2619, %v284
  %v2644 = vmul.f32 %v2622, %v284
  %v2645 = vmul.f32 %v2625, %v284
  %v2646 = vmul.f32 %v2628, %v284
  %v2647 = vmul.f32 %v2631, %v284
  %v2648 = vsub.f32 %v2522, %v2632
  %v2649 = vsub.f32 %v2525, %v2633
  %v2650 = vsub.f32 %v2530, %v2634
  %v2651 = vsub.f32 %v2533, %v2635
  %v2652 = vsub.f32 %v2538, %v2636
  %v2653 = vsub.f32 %v2541, %v2637
  %v2654 = vsub.f32 %v2546, %v2638
  %v2655 = vsub.f32 %v2549, %v2639
  %v2656 = vsub.f32 %v2554, %v2640
  %v2657 = vsub.f32 %v2557, %v2641
  %v2658 = vsub.f32 %v2562, %v2642
  %v2659 = vsub.f32 %v2565, %v2643
  %v2660 = vsub.f32 %v2570, %v2644
  %v2661 = vsub.f32 %v2573, %v2645
  %v2662 = vsub.f32 %v2578, %v2646
  %v2663 = vsub.f32 %v2581, %v2647
  %v2664 = vmul.f32 %v2648, %v2648
  %v2665 = vmul.f32 %v2649, %v2649
  %v2666 = vmul.f32 %v2650, %v2650
  %v2667 = vmul.f32 %v2651, %v2651
  %v2668 = vmul.f32 %v2652, %v2652
  %v2669 = vmul.f32 %v2653, %v2653
  %v2670 = vmul.f32 %v2654, %v2654
  %v2671 = vmul.f32 %v2655, %v2655
  %v2672 = vmul.f32 %v2656, %v2656
  %v2673 = vmul.f32 %v2657, %v2657
  %v2674 = vmul.f32 %v2658, %v2658
  %v2675 = vmul.f32 %v2659, %v2659
  %v2676 = vmul.f32 %v2660, %v2660
  %v2677 = vmul.f32 %v2661, %v2661
  %v2678 = vmul.f32 %v2662, %v2662
  %v2679 = vmul.f32 %v2663, %v2663
  %v2680 = vsel %vm235, %v2664, 0.0
  %2681 = vadd.xlane.f32.xlu0 %v2680
  %v2682 = vpop.xlane.xlu0 %2681
  %v2683 = vsel %vm235, %v2665, 0.0
  %2684 = vadd.xlane.f32.xlu0 %v2683
  %v2685 = vpop.xlane.xlu0 %2684
  %v2686 = vsel %vm235, %v2666, 0.0
  %2687 = vadd.xlane.f32.xlu0 %v2686
  %v2688 = vpop.xlane.xlu0 %2687
  %v2689 = vsel %vm235, %v2667, 0.0
  %2690 = vadd.xlane.f32.xlu0 %v2689
  %v2691 = vpop.xlane.xlu0 %2690
  %v2692 = vsel %vm235, %v2668, 0.0
  %2693 = vadd.xlane.f32.xlu0 %v2692
  %v2694 = vpop.xlane.xlu0 %2693
  %v2695 = vsel %vm235, %v2669, 0.0
  %2696 = vadd.xlane.f32.xlu0 %v2695
  %v2697 = vpop.xlane.xlu0 %2696
  %v2698 = vsel %vm235, %v2670, 0.0
  %2699 = vadd.xlane.f32.xlu0 %v2698
  %v2700 = vpop.xlane.xlu0 %2699
  %v2701 = vsel %vm235, %v2671, 0.0
  %2702 = vadd.xlane.f32.xlu0 %v2701
  %v2703 = vpop.xlane.xlu0 %2702
  %v2704 = vsel %vm235, %v2672, 0.0
  %2705 = vadd.xlane.f32.xlu0 %v2704
  %v2706 = vpop.xlane.xlu0 %2705
  %v2707 = vsel %vm235, %v2673, 0.0
  %2708 = vadd.xlane.f32.xlu0 %v2707
  %v2709 = vpop.xlane.xlu0 %2708
  %v2710 = vsel %vm235, %v2674, 0.0
  %2711 = vadd.xlane.f32.xlu0 %v2710
  %v2712 = vpop.xlane.xlu0 %2711
  %v2713 = vsel %vm235, %v2675, 0.0
  %2714 = vadd.xlane.f32.xlu0 %v2713
  %v2715 = vpop.xlane.xlu0 %2714
  %v2716 = vsel %vm235, %v2676, 0.0
  %2717 = vadd.xlane.f32.xlu0 %v2716
  %v2718 = vpop.xlane.xlu0 %2717
  %v2719 = vsel %vm235, %v2677, 0.0
  %2720 = vadd.xlane.f32.xlu0 %v2719
  %v2721 = vpop.xlane.xlu0 %2720
  %v2722 = vsel %vm235, %v2678, 0.0
  %2723 = vadd.xlane.f32.xlu0 %v2722
  %v2724 = vpop.xlane.xlu0 %2723
  %v2725 = vsel %vm235, %v2679, 0.0
  %2726 = vadd.xlane.f32.xlu0 %v2725
  %v2727 = vpop.xlane.xlu0 %2726
  %v2728 = vmul.f32 %v2682, %v284
  %v2729 = vmul.f32 %v2685, %v284
  %v2730 = vmul.f32 %v2688, %v284
  %v2731 = vmul.f32 %v2691, %v284
  %v2732 = vmul.f32 %v2694, %v284
  %v2733 = vmul.f32 %v2697, %v284
  %v2734 = vmul.f32 %v2700, %v284
  %v2735 = vmul.f32 %v2703, %v284
  %v2736 = vmul.f32 %v2706, %v284
  %v2737 = vmul.f32 %v2709, %v284
  %v2738 = vmul.f32 %v2712, %v284
  %v2739 = vmul.f32 %v2715, %v284
  %v2740 = vmul.f32 %v2718, %v284
  %v2741 = vmul.f32 %v2721, %v284
  %v2742 = vmul.f32 %v2724, %v284
  %v2743 = vmul.f32 %v2727, %v284
  %v2744 = vadd.f32 %v2728, 1e-05
  %v2745 = vadd.f32 %v2729, 1e-05
  %v2746 = vadd.f32 %v2730, 1e-05
  %v2747 = vadd.f32 %v2731, 1e-05
  %v2748 = vadd.f32 %v2732, 1e-05
  %v2749 = vadd.f32 %v2733, 1e-05
  %v2750 = vadd.f32 %v2734, 1e-05
  %v2751 = vadd.f32 %v2735, 1e-05
  %v2752 = vadd.f32 %v2736, 1e-05
  %v2753 = vadd.f32 %v2737, 1e-05
  %v2754 = vadd.f32 %v2738, 1e-05
  %v2755 = vadd.f32 %v2739, 1e-05
  %v2756 = vadd.f32 %v2740, 1e-05
  %v2757 = vadd.f32 %v2741, 1e-05
  %v2758 = vadd.f32 %v2742, 1e-05
  %v2759 = vadd.f32 %v2743, 1e-05
  %v2760 = vrsqrt.pop %v2744
  %v2761 = vrsqrt.pop %v2745
  %v2762 = vrsqrt.pop %v2746
  %v2763 = vrsqrt.pop %v2747
  %v2764 = vrsqrt.pop %v2748
  %v2765 = vrsqrt.pop %v2749
  %v2766 = vrsqrt.pop %v2750
  %v2767 = vrsqrt.pop %v2751
  %v2768 = vrsqrt.pop %v2752
  %v2769 = vrsqrt.pop %v2753
  %v2770 = vrsqrt.pop %v2754
  %v2771 = vrsqrt.pop %v2755
  %v2772 = vrsqrt.pop %v2756
  %v2773 = vrsqrt.pop %v2757
  %v2774 = vrsqrt.pop %v2758
  %v2775 = vrsqrt.pop %v2759
  %v2776 = vmul.f32 %v2648, %v2760
  %v2777 = vmul.f32 %v2649, %v2761
  %v2778 = vmul.f32 %v2650, %v2762
  %v2779 = vmul.f32 %v2651, %v2763
  %v2780 = vmul.f32 %v2652, %v2764
  %v2781 = vmul.f32 %v2653, %v2765
  %v2782 = vmul.f32 %v2654, %v2766
  %v2783 = vmul.f32 %v2655, %v2767
  %v2784 = vmul.f32 %v2656, %v2768
  %v2785 = vmul.f32 %v2657, %v2769
  %v2786 = vmul.f32 %v2658, %v2770
  %v2787 = vmul.f32 %v2659, %v2771
  %v2788 = vmul.f32 %v2660, %v2772
  %v2789 = vmul.f32 %v2661, %v2773
  %v2790 = vmul.f32 %v2662, %v2774
  %v2791 = vmul.f32 %v2663, %v2775
  %v2792 = vmul.f32 %v2776, %v448
  %v2793 = vmul.f32 %v2777, %v448
  %v2794 = vmul.f32 %v2778, %v448
  %v2795 = vmul.f32 %v2779, %v448
  %v2796 = vmul.f32 %v2780, %v448
  %v2797 = vmul.f32 %v2781, %v448
  %v2798 = vmul.f32 %v2782, %v448
  %v2799 = vmul.f32 %v2783, %v448
  %v2800 = vmul.f32 %v2784, %v448
  %v2801 = vmul.f32 %v2785, %v448
  %v2802 = vmul.f32 %v2786, %v448
  %v2803 = vmul.f32 %v2787, %v448
  %v2804 = vmul.f32 %v2788, %v448
  %v2805 = vmul.f32 %v2789, %v448
  %v2806 = vmul.f32 %v2790, %v448
  %v2807 = vmul.f32 %v2791, %v448
  %v2808 = vadd.f32 %v2792, %v468
  %v2809 = vadd.f32 %v2793, %v468
  %v2810 = vadd.f32 %v2794, %v468
  %v2811 = vadd.f32 %v2795, %v468
  %v2812 = vadd.f32 %v2796, %v468
  %v2813 = vadd.f32 %v2797, %v468
  %v2814 = vadd.f32 %v2798, %v468
  %v2815 = vadd.f32 %v2799, %v468
  %v2816 = vadd.f32 %v2800, %v468
  %v2817 = vadd.f32 %v2801, %v468
  %v2818 = vadd.f32 %v2802, %v468
  %v2819 = vadd.f32 %v2803, %v468
  %v2820 = vadd.f32 %v2804, %v468
  %v2821 = vadd.f32 %v2805, %v468
  %v2822 = vadd.f32 %v2806, %v468
  %v2823 = vadd.f32 %v2807, %v468
  %v2824 = vpack.c.bf16 %v2809, %v2808
  %v2825 = vpack.c.bf16 %v2811, %v2810
  %v2826 = vpack.c.bf16 %v2813, %v2812
  %v2827 = vpack.c.bf16 %v2815, %v2814
  %v2828 = vpack.c.bf16 %v2817, %v2816
  %v2829 = vpack.c.bf16 %v2819, %v2818
  %v2830 = vpack.c.bf16 %v2821, %v2820
  %v2831 = vpack.c.bf16 %v2823, %v2822
  %v2832 = vld [vmem:[%s3] sm:$0xf]
  %v2833 = vld [vmem:[%s3 + $0x4] sm:$0xf]
  %v2834 = vld [vmem:[%s3 + $0x8] sm:$0xf]
  %v2835 = vld [vmem:[%s3 + $0xc] sm:$0xf]
  %v2836 = vld [vmem:[%s3 + $0x10] sm:$0xf]
  %v2837 = vld [vmem:[%s3 + $0x14] sm:$0xf]
  %v2838 = vld [vmem:[%s3 + $0x18] sm:$0xf]
  %v2839 = vld [vmem:[%s3 + $0x1c] sm:$0xf]
  %v2848 = vunpack.c.l.b16 %v2832
  %v2849 = vunpack.c.l.b16 %v2833
  %v2850 = vunpack.c.l.b16 %v2834
  %v2851 = vunpack.c.l.b16 %v2835
  %v2852 = vunpack.c.l.b16 %v2836
  %v2853 = vunpack.c.l.b16 %v2837
  %v2854 = vunpack.c.l.b16 %v2838
  %v2855 = vunpack.c.l.b16 %v2839
  %v2856 = vpack.c.b16 %v2849, %v2848
  %v2857 = vpack.c.b16 %v2851, %v2850
  %v2858 = vpack.c.b16 %v2853, %v2852
  %v2859 = vpack.c.b16 %v2855, %v2854
  %v2865 = vsel %vm235, %v2824, 0
  %v2868 = vsel %vm235, %v2825, 0
  %v2871 = vsel %vm235, %v2826, 0
  %v2874 = vsel %vm235, %v2827, 0
  %v2877 = vsel %vm235, %v2828, 0
  %v2880 = vsel %vm235, %v2829, 0
  %v2883 = vsel %vm235, %v2830, 0
  %v2886 = vsel %vm235, %v2831, 0
  %2888 = vmatprep.subr.bf16.mxu0 0
  %2889 = vmatpush1.bf16.msra.mxu0 0
  %2890 = vmatprep.subr.bf16.mxu0 0
  %2891 = vmatpush1.bf16.msra.mxu0 0
  %2892 = vmatprep.subr.bf16.mxu0 0
  %2893 = vmatpush1.bf16.msra.mxu0 0
  %2894 = vmatprep.subr.bf16.mxu0 0
  %2895 = vmatpush1.bf16.msra.mxu0 0
  %2896 = vmatprep.subr.bf16.mxu0 0
  %2897 = vmatpush1.bf16.msra.mxu0 %v2859
  %2898 = vmatprep.subr.bf16.mxu0 0
  %2899 = vmatpush1.bf16.msra.mxu0 %v2858
  %2900 = vmatprep.subr.bf16.mxu0 0
  %2901 = vmatpush1.bf16.msra.mxu0 %v2857
  %2902 = vmatprep.subr.bf16.mxu0 0
  %2903 = vmatpush1.bf16.msra.mxu0 %v2856
  %2904 = vmatprep.subr.bf16.mxu0 0
  %2905 = vmatpush2.bf16.msra.mxu0 0
  %2906 = vmatprep.subr.bf16.mxu0 0
  %2907 = vmatpush2.bf16.msra.mxu0 0
  %2908 = vmatprep.subr.bf16.mxu0 0
  %2909 = vmatpush2.bf16.msra.mxu0 0
  %2910 = vmatprep.subr.bf16.mxu0 0
  %2911 = vmatpush2.bf16.msra.mxu0 0
  %2912 = vmatprep.subr.bf16.mxu0 0
  %2913 = vmatpush2.bf16.msra.mxu0 0
  %2914 = vmatprep.subr.bf16.mxu0 0
  %2915 = vmatpush2.bf16.msra.mxu0 0
  %2916 = vmatprep.subr.bf16.mxu0 0
  %2917 = vmatpush2.bf16.msra.mxu0 0
  %2918 = vmatprep.subr.bf16.mxu0 0
  %2919 = vmatpush2.bf16.msra.mxu0 0
  %2920 = vmatprep.mubr.bf16.mxu0 0
  %2921 = vmatmul.mubr.bf16.gmra.mxu0 %v2865
  %v2922 = vpop.f32.mrf.mxu0
  %v2923 = vadd.f32 %v504, %v2922
  %v2924 = vpop.f32.mrf.mxu0
  %v2925 = vpop.f32.mrf.mxu0
  %v2926 = vadd.f32 %v504, %v2925
  %v2927 = vpop.f32.mrf.mxu0
  %2928 = vmatprep.mubr.bf16.mxu0 0
  %2929 = vmatmul.mubr.bf16.gmra.mxu0 %v2868
  %v2930 = vpop.f32.mrf.mxu0
  %v2931 = vadd.f32 %v504, %v2930
  %v2932 = vpop.f32.mrf.mxu0
  %v2933 = vpop.f32.mrf.mxu0
  %v2934 = vadd.f32 %v504, %v2933
  %v2935 = vpop.f32.mrf.mxu0
  %2936 = vmatprep.mubr.bf16.mxu0 0
  %2937 = vmatmul.mubr.bf16.gmra.mxu0 %v2871
  %v2938 = vpop.f32.mrf.mxu0
  %v2939 = vadd.f32 %v504, %v2938
  %v2940 = vpop.f32.mrf.mxu0
  %v2941 = vpop.f32.mrf.mxu0
  %v2942 = vadd.f32 %v504, %v2941
  %v2943 = vpop.f32.mrf.mxu0
  %2944 = vmatprep.mubr.bf16.mxu0 0
  %2945 = vmatmul.mubr.bf16.gmra.mxu0 %v2874
  %v2946 = vpop.f32.mrf.mxu0
  %v2947 = vadd.f32 %v504, %v2946
  %v2948 = vpop.f32.mrf.mxu0
  %v2949 = vpop.f32.mrf.mxu0
  %v2950 = vadd.f32 %v504, %v2949
  %v2951 = vpop.f32.mrf.mxu0
  %2952 = vmatprep.mubr.bf16.mxu0 0
  %2953 = vmatmul.mubr.bf16.gmra.mxu0 %v2877
  %v2954 = vpop.f32.mrf.mxu0
  %v2955 = vadd.f32 %v504, %v2954
  %v2956 = vpop.f32.mrf.mxu0
  %v2957 = vpop.f32.mrf.mxu0
  %v2958 = vadd.f32 %v504, %v2957
  %v2959 = vpop.f32.mrf.mxu0
  %2960 = vmatprep.mubr.bf16.mxu0 0
  %2961 = vmatmul.mubr.bf16.gmra.mxu0 %v2880
  %v2962 = vpop.f32.mrf.mxu0
  %v2963 = vadd.f32 %v504, %v2962
  %v2964 = vpop.f32.mrf.mxu0
  %v2965 = vpop.f32.mrf.mxu0
  %v2966 = vadd.f32 %v504, %v2965
  %v2967 = vpop.f32.mrf.mxu0
  %2968 = vmatprep.mubr.bf16.mxu0 0
  %2969 = vmatmul.mubr.bf16.gmra.mxu0 %v2883
  %v2970 = vpop.f32.mrf.mxu0
  %v2971 = vadd.f32 %v504, %v2970
  %v2972 = vpop.f32.mrf.mxu0
  %v2973 = vpop.f32.mrf.mxu0
  %v2974 = vadd.f32 %v504, %v2973
  %v2975 = vpop.f32.mrf.mxu0
  %2976 = vmatprep.mubr.bf16.mxu0 0
  %2977 = vmatmul.mubr.bf16.gmra.mxu0 %v2886
  %v2978 = vpop.f32.mrf.mxu0
  %v2979 = vadd.f32 %v504, %v2978
  %v2980 = vpop.f32.mrf.mxu0
  %v2981 = vpop.f32.mrf.mxu0
  %v2982 = vadd.f32 %v504, %v2981
  %v2983 = vpop.f32.mrf.mxu0
  %2984 = vdwg.mxu0
  %v2985 = vld [vmem:[%s4] sm:$0xf]
  %v2986 = vld [vmem:[%s4 + $0x4] sm:$0xf]
  %v2987 = vld [vmem:[%s4 + $0x8] sm:$0xf]
  %v2988 = vld [vmem:[%s4 + $0xc] sm:$0xf]
  %v2989 = vld [vmem:[%s4 + $0x10] sm:$0xf]
  %v2990 = vld [vmem:[%s4 + $0x14] sm:$0xf]
  %v2991 = vld [vmem:[%s4 + $0x18] sm:$0xf]
  %v2992 = vld [vmem:[%s4 + $0x1c] sm:$0xf]
  %v3001 = vunpack.c.l.b16 %v2985
  %v3002 = vunpack.c.l.b16 %v2986
  %v3003 = vunpack.c.l.b16 %v2987
  %v3004 = vunpack.c.l.b16 %v2988
  %v3005 = vunpack.c.l.b16 %v2989
  %v3006 = vunpack.c.l.b16 %v2990
  %v3007 = vunpack.c.l.b16 %v2991
  %v3008 = vunpack.c.l.b16 %v2992
  %v3009 = vpack.c.b16 %v3002, %v3001
  %v3010 = vpack.c.b16 %v3004, %v3003
  %v3011 = vpack.c.b16 %v3006, %v3005
  %v3012 = vpack.c.b16 %v3008, %v3007
  %3017 = vmatprep.subr.bf16.mxu0 0
  %3018 = vmatpush1.bf16.msra.mxu0 0
  %3019 = vmatprep.subr.bf16.mxu0 0
  %3020 = vmatpush1.bf16.msra.mxu0 0
  %3021 = vmatprep.subr.bf16.mxu0 0
  %3022 = vmatpush1.bf16.msra.mxu0 0
  %3023 = vmatprep.subr.bf16.mxu0 0
  %3024 = vmatpush1.bf16.msra.mxu0 0
  %3025 = vmatprep.subr.bf16.mxu0 0
  %3026 = vmatpush1.bf16.msra.mxu0 %v3012
  %3027 = vmatprep.subr.bf16.mxu0 0
  %3028 = vmatpush1.bf16.msra.mxu0 %v3011
  %3029 = vmatprep.subr.bf16.mxu0 0
  %3030 = vmatpush1.bf16.msra.mxu0 %v3010
  %3031 = vmatprep.subr.bf16.mxu0 0
  %3032 = vmatpush1.bf16.msra.mxu0 %v3009
  %3033 = vmatprep.subr.bf16.mxu0 0
  %3034 = vmatpush2.bf16.msra.mxu0 0
  %3035 = vmatprep.subr.bf16.mxu0 0
  %3036 = vmatpush2.bf16.msra.mxu0 0
  %3037 = vmatprep.subr.bf16.mxu0 0
  %3038 = vmatpush2.bf16.msra.mxu0 0
  %3039 = vmatprep.subr.bf16.mxu0 0
  %3040 = vmatpush2.bf16.msra.mxu0 0
  %3041 = vmatprep.subr.bf16.mxu0 0
  %3042 = vmatpush2.bf16.msra.mxu0 0
  %3043 = vmatprep.subr.bf16.mxu0 0
  %3044 = vmatpush2.bf16.msra.mxu0 0
  %3045 = vmatprep.subr.bf16.mxu0 0
  %3046 = vmatpush2.bf16.msra.mxu0 0
  %3047 = vmatprep.subr.bf16.mxu0 0
  %3048 = vmatpush2.bf16.msra.mxu0 0
  %3049 = vmatprep.mubr.bf16.mxu0 0
  %3050 = vmatmul.mubr.bf16.gmra.mxu0 %v2865
  %v3051 = vpop.f32.mrf.mxu0
  %v3052 = vadd.f32 %v661, %v3051
  %v3053 = vpop.f32.mrf.mxu0
  %v3054 = vpop.f32.mrf.mxu0
  %v3055 = vadd.f32 %v661, %v3054
  %v3056 = vpop.f32.mrf.mxu0
  %3057 = vmatprep.mubr.bf16.mxu0 0
  %3058 = vmatmul.mubr.bf16.gmra.mxu0 %v2868
  %v3059 = vpop.f32.mrf.mxu0
  %v3060 = vadd.f32 %v661, %v3059
  %v3061 = vpop.f32.mrf.mxu0
  %v3062 = vpop.f32.mrf.mxu0
  %v3063 = vadd.f32 %v661, %v3062
  %v3064 = vpop.f32.mrf.mxu0
  %3065 = vmatprep.mubr.bf16.mxu0 0
  %3066 = vmatmul.mubr.bf16.gmra.mxu0 %v2871
  %v3067 = vpop.f32.mrf.mxu0
  %v3068 = vadd.f32 %v661, %v3067
  %v3069 = vpop.f32.mrf.mxu0
  %v3070 = vpop.f32.mrf.mxu0
  %v3071 = vadd.f32 %v661, %v3070
  %v3072 = vpop.f32.mrf.mxu0
  %3073 = vmatprep.mubr.bf16.mxu0 0
  %3074 = vmatmul.mubr.bf16.gmra.mxu0 %v2874
  %v3075 = vpop.f32.mrf.mxu0
  %v3076 = vadd.f32 %v661, %v3075
  %v3077 = vpop.f32.mrf.mxu0
  %v3078 = vpop.f32.mrf.mxu0
  %v3079 = vadd.f32 %v661, %v3078
  %v3080 = vpop.f32.mrf.mxu0
  %3081 = vmatprep.mubr.bf16.mxu0 0
  %3082 = vmatmul.mubr.bf16.gmra.mxu0 %v2877
  %v3083 = vpop.f32.mrf.mxu0
  %v3084 = vadd.f32 %v661, %v3083
  %v3085 = vpop.f32.mrf.mxu0
  %v3086 = vpop.f32.mrf.mxu0
  %v3087 = vadd.f32 %v661, %v3086
  %v3088 = vpop.f32.mrf.mxu0
  %3089 = vmatprep.mubr.bf16.mxu0 0
  %3090 = vmatmul.mubr.bf16.gmra.mxu0 %v2880
  %v3091 = vpop.f32.mrf.mxu0
  %v3092 = vadd.f32 %v661, %v3091
  %v3093 = vpop.f32.mrf.mxu0
  %v3094 = vpop.f32.mrf.mxu0
  %v3095 = vadd.f32 %v661, %v3094
  %v3096 = vpop.f32.mrf.mxu0
  %3097 = vmatprep.mubr.bf16.mxu0 0
  %3098 = vmatmul.mubr.bf16.gmra.mxu0 %v2883
  %v3099 = vpop.f32.mrf.mxu0
  %v3100 = vadd.f32 %v661, %v3099
  %v3101 = vpop.f32.mrf.mxu0
  %v3102 = vpop.f32.mrf.mxu0
  %v3103 = vadd.f32 %v661, %v3102
  %v3104 = vpop.f32.mrf.mxu0
  %3105 = vmatprep.mubr.bf16.mxu0 0
  %3106 = vmatmul.mubr.bf16.gmra.mxu0 %v2886
  %v3107 = vpop.f32.mrf.mxu0
  %v3108 = vadd.f32 %v661, %v3107
  %v3109 = vpop.f32.mrf.mxu0
  %v3110 = vpop.f32.mrf.mxu0
  %v3111 = vadd.f32 %v661, %v3110
  %v3112 = vpop.f32.mrf.mxu0
  %3113 = vdwg.mxu0
  %v3130 = vrot.slane %v2525, 7
  %v3131 = vrot.slane %v2530, 6
  %v3132 = vsel %vm801, %v3131, %v3130
  %v3133 = vrot.slane %v2533, 5
  %v3134 = vsel %vm804, %v3133, %v3132
  %v3135 = vrot.slane %v2538, 4
  %v3136 = vsel %vm807, %v3135, %v3134
  %v3137 = vrot.slane %v2541, 3
  %v3138 = vsel %vm810, %v3137, %v3136
  %v3139 = vrot.slane %v2546, 2
  %v3140 = vsel %vm813, %v3139, %v3138
  %v3141 = vrot.slane %v2549, 1
  %v3142 = vsel %vm816, %v3141, %v3140
  %v3143 = vsel %vm818, %v2554, %v3142
  %v3144 = vrot.slane %v2557, 7
  %v3145 = vrot.slane %v2562, 6
  %v3146 = vsel %vm801, %v3145, %v3144
  %v3147 = vrot.slane %v2565, 5
  %v3148 = vsel %vm804, %v3147, %v3146
  %v3149 = vrot.slane %v2570, 4
  %v3150 = vsel %vm807, %v3149, %v3148
  %v3151 = vrot.slane %v2573, 3
  %v3152 = vsel %vm810, %v3151, %v3150
  %v3153 = vrot.slane %v2578, 2
  %v3154 = vsel %vm813, %v3153, %v3152
  %v3155 = vrot.slane %v2581, 1
  %v3156 = vsel %vm816, %v3155, %v3154
  %v3160 = vsel %vm836, %v2522, 0.0
  %3161 = vadd.xlane.f32.xlu0 %v3160
  %v3162 = vpop.xlane.xlu0 %3161
  %v3163 = vsel %vm235, %v3143, 0.0
  %3164 = vadd.xlane.f32.xlu0 %v3163
  %v3165 = vpop.xlane.xlu0 %3164
  %v3166 = vsel %vm843, %v3156, 0.0
  %3167 = vadd.xlane.f32.xlu0 %v3166
  %v3168 = vpop.xlane.xlu0 %3167
  %v3169 = vmul.f32 %v3162, %v284
  %v3170 = vmul.f32 %v3165, %v284
  %v3171 = vmul.f32 %v3168, %v284
  %v3175 = vrot.slane %v3170, 1
  %v3176 = vrot.slane %v3170, 2
  %v3177 = vrot.slane %v3170, 3
  %v3178 = vrot.slane %v3170, 4
  %v3179 = vrot.slane %v3170, 5
  %v3180 = vrot.slane %v3170, 6
  %v3181 = vrot.slane %v3170, 7
  %v3182 = vrot.slane %v3171, 1
  %v3183 = vrot.slane %v3171, 2
  %v3184 = vrot.slane %v3171, 3
  %v3185 = vrot.slane %v3171, 4
  %v3186 = vrot.slane %v3171, 5
  %v3187 = vrot.slane %v3171, 6
  %v3188 = vrot.slane %v3171, 7
  %v3205 = vsub.f32 %v2522, %v3169
  %v3206 = vsub.f32 %v2525, %v3175
  %v3207 = vsub.f32 %v2530, %v3176
  %v3208 = vsub.f32 %v2533, %v3177
  %v3209 = vsub.f32 %v2538, %v3178
  %v3210 = vsub.f32 %v2541, %v3179
  %v3211 = vsub.f32 %v2546, %v3180
  %v3212 = vsub.f32 %v2549, %v3181
  %v3213 = vsub.f32 %v2554, %v3170
  %v3214 = vsub.f32 %v2557, %v3182
  %v3215 = vsub.f32 %v2562, %v3183
  %v3216 = vsub.f32 %v2565, %v3184
  %v3217 = vsub.f32 %v2570, %v3185
  %v3218 = vsub.f32 %v2573, %v3186
  %v3219 = vsub.f32 %v2578, %v3187
  %v3220 = vsub.f32 %v2581, %v3188
  %v3221 = vmul.f32 %v3205, %v3205
  %v3222 = vmul.f32 %v3206, %v3206
  %v3223 = vmul.f32 %v3207, %v3207
  %v3224 = vmul.f32 %v3208, %v3208
  %v3225 = vmul.f32 %v3209, %v3209
  %v3226 = vmul.f32 %v3210, %v3210
  %v3227 = vmul.f32 %v3211, %v3211
  %v3228 = vmul.f32 %v3212, %v3212
  %v3229 = vmul.f32 %v3213, %v3213
  %v3230 = vmul.f32 %v3214, %v3214
  %v3231 = vmul.f32 %v3215, %v3215
  %v3232 = vmul.f32 %v3216, %v3216
  %v3233 = vmul.f32 %v3217, %v3217
  %v3234 = vmul.f32 %v3218, %v3218
  %v3235 = vmul.f32 %v3219, %v3219
  %v3236 = vmul.f32 %v3220, %v3220
  %v3253 = vrot.slane %v3222, 7
  %v3254 = vrot.slane %v3223, 6
  %v3255 = vsel %vm801, %v3254, %v3253
  %v3256 = vrot.slane %v3224, 5
  %v3257 = vsel %vm804, %v3256, %v3255
  %v3258 = vrot.slane %v3225, 4
  %v3259 = vsel %vm807, %v3258, %v3257
  %v3260 = vrot.slane %v3226, 3
  %v3261 = vsel %vm810, %v3260, %v3259
  %v3262 = vrot.slane %v3227, 2
  %v3263 = vsel %vm813, %v3262, %v3261
  %v3264 = vrot.slane %v3228, 1
  %v3265 = vsel %vm816, %v3264, %v3263
  %v3266 = vsel %vm818, %v3229, %v3265
  %v3267 = vrot.slane %v3230, 7
  %v3268 = vrot.slane %v3231, 6
  %v3269 = vsel %vm801, %v3268, %v3267
  %v3270 = vrot.slane %v3232, 5
  %v3271 = vsel %vm804, %v3270, %v3269
  %v3272 = vrot.slane %v3233, 4
  %v3273 = vsel %vm807, %v3272, %v3271
  %v3274 = vrot.slane %v3234, 3
  %v3275 = vsel %vm810, %v3274, %v3273
  %v3276 = vrot.slane %v3235, 2
  %v3277 = vsel %vm813, %v3276, %v3275
  %v3278 = vrot.slane %v3236, 1
  %v3279 = vsel %vm816, %v3278, %v3277
  %v3283 = vsel %vm836, %v3221, 0.0
  %3284 = vadd.xlane.f32.xlu0 %v3283
  %v3285 = vpop.xlane.xlu0 %3284
  %v3286 = vsel %vm235, %v3266, 0.0
  %3287 = vadd.xlane.f32.xlu0 %v3286
  %v3288 = vpop.xlane.xlu0 %3287
  %v3289 = vsel %vm843, %v3279, 0.0
  %3290 = vadd.xlane.f32.xlu0 %v3289
  %v3291 = vpop.xlane.xlu0 %3290
  %v3292 = vmul.f32 %v3285, %v284
  %v3293 = vmul.f32 %v3288, %v284
  %v3294 = vmul.f32 %v3291, %v284
  %v3295 = vadd.f32 %v3292, 1e-05
  %v3296 = vadd.f32 %v3293, 1e-05
  %v3297 = vadd.f32 %v3294, 1e-05
  %v3298 = vrsqrt.pop %v3295
  %v3299 = vrsqrt.pop %v3296
  %v3300 = vrsqrt.pop %v3297
  %v3304 = vrot.slane %v3299, 1
  %v3305 = vrot.slane %v3299, 2
  %v3306 = vrot.slane %v3299, 3
  %v3307 = vrot.slane %v3299, 4
  %v3308 = vrot.slane %v3299, 5
  %v3309 = vrot.slane %v3299, 6
  %v3310 = vrot.slane %v3299, 7
  %v3311 = vrot.slane %v3300, 1
  %v3312 = vrot.slane %v3300, 2
  %v3313 = vrot.slane %v3300, 3
  %v3314 = vrot.slane %v3300, 4
  %v3315 = vrot.slane %v3300, 5
  %v3316 = vrot.slane %v3300, 6
  %v3317 = vrot.slane %v3300, 7
  %v3334 = vmul.f32 %v3205, %v3298
  %v3335 = vmul.f32 %v3206, %v3304
  %v3336 = vmul.f32 %v3207, %v3305
  %v3337 = vmul.f32 %v3208, %v3306
  %v3338 = vmul.f32 %v3209, %v3307
  %v3339 = vmul.f32 %v3210, %v3308
  %v3340 = vmul.f32 %v3211, %v3309
  %v3341 = vmul.f32 %v3212, %v3310
  %v3342 = vmul.f32 %v3213, %v3299
  %v3343 = vmul.f32 %v3214, %v3311
  %v3344 = vmul.f32 %v3215, %v3312
  %v3345 = vmul.f32 %v3216, %v3313
  %v3346 = vmul.f32 %v3217, %v3314
  %v3347 = vmul.f32 %v3218, %v3315
  %v3348 = vmul.f32 %v3219, %v3316
  %v3349 = vmul.f32 %v3220, %v3317
  %v3350 = vmul.f32 %v3334, %v448
  %v3351 = vmul.f32 %v3335, %v448
  %v3352 = vmul.f32 %v3336, %v448
  %v3353 = vmul.f32 %v3337, %v448
  %v3354 = vmul.f32 %v3338, %v448
  %v3355 = vmul.f32 %v3339, %v448
  %v3356 = vmul.f32 %v3340, %v448
  %v3357 = vmul.f32 %v3341, %v448
  %v3358 = vmul.f32 %v3342, %v448
  %v3359 = vmul.f32 %v3343, %v448
  %v3360 = vmul.f32 %v3344, %v448
  %v3361 = vmul.f32 %v3345, %v448
  %v3362 = vmul.f32 %v3346, %v448
  %v3363 = vmul.f32 %v3347, %v448
  %v3364 = vmul.f32 %v3348, %v448
  %v3365 = vmul.f32 %v3349, %v448
  %v3366 = vadd.f32 %v3350, %v468
  %v3367 = vadd.f32 %v3351, %v468
  %v3368 = vadd.f32 %v3352, %v468
  %v3369 = vadd.f32 %v3353, %v468
  %v3370 = vadd.f32 %v3354, %v468
  %v3371 = vadd.f32 %v3355, %v468
  %v3372 = vadd.f32 %v3356, %v468
  %v3373 = vadd.f32 %v3357, %v468
  %v3374 = vadd.f32 %v3358, %v468
  %v3375 = vadd.f32 %v3359, %v468
  %v3376 = vadd.f32 %v3360, %v468
  %v3377 = vadd.f32 %v3361, %v468
  %v3378 = vadd.f32 %v3362, %v468
  %v3379 = vadd.f32 %v3363, %v468
  %v3380 = vadd.f32 %v3364, %v468
  %v3381 = vadd.f32 %v3365, %v468
  %v3382 = vpack.c.bf16 %v3366, %v3366
  %v3383 = vpack.c.bf16 %v3367, %v3367
  %v3384 = vpack.c.bf16 %v3368, %v3368
  %v3385 = vpack.c.bf16 %v3369, %v3369
  %v3386 = vpack.c.bf16 %v3370, %v3370
  %v3387 = vpack.c.bf16 %v3371, %v3371
  %v3388 = vpack.c.bf16 %v3372, %v3372
  %v3389 = vpack.c.bf16 %v3373, %v3373
  %v3390 = vpack.c.bf16 %v3374, %v3374
  %v3391 = vpack.c.bf16 %v3375, %v3375
  %v3392 = vpack.c.bf16 %v3376, %v3376
  %v3393 = vpack.c.bf16 %v3377, %v3377
  %v3394 = vpack.c.bf16 %v3378, %v3378
  %v3395 = vpack.c.bf16 %v3379, %v3379
  %v3396 = vpack.c.bf16 %v3380, %v3380
  %v3397 = vpack.c.bf16 %v3381, %v3381
  %v3398 = vld [vmem:[%s2] sm:$0xf]
  %v3399 = vld [vmem:[%s2 + $0x4] sm:$0xf]
  %v3400 = vld [vmem:[%s2 + $0x8] sm:$0xf]
  %v3401 = vld [vmem:[%s2 + $0xc] sm:$0xf]
  %v3402 = vld [vmem:[%s2 + $0x10] sm:$0xf]
  %v3403 = vld [vmem:[%s2 + $0x14] sm:$0xf]
  %v3404 = vld [vmem:[%s2 + $0x18] sm:$0xf]
  %v3405 = vld [vmem:[%s2 + $0x1c] sm:$0xf]
  %v3422 = vunpack.c.l.b16 %v3382
  %v3423 = vunpack.c.l.b16 %v3383
  %v3424 = vunpack.c.l.b16 %v3384
  %v3425 = vunpack.c.l.b16 %v3385
  %v3426 = vunpack.c.l.b16 %v3386
  %v3427 = vunpack.c.l.b16 %v3387
  %v3428 = vunpack.c.l.b16 %v3388
  %v3429 = vunpack.c.l.b16 %v3389
  %v3430 = vunpack.c.l.b16 %v3390
  %v3431 = vunpack.c.l.b16 %v3391
  %v3432 = vunpack.c.l.b16 %v3392
  %v3433 = vunpack.c.l.b16 %v3393
  %v3434 = vunpack.c.l.b16 %v3394
  %v3435 = vunpack.c.l.b16 %v3395
  %v3436 = vunpack.c.l.b16 %v3396
  %v3437 = vunpack.c.l.b16 %v3397
  %v3438 = vrot.slane %v3422, 7
  %v3439 = vrot.slane %v3423, 6
  %v3440 = vsel %vm801, %v3439, %v3438
  %v3441 = vrot.slane %v3424, 5
  %v3442 = vsel %vm804, %v3441, %v3440
  %v3443 = vrot.slane %v3425, 4
  %v3444 = vsel %vm807, %v3443, %v3442
  %v3445 = vrot.slane %v3426, 3
  %v3446 = vsel %vm810, %v3445, %v3444
  %v3447 = vrot.slane %v3427, 2
  %v3448 = vsel %vm813, %v3447, %v3446
  %v3449 = vrot.slane %v3428, 1
  %v3450 = vsel %vm816, %v3449, %v3448
  %v3451 = vsel %vm818, %v3429, %v3450
  %v3452 = vrot.slane %v3430, 7
  %v3453 = vrot.slane %v3431, 6
  %v3454 = vsel %vm801, %v3453, %v3452
  %v3455 = vrot.slane %v3432, 5
  %v3456 = vsel %vm804, %v3455, %v3454
  %v3457 = vrot.slane %v3433, 4
  %v3458 = vsel %vm807, %v3457, %v3456
  %v3459 = vrot.slane %v3434, 3
  %v3460 = vsel %vm810, %v3459, %v3458
  %v3461 = vrot.slane %v3435, 2
  %v3462 = vsel %vm813, %v3461, %v3460
  %v3463 = vrot.slane %v3436, 1
  %v3464 = vsel %vm816, %v3463, %v3462
  %v3465 = vsel %vm818, %v3437, %v3464
  %v3466 = vpack.c.b16 %v3465, %v3451
  %v3475 = vunpack.c.l.b16 %v3398
  %v3476 = vunpack.c.l.b16 %v3399
  %v3477 = vunpack.c.l.b16 %v3400
  %v3478 = vunpack.c.l.b16 %v3401
  %v3479 = vunpack.c.l.b16 %v3402
  %v3480 = vunpack.c.l.b16 %v3403
  %v3481 = vunpack.c.l.b16 %v3404
  %v3482 = vunpack.c.l.b16 %v3405
  %v3483 = vpack.c.b16 %v3476, %v3475
  %v3484 = vpack.c.b16 %v3478, %v3477
  %v3485 = vpack.c.b16 %v3480, %v3479
  %v3486 = vpack.c.b16 %v3482, %v3481
  %v3492 = vsel %vm235, %v3466, 0
  %3494 = vmatprep.subr.bf16.mxu0 0
  %3495 = vmatpush1.bf16.msra.mxu0 0
  %3496 = vmatprep.subr.bf16.mxu0 0
  %3497 = vmatpush1.bf16.msra.mxu0 0
  %3498 = vmatprep.subr.bf16.mxu0 0
  %3499 = vmatpush1.bf16.msra.mxu0 0
  %3500 = vmatprep.subr.bf16.mxu0 0
  %3501 = vmatpush1.bf16.msra.mxu0 0
  %3502 = vmatprep.subr.bf16.mxu0 0
  %3503 = vmatpush1.bf16.msra.mxu0 %v3486
  %3504 = vmatprep.subr.bf16.mxu0 0
  %3505 = vmatpush1.bf16.msra.mxu0 %v3485
  %3506 = vmatprep.subr.bf16.mxu0 0
  %3507 = vmatpush1.bf16.msra.mxu0 %v3484
  %3508 = vmatprep.subr.bf16.mxu0 0
  %3509 = vmatpush1.bf16.msra.mxu0 %v3483
  %3510 = vmatprep.subr.bf16.mxu0 0
  %3511 = vmatpush2.bf16.msra.mxu0 0
  %3512 = vmatprep.subr.bf16.mxu0 0
  %3513 = vmatpush2.bf16.msra.mxu0 0
  %3514 = vmatprep.subr.bf16.mxu0 0
  %3515 = vmatpush2.bf16.msra.mxu0 0
  %3516 = vmatprep.subr.bf16.mxu0 0
  %3517 = vmatpush2.bf16.msra.mxu0 0
  %3518 = vmatprep.subr.bf16.mxu0 0
  %3519 = vmatpush2.bf16.msra.mxu0 0
  %3520 = vmatprep.subr.bf16.mxu0 0
  %3521 = vmatpush2.bf16.msra.mxu0 0
  %3522 = vmatprep.subr.bf16.mxu0 0
  %3523 = vmatpush2.bf16.msra.mxu0 0
  %3524 = vmatprep.subr.bf16.mxu0 0
  %3525 = vmatpush2.bf16.msra.mxu0 0
  %3526 = vmatprep.mubr.bf16.mxu0 0
  %3527 = vmatmul.mubr.bf16.gmra.mxu0 %v3492
  %v3528 = vpop.f32.mrf.mxu0
  %v3529 = vadd.f32 %v1087, %v3528
  %v3530 = vpop.f32.mrf.mxu0
  %v3531 = vpop.f32.mrf.mxu0
  %v3532 = vadd.f32 %v1087, %v3531
  %v3533 = vpop.f32.mrf.mxu0
  %3534 = vdwg.mxu0
  %v3535 = vmul.f32 %v3529, %v62
  %v3536 = vmul.f32 %v3532, %v63
  %v3537 = vmul.f32 %v3529, %v64
  %v3538 = vmul.f32 %v3532, %v65
  %v3539 = vpack.c.bf16 %v3536, %v3535
  %v3540 = vpack.c.bf16 %v3538, %v3537
  %v3541 = vpack.c.bf16 %v2926, %v2923
  %v3542 = vpack.c.bf16 %v2934, %v2931
  %v3543 = vpack.c.bf16 %v2942, %v2939
  %v3544 = vpack.c.bf16 %v2950, %v2947
  %v3545 = vpack.c.bf16 %v2958, %v2955
  %v3546 = vpack.c.bf16 %v2966, %v2963
  %v3547 = vpack.c.bf16 %v2974, %v2971
  %v3548 = vpack.c.bf16 %v2982, %v2979
  %v3550 = vsel %vm235, %v3539, 0
  %v3553 = vsel %vm235, %v3540, 0
  %v3556 = vsel %vm235, %v3541, 0
  %v3559 = vsel %vm235, %v3542, 0
  %v3562 = vsel %vm235, %v3543, 0
  %v3565 = vsel %vm235, %v3544, 0
  %v3568 = vsel %vm235, %v3545, 0
  %v3571 = vsel %vm235, %v3546, 0
  %v3574 = vsel %vm235, %v3547, 0
  %v3577 = vsel %vm235, %v3548, 0
  %3579 = vmatprep.subr.bf16.mxu0 0
  %3580 = vmatpush1.bf16.xpose.msra.mxu0 %v3577
  %3581 = vmatprep.subr.bf16.mxu0 0
  %3582 = vmatpush1.bf16.xpose.msra.mxu0 %v3574
  %3583 = vmatprep.subr.bf16.mxu0 0
  %3584 = vmatpush1.bf16.xpose.msra.mxu0 %v3571
  %3585 = vmatprep.subr.bf16.mxu0 0
  %3586 = vmatpush1.bf16.xpose.msra.mxu0 %v3568
  %3587 = vmatprep.subr.bf16.mxu0 0
  %3588 = vmatpush1.bf16.xpose.msra.mxu0 %v3565
  %3589 = vmatprep.subr.bf16.mxu0 0
  %3590 = vmatpush1.bf16.xpose.msra.mxu0 %v3562
  %3591 = vmatprep.subr.bf16.mxu0 0
  %3592 = vmatpush1.bf16.xpose.msra.mxu0 %v3559
  %3593 = vmatprep.subr.bf16.mxu0 0
  %3594 = vmatpush1.bf16.xpose.msra.mxu0 %v3556
  %3595 = vmatprep.subr.bf16.mxu0 0
  %3596 = vmatpush2.bf16.xpose.msra.mxu0 0
  %3597 = vmatprep.subr.bf16.mxu0 0
  %3598 = vmatpush2.bf16.xpose.msra.mxu0 0
  %3599 = vmatprep.subr.bf16.mxu0 0
  %3600 = vmatpush2.bf16.xpose.msra.mxu0 0
  %3601 = vmatprep.subr.bf16.mxu0 0
  %3602 = vmatpush2.bf16.xpose.msra.mxu0 0
  %3603 = vmatprep.subr.bf16.mxu0 0
  %3604 = vmatpush2.bf16.xpose.msra.mxu0 0
  %3605 = vmatprep.subr.bf16.mxu0 0
  %3606 = vmatpush2.bf16.xpose.msra.mxu0 0
  %3607 = vmatprep.subr.bf16.mxu0 0
  %3608 = vmatpush2.bf16.xpose.msra.mxu0 0
  %3609 = vmatprep.subr.bf16.mxu0 0
  %3610 = vmatpush2.bf16.xpose.msra.mxu0 0
  %3611 = vmatprep.mubr.bf16.mxu0 0
  %3612 = vmatmul.mubr.bf16.gmra.mxu0 %v3550
  %v3613 = vpop.f32.mrf.mxu0
  %v3614 = vadd.f32 %v58, %v3613
  %v3615 = vpop.f32.mrf.mxu0
  %v3616 = vpop.f32.mrf.mxu0
  %v3617 = vadd.f32 %v59, %v3616
  %v3618 = vpop.f32.mrf.mxu0
  %3619 = vmatprep.mubr.bf16.mxu0 0
  %3620 = vmatmul.mubr.bf16.gmra.mxu0 %v3553
  %v3621 = vpop.f32.mrf.mxu0
  %v3622 = vadd.f32 %v60, %v3621
  %v3623 = vpop.f32.mrf.mxu0
  %v3624 = vpop.f32.mrf.mxu0
  %v3625 = vadd.f32 %v61, %v3624
  %v3626 = vpop.f32.mrf.mxu0
  %3627 = vdwg.mxu0
  %3628 = vmax.xlane.f32.xlu0 %v3614
  %v3629 = vpop.xlane.xlu0 %3628
  %3630 = vmax.xlane.f32.xlu0 %v3617
  %v3631 = vpop.xlane.xlu0 %3630
  %3632 = vmax.xlane.f32.xlu0 %v3622
  %v3633 = vpop.xlane.xlu0 %3632
  %3634 = vmax.xlane.f32.xlu0 %v3625
  %v3635 = vpop.xlane.xlu0 %3634
  %v3636 = vsub.f32 %v3614, %v3629
  %v3637 = vsub.f32 %v3617, %v3631
  %v3638 = vsub.f32 %v3622, %v3633
  %v3639 = vsub.f32 %v3625, %v3635
  %v3640 = vmul.f32 %v3636, 1.442695
  %v3641 = vpow.pop %v3640
  %v3642 = vmul.f32 %v3637, 1.442695
  %v3643 = vpow.pop %v3642
  %v3644 = vmul.f32 %v3638, 1.442695
  %v3645 = vpow.pop %v3644
  %v3646 = vmul.f32 %v3639, 1.442695
  %v3647 = vpow.pop %v3646
  %3648 = vadd.xlane.f32.xlu0 %v3641
  %v3649 = vpop.xlane.xlu0 %3648
  %3650 = vadd.xlane.f32.xlu0 %v3643
  %v3651 = vpop.xlane.xlu0 %3650
  %3652 = vadd.xlane.f32.xlu0 %v3645
  %v3653 = vpop.xlane.xlu0 %3652
  %3654 = vadd.xlane.f32.xlu0 %v3647
  %v3655 = vpop.xlane.xlu0 %3654
  %v3656 = vrcp.pop %v3649
  %v3657 = vrcp.pop %v3651
  %v3658 = vrcp.pop %v3653
  %v3659 = vrcp.pop %v3655
  %v3660 = vmul.f32 %v3641, %v3656
  %v3661 = vmul.f32 %v3643, %v3657
  %v3662 = vmul.f32 %v3645, %v3658
  %v3663 = vmul.f32 %v3647, %v3659
  %v3664 = vpack.c.bf16 %v3661, %v3660
  %v3665 = vpack.c.bf16 %v3663, %v3662
  %v3666 = vpack.c.bf16 %v3055, %v3052
  %v3667 = vpack.c.bf16 %v3063, %v3060
  %v3668 = vpack.c.bf16 %v3071, %v3068
  %v3669 = vpack.c.bf16 %v3079, %v3076
  %v3670 = vpack.c.bf16 %v3087, %v3084
  %v3671 = vpack.c.bf16 %v3095, %v3092
  %v3672 = vpack.c.bf16 %v3103, %v3100
  %v3673 = vpack.c.bf16 %v3111, %v3108
  %3674 = vmatprep.subr.bf16.mxu0 0
  %3675 = vmatpush1.bf16.msra.mxu0 %v3673
  %3676 = vmatprep.subr.bf16.mxu0 0
  %3677 = vmatpush1.bf16.msra.mxu0 %v3672
  %3678 = vmatprep.subr.bf16.mxu0 0
  %3679 = vmatpush1.bf16.msra.mxu0 %v3671
  %3680 = vmatprep.subr.bf16.mxu0 0
  %3681 = vmatpush1.bf16.msra.mxu0 %v3670
  %3682 = vmatprep.subr.bf16.mxu0 0
  %3683 = vmatpush1.bf16.msra.mxu0 %v3669
  %3684 = vmatprep.subr.bf16.mxu0 0
  %3685 = vmatpush1.bf16.msra.mxu0 %v3668
  %3686 = vmatprep.subr.bf16.mxu0 0
  %3687 = vmatpush1.bf16.msra.mxu0 %v3667
  %3688 = vmatprep.subr.bf16.mxu0 0
  %3689 = vmatpush1.bf16.msra.mxu0 %v3666
  %3690 = vmatprep.subr.bf16.mxu0 0
  %3691 = vmatpush2.bf16.msra.mxu0 0
  %3692 = vmatprep.subr.bf16.mxu0 0
  %3693 = vmatpush2.bf16.msra.mxu0 0
  %3694 = vmatprep.subr.bf16.mxu0 0
  %3695 = vmatpush2.bf16.msra.mxu0 0
  %3696 = vmatprep.subr.bf16.mxu0 0
  %3697 = vmatpush2.bf16.msra.mxu0 0
  %3698 = vmatprep.subr.bf16.mxu0 0
  %3699 = vmatpush2.bf16.msra.mxu0 0
  %3700 = vmatprep.subr.bf16.mxu0 0
  %3701 = vmatpush2.bf16.msra.mxu0 0
  %3702 = vmatprep.subr.bf16.mxu0 0
  %3703 = vmatpush2.bf16.msra.mxu0 0
  %3704 = vmatprep.subr.bf16.mxu0 0
  %3705 = vmatpush2.bf16.msra.mxu0 0
  %3706 = vmatprep.mubr.bf16.mxu0 0
  %3707 = vmatmul.mubr.bf16.gmra.mxu0 %v3664
  %v3708 = vpop.f32.mrf.mxu0
  %v3709 = vadd.f32 0.0, %v3708
  %v3710 = vpop.f32.mrf.mxu0
  %v3711 = vpop.f32.mrf.mxu0
  %v3712 = vadd.f32 0.0, %v3711
  %v3713 = vpop.f32.mrf.mxu0
  %3714 = vmatprep.mubr.bf16.mxu0 0
  %3715 = vmatmul.mubr.bf16.gmra.mxu0 %v3665
  %v3716 = vpop.f32.mrf.mxu0
  %v3717 = vadd.f32 0.0, %v3716
  %v3718 = vpop.f32.mrf.mxu0
  %v3719 = vpop.f32.mrf.mxu0
  %v3720 = vadd.f32 0.0, %v3719
  %v3721 = vpop.f32.mrf.mxu0
  %3722 = vdwg.mxu0
  %v3723 = vmul.f32 %v3709, %v62
  %v3724 = vmul.f32 %v3712, %v63
  %v3725 = vmul.f32 %v3717, %v64
  %v3726 = vmul.f32 %v3720, %v65
  %v3727 = vadd.f32 %v3723, %v3725
  %v3728 = vadd.f32 %v3724, %v3726
  %v3729 = vpack.c.bf16 %v3728, %v3727
  %v3730 = vld [vmem:[%s5] sm:$0xf]
  %v3731 = vld [vmem:[%s5 + $0x4] sm:$0xf]
  %v3732 = vld [vmem:[%s5 + $0x8] sm:$0xf]
  %v3733 = vld [vmem:[%s5 + $0xc] sm:$0xf]
  %v3734 = vld [vmem:[%s5 + $0x10] sm:$0xf]
  %v3735 = vld [vmem:[%s5 + $0x14] sm:$0xf]
  %v3736 = vld [vmem:[%s5 + $0x18] sm:$0xf]
  %v3737 = vld [vmem:[%s5 + $0x1c] sm:$0xf]
  %v3746 = vunpack.c.l.b16 %v3730
  %v3747 = vunpack.c.l.b16 %v3731
  %v3748 = vunpack.c.l.b16 %v3732
  %v3749 = vunpack.c.l.b16 %v3733
  %v3750 = vunpack.c.l.b16 %v3734
  %v3751 = vunpack.c.l.b16 %v3735
  %v3752 = vunpack.c.l.b16 %v3736
  %v3753 = vunpack.c.l.b16 %v3737
  %v3754 = vpack.c.b16 %v3747, %v3746
  %v3755 = vpack.c.b16 %v3749, %v3748
  %v3756 = vpack.c.b16 %v3751, %v3750
  %v3757 = vpack.c.b16 %v3753, %v3752
  %v3763 = vsel %vm235, %v3729, 0
  %3765 = vmatprep.subr.bf16.mxu0 0
  %3766 = vmatpush1.bf16.msra.mxu0 0
  %3767 = vmatprep.subr.bf16.mxu0 0
  %3768 = vmatpush1.bf16.msra.mxu0 0
  %3769 = vmatprep.subr.bf16.mxu0 0
  %3770 = vmatpush1.bf16.msra.mxu0 0
  %3771 = vmatprep.subr.bf16.mxu0 0
  %3772 = vmatpush1.bf16.msra.mxu0 0
  %3773 = vmatprep.subr.bf16.mxu0 0
  %3774 = vmatpush1.bf16.msra.mxu0 %v3757
  %3775 = vmatprep.subr.bf16.mxu0 0
  %3776 = vmatpush1.bf16.msra.mxu0 %v3756
  %3777 = vmatprep.subr.bf16.mxu0 0
  %3778 = vmatpush1.bf16.msra.mxu0 %v3755
  %3779 = vmatprep.subr.bf16.mxu0 0
  %3780 = vmatpush1.bf16.msra.mxu0 %v3754
  %3781 = vmatprep.subr.bf16.mxu0 0
  %3782 = vmatpush2.bf16.msra.mxu0 0
  %3783 = vmatprep.subr.bf16.mxu0 0
  %3784 = vmatpush2.bf16.msra.mxu0 0
  %3785 = vmatprep.subr.bf16.mxu0 0
  %3786 = vmatpush2.bf16.msra.mxu0 0
  %3787 = vmatprep.subr.bf16.mxu0 0
  %3788 = vmatpush2.bf16.msra.mxu0 0
  %3789 = vmatprep.subr.bf16.mxu0 0
  %3790 = vmatpush2.bf16.msra.mxu0 0
  %3791 = vmatprep.subr.bf16.mxu0 0
  %3792 = vmatpush2.bf16.msra.mxu0 0
  %3793 = vmatprep.subr.bf16.mxu0 0
  %3794 = vmatpush2.bf16.msra.mxu0 0
  %3795 = vmatprep.subr.bf16.mxu0 0
  %3796 = vmatpush2.bf16.msra.mxu0 0
  %3797 = vmatprep.mubr.bf16.mxu0 0
  %3798 = vmatmul.mubr.bf16.gmra.mxu0 %v3763
  %v3799 = vpop.f32.mrf.mxu0
  %v3800 = vadd.f32 0.0, %v3799
  %v3801 = vpop.f32.mrf.mxu0
  %v3802 = vpop.f32.mrf.mxu0
  %v3803 = vadd.f32 0.0, %v3802
  %v3804 = vpop.f32.mrf.mxu0
  %3805 = vdwg.mxu0
  %v3808 = vrot.slane %v3800, 1
  %v3809 = vrot.slane %v3800, 2
  %v3810 = vrot.slane %v3800, 3
  %v3811 = vrot.slane %v3800, 4
  %v3812 = vrot.slane %v3800, 5
  %v3813 = vrot.slane %v3800, 6
  %v3814 = vrot.slane %v3800, 7
  %v3815 = vrot.slane %v3803, 1
  %v3816 = vrot.slane %v3803, 2
  %v3817 = vrot.slane %v3803, 3
  %v3818 = vrot.slane %v3803, 4
  %v3819 = vrot.slane %v3803, 5
  %v3820 = vrot.slane %v3803, 6
  %v3821 = vrot.slane %v3803, 7
  %v3838 = vadd.f32 %v2522, %v3808
  %v3839 = vadd.f32 %v2525, %v3809
  %v3840 = vadd.f32 %v2530, %v3810
  %v3841 = vadd.f32 %v2533, %v3811
  %v3842 = vadd.f32 %v2538, %v3812
  %v3843 = vadd.f32 %v2541, %v3813
  %v3844 = vadd.f32 %v2546, %v3814
  %v3845 = vadd.f32 %v2549, %v3800
  %v3846 = vadd.f32 %v2554, %v3815
  %v3847 = vadd.f32 %v2557, %v3816
  %v3848 = vadd.f32 %v2562, %v3817
  %v3849 = vadd.f32 %v2565, %v3818
  %v3850 = vadd.f32 %v2570, %v3819
  %v3851 = vadd.f32 %v2573, %v3820
  %v3852 = vadd.f32 %v2578, %v3821
  %v3853 = vadd.f32 %v2581, %v3803
  %v3854 = vadd.f32 %v3838, %v1539
  %v3855 = vadd.f32 %v3839, %v1539
  %v3856 = vadd.f32 %v3840, %v1539
  %v3857 = vadd.f32 %v3841, %v1539
  %v3858 = vadd.f32 %v3842, %v1539
  %v3859 = vadd.f32 %v3843, %v1539
  %v3860 = vadd.f32 %v3844, %v1539
  %v3861 = vadd.f32 %v3845, %v1539
  %v3862 = vadd.f32 %v3846, %v1539
  %v3863 = vadd.f32 %v3847, %v1539
  %v3864 = vadd.f32 %v3848, %v1539
  %v3865 = vadd.f32 %v3849, %v1539
  %v3866 = vadd.f32 %v3850, %v1539
  %v3867 = vadd.f32 %v3851, %v1539
  %v3868 = vadd.f32 %v3852, %v1539
  %v3869 = vadd.f32 %v3853, %v1539
  %v3886 = vrot.slane %v3855, 7
  %v3887 = vrot.slane %v3856, 6
  %v3888 = vsel %vm801, %v3887, %v3886
  %v3889 = vrot.slane %v3857, 5
  %v3890 = vsel %vm804, %v3889, %v3888
  %v3891 = vrot.slane %v3858, 4
  %v3892 = vsel %vm807, %v3891, %v3890
  %v3893 = vrot.slane %v3859, 3
  %v3894 = vsel %vm810, %v3893, %v3892
  %v3895 = vrot.slane %v3860, 2
  %v3896 = vsel %vm813, %v3895, %v3894
  %v3897 = vrot.slane %v3861, 1
  %v3898 = vsel %vm816, %v3897, %v3896
  %v3899 = vsel %vm818, %v3862, %v3898
  %v3900 = vrot.slane %v3863, 7
  %v3901 = vrot.slane %v3864, 6
  %v3902 = vsel %vm801, %v3901, %v3900
  %v3903 = vrot.slane %v3865, 5
  %v3904 = vsel %vm804, %v3903, %v3902
  %v3905 = vrot.slane %v3866, 4
  %v3906 = vsel %vm807, %v3905, %v3904
  %v3907 = vrot.slane %v3867, 3
  %v3908 = vsel %vm810, %v3907, %v3906
  %v3909 = vrot.slane %v3868, 2
  %v3910 = vsel %vm813, %v3909, %v3908
  %v3911 = vrot.slane %v3869, 1
  %v3912 = vsel %vm816, %v3911, %v3910
  %v3916 = vsel %vm836, %v3854, 0.0
  %3917 = vadd.xlane.f32.xlu0 %v3916
  %v3918 = vpop.xlane.xlu0 %3917
  %v3919 = vsel %vm235, %v3899, 0.0
  %3920 = vadd.xlane.f32.xlu0 %v3919
  %v3921 = vpop.xlane.xlu0 %3920
  %v3922 = vsel %vm843, %v3912, 0.0
  %3923 = vadd.xlane.f32.xlu0 %v3922
  %v3924 = vpop.xlane.xlu0 %3923
  %v3925 = vmul.f32 %v3918, %v284
  %v3926 = vmul.f32 %v3921, %v284
  %v3927 = vmul.f32 %v3924, %v284
  %v3931 = vrot.slane %v3926, 1
  %v3932 = vrot.slane %v3926, 2
  %v3933 = vrot.slane %v3926, 3
  %v3934 = vrot.slane %v3926, 4
  %v3935 = vrot.slane %v3926, 5
  %v3936 = vrot.slane %v3926, 6
  %v3937 = vrot.slane %v3926, 7
  %v3938 = vrot.slane %v3927, 1
  %v3939 = vrot.slane %v3927, 2
  %v3940 = vrot.slane %v3927, 3
  %v3941 = vrot.slane %v3927, 4
  %v3942 = vrot.slane %v3927, 5
  %v3943 = vrot.slane %v3927, 6
  %v3944 = vrot.slane %v3927, 7
  %v3961 = vsub.f32 %v3854, %v3925
  %v3962 = vsub.f32 %v3855, %v3931
  %v3963 = vsub.f32 %v3856, %v3932
  %v3964 = vsub.f32 %v3857, %v3933
  %v3965 = vsub.f32 %v3858, %v3934
  %v3966 = vsub.f32 %v3859, %v3935
  %v3967 = vsub.f32 %v3860, %v3936
  %v3968 = vsub.f32 %v3861, %v3937
  %v3969 = vsub.f32 %v3862, %v3926
  %v3970 = vsub.f32 %v3863, %v3938
  %v3971 = vsub.f32 %v3864, %v3939
  %v3972 = vsub.f32 %v3865, %v3940
  %v3973 = vsub.f32 %v3866, %v3941
  %v3974 = vsub.f32 %v3867, %v3942
  %v3975 = vsub.f32 %v3868, %v3943
  %v3976 = vsub.f32 %v3869, %v3944
  %v3977 = vmul.f32 %v3961, %v3961
  %v3978 = vmul.f32 %v3962, %v3962
  %v3979 = vmul.f32 %v3963, %v3963
  %v3980 = vmul.f32 %v3964, %v3964
  %v3981 = vmul.f32 %v3965, %v3965
  %v3982 = vmul.f32 %v3966, %v3966
  %v3983 = vmul.f32 %v3967, %v3967
  %v3984 = vmul.f32 %v3968, %v3968
  %v3985 = vmul.f32 %v3969, %v3969
  %v3986 = vmul.f32 %v3970, %v3970
  %v3987 = vmul.f32 %v3971, %v3971
  %v3988 = vmul.f32 %v3972, %v3972
  %v3989 = vmul.f32 %v3973, %v3973
  %v3990 = vmul.f32 %v3974, %v3974
  %v3991 = vmul.f32 %v3975, %v3975
  %v3992 = vmul.f32 %v3976, %v3976
  %v4009 = vrot.slane %v3978, 7
  %v4010 = vrot.slane %v3979, 6
  %v4011 = vsel %vm801, %v4010, %v4009
  %v4012 = vrot.slane %v3980, 5
  %v4013 = vsel %vm804, %v4012, %v4011
  %v4014 = vrot.slane %v3981, 4
  %v4015 = vsel %vm807, %v4014, %v4013
  %v4016 = vrot.slane %v3982, 3
  %v4017 = vsel %vm810, %v4016, %v4015
  %v4018 = vrot.slane %v3983, 2
  %v4019 = vsel %vm813, %v4018, %v4017
  %v4020 = vrot.slane %v3984, 1
  %v4021 = vsel %vm816, %v4020, %v4019
  %v4022 = vsel %vm818, %v3985, %v4021
  %v4023 = vrot.slane %v3986, 7
  %v4024 = vrot.slane %v3987, 6
  %v4025 = vsel %vm801, %v4024, %v4023
  %v4026 = vrot.slane %v3988, 5
  %v4027 = vsel %vm804, %v4026, %v4025
  %v4028 = vrot.slane %v3989, 4
  %v4029 = vsel %vm807, %v4028, %v4027
  %v4030 = vrot.slane %v3990, 3
  %v4031 = vsel %vm810, %v4030, %v4029
  %v4032 = vrot.slane %v3991, 2
  %v4033 = vsel %vm813, %v4032, %v4031
  %v4034 = vrot.slane %v3992, 1
  %v4035 = vsel %vm816, %v4034, %v4033
  %v4039 = vsel %vm836, %v3977, 0.0
  %4040 = vadd.xlane.f32.xlu0 %v4039
  %v4041 = vpop.xlane.xlu0 %4040
  %v4042 = vsel %vm235, %v4022, 0.0
  %4043 = vadd.xlane.f32.xlu0 %v4042
  %v4044 = vpop.xlane.xlu0 %4043
  %v4045 = vsel %vm843, %v4035, 0.0
  %4046 = vadd.xlane.f32.xlu0 %v4045
  %v4047 = vpop.xlane.xlu0 %4046
  %v4048 = vmul.f32 %v4041, %v284
  %v4049 = vmul.f32 %v4044, %v284
  %v4050 = vmul.f32 %v4047, %v284
  %v4051 = vadd.f32 %v4048, 1e-05
  %v4052 = vadd.f32 %v4049, 1e-05
  %v4053 = vadd.f32 %v4050, 1e-05
  %v4054 = vrsqrt.pop %v4051
  %v4055 = vrsqrt.pop %v4052
  %v4056 = vrsqrt.pop %v4053
  %v4060 = vrot.slane %v4055, 1
  %v4061 = vrot.slane %v4055, 2
  %v4062 = vrot.slane %v4055, 3
  %v4063 = vrot.slane %v4055, 4
  %v4064 = vrot.slane %v4055, 5
  %v4065 = vrot.slane %v4055, 6
  %v4066 = vrot.slane %v4055, 7
  %v4067 = vrot.slane %v4056, 1
  %v4068 = vrot.slane %v4056, 2
  %v4069 = vrot.slane %v4056, 3
  %v4070 = vrot.slane %v4056, 4
  %v4071 = vrot.slane %v4056, 5
  %v4072 = vrot.slane %v4056, 6
  %v4073 = vrot.slane %v4056, 7
  %v4090 = vmul.f32 %v3961, %v4054
  %v4091 = vmul.f32 %v3962, %v4060
  %v4092 = vmul.f32 %v3963, %v4061
  %v4093 = vmul.f32 %v3964, %v4062
  %v4094 = vmul.f32 %v3965, %v4063
  %v4095 = vmul.f32 %v3966, %v4064
  %v4096 = vmul.f32 %v3967, %v4065
  %v4097 = vmul.f32 %v3968, %v4066
  %v4098 = vmul.f32 %v3969, %v4055
  %v4099 = vmul.f32 %v3970, %v4067
  %v4100 = vmul.f32 %v3971, %v4068
  %v4101 = vmul.f32 %v3972, %v4069
  %v4102 = vmul.f32 %v3973, %v4070
  %v4103 = vmul.f32 %v3974, %v4071
  %v4104 = vmul.f32 %v3975, %v4072
  %v4105 = vmul.f32 %v3976, %v4073
  %v4106 = vmul.f32 %v4090, %v1795
  %v4107 = vmul.f32 %v4091, %v1795
  %v4108 = vmul.f32 %v4092, %v1795
  %v4109 = vmul.f32 %v4093, %v1795
  %v4110 = vmul.f32 %v4094, %v1795
  %v4111 = vmul.f32 %v4095, %v1795
  %v4112 = vmul.f32 %v4096, %v1795
  %v4113 = vmul.f32 %v4097, %v1795
  %v4114 = vmul.f32 %v4098, %v1795
  %v4115 = vmul.f32 %v4099, %v1795
  %v4116 = vmul.f32 %v4100, %v1795
  %v4117 = vmul.f32 %v4101, %v1795
  %v4118 = vmul.f32 %v4102, %v1795
  %v4119 = vmul.f32 %v4103, %v1795
  %v4120 = vmul.f32 %v4104, %v1795
  %v4121 = vmul.f32 %v4105, %v1795
  %v4122 = vadd.f32 %v4106, %v1815
  %v4123 = vadd.f32 %v4107, %v1815
  %v4124 = vadd.f32 %v4108, %v1815
  %v4125 = vadd.f32 %v4109, %v1815
  %v4126 = vadd.f32 %v4110, %v1815
  %v4127 = vadd.f32 %v4111, %v1815
  %v4128 = vadd.f32 %v4112, %v1815
  %v4129 = vadd.f32 %v4113, %v1815
  %v4130 = vadd.f32 %v4114, %v1815
  %v4131 = vadd.f32 %v4115, %v1815
  %v4132 = vadd.f32 %v4116, %v1815
  %v4133 = vadd.f32 %v4117, %v1815
  %v4134 = vadd.f32 %v4118, %v1815
  %v4135 = vadd.f32 %v4119, %v1815
  %v4136 = vadd.f32 %v4120, %v1815
  %v4137 = vadd.f32 %v4121, %v1815
  %v4138 = vpack.c.bf16 %v4122, %v4122
  %v4139 = vpack.c.bf16 %v4123, %v4123
  %v4140 = vpack.c.bf16 %v4124, %v4124
  %v4141 = vpack.c.bf16 %v4125, %v4125
  %v4142 = vpack.c.bf16 %v4126, %v4126
  %v4143 = vpack.c.bf16 %v4127, %v4127
  %v4144 = vpack.c.bf16 %v4128, %v4128
  %v4145 = vpack.c.bf16 %v4129, %v4129
  %v4146 = vpack.c.bf16 %v4130, %v4130
  %v4147 = vpack.c.bf16 %v4131, %v4131
  %v4148 = vpack.c.bf16 %v4132, %v4132
  %v4149 = vpack.c.bf16 %v4133, %v4133
  %v4150 = vpack.c.bf16 %v4134, %v4134
  %v4151 = vpack.c.bf16 %v4135, %v4135
  %v4152 = vpack.c.bf16 %v4136, %v4136
  %v4153 = vpack.c.bf16 %v4137, %v4137
  %v4154 = vld [vmem:[%s6] sm:$0xff]
  %v4155 = vld [vmem:[%s6 + $0x8] sm:$0xff]
  %v4156 = vld [vmem:[%s6 + $0x10] sm:$0xff]
  %v4157 = vld [vmem:[%s6 + $0x18] sm:$0xff]
  %v4158 = vld [vmem:[%s6 + $0x20] sm:$0xff]
  %v4159 = vld [vmem:[%s6 + $0x28] sm:$0xff]
  %v4160 = vld [vmem:[%s6 + $0x30] sm:$0xff]
  %v4161 = vld [vmem:[%s6 + $0x38] sm:$0xff]
  %v4162 = vld [vmem:[%s10] sm:$0x3]
  %v4164 = vlaneseq
  %v4165 = vshrl.u32 %v4164, 7
  %v4166 = vsub.s32 0, %v4165
  %v4167 = vrot.slane %v4162, %v4166
  %v4168 = vlaneseq
  %v4169 = vshrl.u32 %v4168, 7
  %v4170 = vsub.s32 1, %v4169
  %v4171 = vrot.slane %v4162, %v4170
  %v4190 = vunpack.c.l.b16 %v4138
  %v4191 = vunpack.c.l.b16 %v4139
  %v4192 = vunpack.c.l.b16 %v4140
  %v4193 = vunpack.c.l.b16 %v4141
  %v4194 = vunpack.c.l.b16 %v4142
  %v4195 = vunpack.c.l.b16 %v4143
  %v4196 = vunpack.c.l.b16 %v4144
  %v4197 = vunpack.c.l.b16 %v4145
  %v4198 = vunpack.c.l.b16 %v4146
  %v4199 = vunpack.c.l.b16 %v4147
  %v4200 = vunpack.c.l.b16 %v4148
  %v4201 = vunpack.c.l.b16 %v4149
  %v4202 = vunpack.c.l.b16 %v4150
  %v4203 = vunpack.c.l.b16 %v4151
  %v4204 = vunpack.c.l.b16 %v4152
  %v4205 = vunpack.c.l.b16 %v4153
  %v4206 = vrot.slane %v4190, 7
  %v4207 = vrot.slane %v4191, 6
  %v4208 = vsel %vm801, %v4207, %v4206
  %v4209 = vrot.slane %v4192, 5
  %v4210 = vsel %vm804, %v4209, %v4208
  %v4211 = vrot.slane %v4193, 4
  %v4212 = vsel %vm807, %v4211, %v4210
  %v4213 = vrot.slane %v4194, 3
  %v4214 = vsel %vm810, %v4213, %v4212
  %v4215 = vrot.slane %v4195, 2
  %v4216 = vsel %vm813, %v4215, %v4214
  %v4217 = vrot.slane %v4196, 1
  %v4218 = vsel %vm816, %v4217, %v4216
  %v4219 = vsel %vm818, %v4197, %v4218
  %v4220 = vrot.slane %v4198, 7
  %v4221 = vrot.slane %v4199, 6
  %v4222 = vsel %vm801, %v4221, %v4220
  %v4223 = vrot.slane %v4200, 5
  %v4224 = vsel %vm804, %v4223, %v4222
  %v4225 = vrot.slane %v4201, 4
  %v4226 = vsel %vm807, %v4225, %v4224
  %v4227 = vrot.slane %v4202, 3
  %v4228 = vsel %vm810, %v4227, %v4226
  %v4229 = vrot.slane %v4203, 2
  %v4230 = vsel %vm813, %v4229, %v4228
  %v4231 = vrot.slane %v4204, 1
  %v4232 = vsel %vm816, %v4231, %v4230
  %v4233 = vsel %vm818, %v4205, %v4232
  %v4234 = vpack.c.b16 %v4233, %v4219
  %v4243 = vunpack.c.l.b16 %v4154
  %v4244 = vunpack.c.h.b16 %v4154
  %v4245 = vunpack.c.l.b16 %v4155
  %v4246 = vunpack.c.h.b16 %v4155
  %v4247 = vunpack.c.l.b16 %v4156
  %v4248 = vunpack.c.h.b16 %v4156
  %v4249 = vunpack.c.l.b16 %v4157
  %v4250 = vunpack.c.h.b16 %v4157
  %v4251 = vunpack.c.l.b16 %v4158
  %v4252 = vunpack.c.h.b16 %v4158
  %v4253 = vunpack.c.l.b16 %v4159
  %v4254 = vunpack.c.h.b16 %v4159
  %v4255 = vunpack.c.l.b16 %v4160
  %v4256 = vunpack.c.h.b16 %v4160
  %v4257 = vunpack.c.l.b16 %v4161
  %v4258 = vunpack.c.h.b16 %v4161
  %v4259 = vpack.c.b16 %v4245, %v4243
  %v4260 = vpack.c.b16 %v4246, %v4244
  %v4261 = vpack.c.b16 %v4249, %v4247
  %v4262 = vpack.c.b16 %v4250, %v4248
  %v4263 = vpack.c.b16 %v4253, %v4251
  %v4264 = vpack.c.b16 %v4254, %v4252
  %v4265 = vpack.c.b16 %v4257, %v4255
  %v4266 = vpack.c.b16 %v4258, %v4256
  %v4276 = vsel %vm235, %v4234, 0
  %4278 = vmatprep.subr.bf16.mxu0 0
  %4279 = vmatpush1.bf16.msra.mxu0 0
  %4280 = vmatprep.subr.bf16.mxu0 0
  %4281 = vmatpush1.bf16.msra.mxu0 0
  %4282 = vmatprep.subr.bf16.mxu0 0
  %4283 = vmatpush1.bf16.msra.mxu0 0
  %4284 = vmatprep.subr.bf16.mxu0 0
  %4285 = vmatpush1.bf16.msra.mxu0 0
  %4286 = vmatprep.subr.bf16.mxu0 %v4266
  %4287 = vmatpush1.bf16.msra.mxu0 %v4265
  %4288 = vmatprep.subr.bf16.mxu0 %v4264
  %4289 = vmatpush1.bf16.msra.mxu0 %v4263
  %4290 = vmatprep.subr.bf16.mxu0 %v4262
  %4291 = vmatpush1.bf16.msra.mxu0 %v4261
  %4292 = vmatprep.subr.bf16.mxu0 %v4260
  %4293 = vmatpush1.bf16.msra.mxu0 %v4259
  %4294 = vmatprep.subr.bf16.mxu0 0
  %4295 = vmatpush2.bf16.msra.mxu0 0
  %4296 = vmatprep.subr.bf16.mxu0 0
  %4297 = vmatpush2.bf16.msra.mxu0 0
  %4298 = vmatprep.subr.bf16.mxu0 0
  %4299 = vmatpush2.bf16.msra.mxu0 0
  %4300 = vmatprep.subr.bf16.mxu0 0
  %4301 = vmatpush2.bf16.msra.mxu0 0
  %4302 = vmatprep.subr.bf16.mxu0 0
  %4303 = vmatpush2.bf16.msra.mxu0 0
  %4304 = vmatprep.subr.bf16.mxu0 0
  %4305 = vmatpush2.bf16.msra.mxu0 0
  %4306 = vmatprep.subr.bf16.mxu0 0
  %4307 = vmatpush2.bf16.msra.mxu0 0
  %4308 = vmatprep.subr.bf16.mxu0 0
  %4309 = vmatpush2.bf16.msra.mxu0 0
  %4310 = vmatprep.mubr.bf16.mxu0 0
  %4311 = vmatmul.mubr.bf16.gmra.mxu0 %v4276
  %v4312 = vpop.f32.mrf.mxu0
  %v4313 = vadd.f32 %v4167, %v4312
  %v4314 = vpop.f32.mrf.mxu0
  %v4315 = vadd.f32 %v4171, %v4314
  %v4316 = vpop.f32.mrf.mxu0
  %v4317 = vadd.f32 %v4167, %v4316
  %v4318 = vpop.f32.mrf.mxu0
  %v4319 = vadd.f32 %v4171, %v4318
  %4320 = vdwg.mxu0
  %v4321 = vmax.f32 %v4313, 0.0
  %v4322 = vmax.f32 %v4315, 0.0
  %v4323 = vmax.f32 %v4317, 0.0
  %v4324 = vmax.f32 %v4319, 0.0
  %v4325 = vpack.c.bf16 %v4323, %v4321
  %v4326 = vpack.c.bf16 %v4324, %v4322
  %v4327 = vld [vmem:[%s7] sm:$0xf]
  %v4328 = vld [vmem:[%s7 + $0x4] sm:$0xf]
  %v4329 = vld [vmem:[%s7 + $0x8] sm:$0xf]
  %v4330 = vld [vmem:[%s7 + $0xc] sm:$0xf]
  %v4331 = vld [vmem:[%s7 + $0x10] sm:$0xf]
  %v4332 = vld [vmem:[%s7 + $0x14] sm:$0xf]
  %v4333 = vld [vmem:[%s7 + $0x18] sm:$0xf]
  %v4334 = vld [vmem:[%s7 + $0x1c] sm:$0xf]
  %v4335 = vld [vmem:[%s7 + $0x20] sm:$0xf]
  %v4336 = vld [vmem:[%s7 + $0x24] sm:$0xf]
  %v4337 = vld [vmem:[%s7 + $0x28] sm:$0xf]
  %v4338 = vld [vmem:[%s7 + $0x2c] sm:$0xf]
  %v4339 = vld [vmem:[%s7 + $0x30] sm:$0xf]
  %v4340 = vld [vmem:[%s7 + $0x34] sm:$0xf]
  %v4341 = vld [vmem:[%s7 + $0x38] sm:$0xf]
  %v4342 = vld [vmem:[%s7 + $0x3c] sm:$0xf]
  %v4343 = vld [vmem:[%s7 + $0x40] sm:$0xf]
  %v4344 = vld [vmem:[%s7 + $0x44] sm:$0xf]
  %v4345 = vld [vmem:[%s7 + $0x48] sm:$0xf]
  %v4346 = vld [vmem:[%s7 + $0x4c] sm:$0xf]
  %v4347 = vld [vmem:[%s7 + $0x50] sm:$0xf]
  %v4348 = vld [vmem:[%s7 + $0x54] sm:$0xf]
  %v4349 = vld [vmem:[%s7 + $0x58] sm:$0xf]
  %v4350 = vld [vmem:[%s7 + $0x5c] sm:$0xf]
  %v4351 = vld [vmem:[%s7 + $0x60] sm:$0xf]
  %v4352 = vld [vmem:[%s7 + $0x64] sm:$0xf]
  %v4353 = vld [vmem:[%s7 + $0x68] sm:$0xf]
  %v4354 = vld [vmem:[%s7 + $0x6c] sm:$0xf]
  %v4355 = vld [vmem:[%s7 + $0x70] sm:$0xf]
  %v4356 = vld [vmem:[%s7 + $0x74] sm:$0xf]
  %v4357 = vld [vmem:[%s7 + $0x78] sm:$0xf]
  %v4358 = vld [vmem:[%s7 + $0x7c] sm:$0xf]
  %v4391 = vunpack.c.l.b16 %v4327
  %v4392 = vunpack.c.l.b16 %v4328
  %v4393 = vunpack.c.l.b16 %v4329
  %v4394 = vunpack.c.l.b16 %v4330
  %v4395 = vunpack.c.l.b16 %v4331
  %v4396 = vunpack.c.l.b16 %v4332
  %v4397 = vunpack.c.l.b16 %v4333
  %v4398 = vunpack.c.l.b16 %v4334
  %v4399 = vunpack.c.l.b16 %v4335
  %v4400 = vunpack.c.l.b16 %v4336
  %v4401 = vunpack.c.l.b16 %v4337
  %v4402 = vunpack.c.l.b16 %v4338
  %v4403 = vunpack.c.l.b16 %v4339
  %v4404 = vunpack.c.l.b16 %v4340
  %v4405 = vunpack.c.l.b16 %v4341
  %v4406 = vunpack.c.l.b16 %v4342
  %v4407 = vunpack.c.l.b16 %v4343
  %v4408 = vunpack.c.l.b16 %v4344
  %v4409 = vunpack.c.l.b16 %v4345
  %v4410 = vunpack.c.l.b16 %v4346
  %v4411 = vunpack.c.l.b16 %v4347
  %v4412 = vunpack.c.l.b16 %v4348
  %v4413 = vunpack.c.l.b16 %v4349
  %v4414 = vunpack.c.l.b16 %v4350
  %v4415 = vunpack.c.l.b16 %v4351
  %v4416 = vunpack.c.l.b16 %v4352
  %v4417 = vunpack.c.l.b16 %v4353
  %v4418 = vunpack.c.l.b16 %v4354
  %v4419 = vunpack.c.l.b16 %v4355
  %v4420 = vunpack.c.l.b16 %v4356
  %v4421 = vunpack.c.l.b16 %v4357
  %v4422 = vunpack.c.l.b16 %v4358
  %v4423 = vpack.c.b16 %v4392, %v4391
  %v4424 = vpack.c.b16 %v4394, %v4393
  %v4425 = vpack.c.b16 %v4396, %v4395
  %v4426 = vpack.c.b16 %v4398, %v4397
  %v4427 = vpack.c.b16 %v4400, %v4399
  %v4428 = vpack.c.b16 %v4402, %v4401
  %v4429 = vpack.c.b16 %v4404, %v4403
  %v4430 = vpack.c.b16 %v4406, %v4405
  %v4431 = vpack.c.b16 %v4408, %v4407
  %v4432 = vpack.c.b16 %v4410, %v4409
  %v4433 = vpack.c.b16 %v4412, %v4411
  %v4434 = vpack.c.b16 %v4414, %v4413
  %v4435 = vpack.c.b16 %v4416, %v4415
  %v4436 = vpack.c.b16 %v4418, %v4417
  %v4437 = vpack.c.b16 %v4420, %v4419
  %v4438 = vpack.c.b16 %v4422, %v4421
  %4455 = vmatprep.subr.bf16.mxu0 0
  %4456 = vmatpush1.bf16.msra.mxu0 %v4430
  %4457 = vmatprep.subr.bf16.mxu0 0
  %4458 = vmatpush1.bf16.msra.mxu0 %v4429
  %4459 = vmatprep.subr.bf16.mxu0 0
  %4460 = vmatpush1.bf16.msra.mxu0 %v4428
  %4461 = vmatprep.subr.bf16.mxu0 0
  %4462 = vmatpush1.bf16.msra.mxu0 %v4427
  %4463 = vmatprep.subr.bf16.mxu0 0
  %4464 = vmatpush1.bf16.msra.mxu0 %v4426
  %4465 = vmatprep.subr.bf16.mxu0 0
  %4466 = vmatpush1.bf16.msra.mxu0 %v4425
  %4467 = vmatprep.subr.bf16.mxu0 0
  %4468 = vmatpush1.bf16.msra.mxu0 %v4424
  %4469 = vmatprep.subr.bf16.mxu0 0
  %4470 = vmatpush1.bf16.msra.mxu0 %v4423
  %4471 = vmatprep.subr.bf16.mxu0 0
  %4472 = vmatpush2.bf16.msra.mxu0 %v4438
  %4473 = vmatprep.subr.bf16.mxu0 0
  %4474 = vmatpush2.bf16.msra.mxu0 %v4437
  %4475 = vmatprep.subr.bf16.mxu0 0
  %4476 = vmatpush2.bf16.msra.mxu0 %v4436
  %4477 = vmatprep.subr.bf16.mxu0 0
  %4478 = vmatpush2.bf16.msra.mxu0 %v4435
  %4479 = vmatprep.subr.bf16.mxu0 0
  %4480 = vmatpush2.bf16.msra.mxu0 %v4434
  %4481 = vmatprep.subr.bf16.mxu0 0
  %4482 = vmatpush2.bf16.msra.mxu0 %v4433
  %4483 = vmatprep.subr.bf16.mxu0 0
  %4484 = vmatpush2.bf16.msra.mxu0 %v4432
  %4485 = vmatprep.subr.bf16.mxu0 0
  %4486 = vmatpush2.bf16.msra.mxu0 %v4431
  %4487 = vmatprep.mubr.bf16.mxu0 %v4326
  %4488 = vmatmul.mubr.bf16.gmra.mxu0 %v4325
  %v4489 = vpop.f32.mrf.mxu0
  %v4490 = vadd.f32 0.0, %v4489
  %v4491 = vpop.f32.mrf.mxu0
  %v4492 = vpop.f32.mrf.mxu0
  %v4493 = vadd.f32 0.0, %v4492
  %v4494 = vpop.f32.mrf.mxu0
  %4495 = vdwg.mxu0
  %v4498 = vrot.slane %v4490, 1
  %v4499 = vrot.slane %v4490, 2
  %v4500 = vrot.slane %v4490, 3
  %v4501 = vrot.slane %v4490, 4
  %v4502 = vrot.slane %v4490, 5
  %v4503 = vrot.slane %v4490, 6
  %v4504 = vrot.slane %v4490, 7
  %v4505 = vrot.slane %v4493, 1
  %v4506 = vrot.slane %v4493, 2
  %v4507 = vrot.slane %v4493, 3
  %v4508 = vrot.slane %v4493, 4
  %v4509 = vrot.slane %v4493, 5
  %v4510 = vrot.slane %v4493, 6
  %v4511 = vrot.slane %v4493, 7
  %v4528 = vadd.f32 %v3854, %v4498
  %v4529 = vadd.f32 %v3855, %v4499
  %v4530 = vadd.f32 %v3856, %v4500
  %v4531 = vadd.f32 %v3857, %v4501
  %v4532 = vadd.f32 %v3858, %v4502
  %v4533 = vadd.f32 %v3859, %v4503
  %v4534 = vadd.f32 %v3860, %v4504
  %v4535 = vadd.f32 %v3861, %v4490
  %v4536 = vadd.f32 %v3862, %v4505
  %v4537 = vadd.f32 %v3863, %v4506
  %v4538 = vadd.f32 %v3864, %v4507
  %v4539 = vadd.f32 %v3865, %v4508
  %v4540 = vadd.f32 %v3866, %v4509
  %v4541 = vadd.f32 %v3867, %v4510
  %v4542 = vadd.f32 %v3868, %v4511
  %v4543 = vadd.f32 %v3869, %v4493
  %v4544 = vadd.f32 %v4528, %v2241
  %v4545 = vadd.f32 %v4529, %v2241
  %v4546 = vadd.f32 %v4530, %v2241
  %v4547 = vadd.f32 %v4531, %v2241
  %v4548 = vadd.f32 %v4532, %v2241
  %v4549 = vadd.f32 %v4533, %v2241
  %v4550 = vadd.f32 %v4534, %v2241
  %v4551 = vadd.f32 %v4535, %v2241
  %v4552 = vadd.f32 %v4536, %v2241
  %v4553 = vadd.f32 %v4537, %v2241
  %v4554 = vadd.f32 %v4538, %v2241
  %v4555 = vadd.f32 %v4539, %v2241
  %v4556 = vadd.f32 %v4540, %v2241
  %v4557 = vadd.f32 %v4541, %v2241
  %v4558 = vadd.f32 %v4542, %v2241
  %v4559 = vadd.f32 %v4543, %v2241
  %v4560 = vpack.c.bf16 %v4544, %v4544
  %v4561 = vpack.c.bf16 %v4545, %v4545
  %v4562 = vpack.c.bf16 %v4546, %v4546
  %v4563 = vpack.c.bf16 %v4547, %v4547
  %v4564 = vpack.c.bf16 %v4548, %v4548
  %v4565 = vpack.c.bf16 %v4549, %v4549
  %v4566 = vpack.c.bf16 %v4550, %v4550
  %v4567 = vpack.c.bf16 %v4551, %v4551
  %v4568 = vpack.c.bf16 %v4552, %v4552
  %v4569 = vpack.c.bf16 %v4553, %v4553
  %v4570 = vpack.c.bf16 %v4554, %v4554
  %v4571 = vpack.c.bf16 %v4555, %v4555
  %v4572 = vpack.c.bf16 %v4556, %v4556
  %v4573 = vpack.c.bf16 %v4557, %v4557
  %v4574 = vpack.c.bf16 %v4558, %v4558
  %v4575 = vpack.c.bf16 %v4559, %v4559
  %v4576 = vld [vmem:[%s8] sm:$0xf]
  %v4577 = vld [vmem:[%s8 + $0x4] sm:$0xf]
  %v4578 = vld [vmem:[%s8 + $0x8] sm:$0xf]
  %v4579 = vld [vmem:[%s8 + $0xc] sm:$0xf]
  %v4580 = vld [vmem:[%s8 + $0x10] sm:$0xf]
  %v4581 = vld [vmem:[%s8 + $0x14] sm:$0xf]
  %v4582 = vld [vmem:[%s8 + $0x18] sm:$0xf]
  %v4583 = vld [vmem:[%s8 + $0x1c] sm:$0xf]
  %v4584 = vld [vmem:[%s11] sm:$0x1]
  %v4586 = vlaneseq
  %v4587 = vshrl.u32 %v4586, 7
  %v4588 = vsub.s32 0, %v4587
  %v4589 = vrot.slane %v4584, %v4588
  %v4607 = vunpack.c.l.b16 %v4560
  %v4608 = vunpack.c.l.b16 %v4561
  %v4609 = vunpack.c.l.b16 %v4562
  %v4610 = vunpack.c.l.b16 %v4563
  %v4611 = vunpack.c.l.b16 %v4564
  %v4612 = vunpack.c.l.b16 %v4565
  %v4613 = vunpack.c.l.b16 %v4566
  %v4614 = vunpack.c.l.b16 %v4567
  %v4615 = vunpack.c.l.b16 %v4568
  %v4616 = vunpack.c.l.b16 %v4569
  %v4617 = vunpack.c.l.b16 %v4570
  %v4618 = vunpack.c.l.b16 %v4571
  %v4619 = vunpack.c.l.b16 %v4572
  %v4620 = vunpack.c.l.b16 %v4573
  %v4621 = vunpack.c.l.b16 %v4574
  %v4622 = vunpack.c.l.b16 %v4575
  %v4623 = vrot.slane %v4607, 7
  %v4624 = vrot.slane %v4608, 6
  %v4625 = vsel %vm801, %v4624, %v4623
  %v4626 = vrot.slane %v4609, 5
  %v4627 = vsel %vm804, %v4626, %v4625
  %v4628 = vrot.slane %v4610, 4
  %v4629 = vsel %vm807, %v4628, %v4627
  %v4630 = vrot.slane %v4611, 3
  %v4631 = vsel %vm810, %v4630, %v4629
  %v4632 = vrot.slane %v4612, 2
  %v4633 = vsel %vm813, %v4632, %v4631
  %v4634 = vrot.slane %v4613, 1
  %v4635 = vsel %vm816, %v4634, %v4633
  %v4636 = vsel %vm818, %v4614, %v4635
  %v4637 = vrot.slane %v4615, 7
  %v4638 = vrot.slane %v4616, 6
  %v4639 = vsel %vm801, %v4638, %v4637
  %v4640 = vrot.slane %v4617, 5
  %v4641 = vsel %vm804, %v4640, %v4639
  %v4642 = vrot.slane %v4618, 4
  %v4643 = vsel %vm807, %v4642, %v4641
  %v4644 = vrot.slane %v4619, 3
  %v4645 = vsel %vm810, %v4644, %v4643
  %v4646 = vrot.slane %v4620, 2
  %v4647 = vsel %vm813, %v4646, %v4645
  %v4648 = vrot.slane %v4621, 1
  %v4649 = vsel %vm816, %v4648, %v4647
  %v4650 = vsel %vm818, %v4622, %v4649
  %v4651 = vpack.c.b16 %v4650, %v4636
  %v4660 = vunpack.c.l.b16 %v4576
  %v4661 = vunpack.c.l.b16 %v4577
  %v4662 = vunpack.c.l.b16 %v4578
  %v4663 = vunpack.c.l.b16 %v4579
  %v4664 = vunpack.c.l.b16 %v4580
  %v4665 = vunpack.c.l.b16 %v4581
  %v4666 = vunpack.c.l.b16 %v4582
  %v4667 = vunpack.c.l.b16 %v4583
  %v4668 = vpack.c.b16 %v4661, %v4660
  %v4669 = vpack.c.b16 %v4663, %v4662
  %v4670 = vpack.c.b16 %v4665, %v4664
  %v4671 = vpack.c.b16 %v4667, %v4666
  %v4677 = vsel %vm235, %v4651, 0
  %4679 = vmatprep.subr.bf16.mxu0 0
  %4680 = vmatpush1.bf16.msra.mxu0 0
  %4681 = vmatprep.subr.bf16.mxu0 0
  %4682 = vmatpush1.bf16.msra.mxu0 0
  %4683 = vmatprep.subr.bf16.mxu0 0
  %4684 = vmatpush1.bf16.msra.mxu0 0
  %4685 = vmatprep.subr.bf16.mxu0 0
  %4686 = vmatpush1.bf16.msra.mxu0 0
  %4687 = vmatprep.subr.bf16.mxu0 0
  %4688 = vmatpush1.bf16.msra.mxu0 %v4671
  %4689 = vmatprep.subr.bf16.mxu0 0
  %4690 = vmatpush1.bf16.msra.mxu0 %v4670
  %4691 = vmatprep.subr.bf16.mxu0 0
  %4692 = vmatpush1.bf16.msra.mxu0 %v4669
  %4693 = vmatprep.subr.bf16.mxu0 0
  %4694 = vmatpush1.bf16.msra.mxu0 %v4668
  %4695 = vmatprep.subr.bf16.mxu0 0
  %4696 = vmatpush2.bf16.msra.mxu0 0
  %4697 = vmatprep.subr.bf16.mxu0 0
  %4698 = vmatpush2.bf16.msra.mxu0 0
  %4699 = vmatprep.subr.bf16.mxu0 0
  %4700 = vmatpush2.bf16.msra.mxu0 0
  %4701 = vmatprep.subr.bf16.mxu0 0
  %4702 = vmatpush2.bf16.msra.mxu0 0
  %4703 = vmatprep.subr.bf16.mxu0 0
  %4704 = vmatpush2.bf16.msra.mxu0 0
  %4705 = vmatprep.subr.bf16.mxu0 0
  %4706 = vmatpush2.bf16.msra.mxu0 0
  %4707 = vmatprep.subr.bf16.mxu0 0
  %4708 = vmatpush2.bf16.msra.mxu0 0
  %4709 = vmatprep.subr.bf16.mxu0 0
  %4710 = vmatpush2.bf16.msra.mxu0 0
  %4711 = vmatprep.mubr.bf16.mxu0 0
  %4712 = vmatmul.mubr.bf16.gmra.mxu0 %v4677
  %v4713 = vpop.f32.mrf.mxu0
  %v4714 = vadd.f32 %v4589, %v4713
  %v4715 = vpop.f32.mrf.mxu0
  %v4716 = vpop.f32.mrf.mxu0
  %v4717 = vadd.f32 %v4589, %v4716
  %v4718 = vpop.f32.mrf.mxu0
  %4719 = vdwg.mxu0
  %s4720 = scalar_lea.vmem %s14, 16
  %4721 = vst [vmem:[%s4720] sm:$0xff] %v4714
  %4722 = vst [vmem:[%s4720 + $0x8] sm:$0xff] %v4717
  // Predicated region
  $region58: #{hypernet_classifier_forward.1} parent=0 // pred_check
    _
  $region59: #{hypernet_classifier_forward.1} parent=0 // pred_check_branch
    %4724 = sbr.rel (0) target = $region61
  $region60: #{hypernet_classifier_forward.1} parent=0 // pred_region
    _
  $region61: #{hypernet_classifier_forward.1} parent=0 // pred_fallthru
    _
  // Predicated region
  $region62: #{hypernet_classifier_forward.1} parent=0 // pred_check
    _
  $region63: #{hypernet_classifier_forward.1} parent=0 // pred_check_branch
    %4726 = sbr.rel (0) target = $region65
  $region64: #{hypernet_classifier_forward.1} parent=0 // pred_region
    _
  $region65: #{hypernet_classifier_forward.1} parent=0 // pred_fallthru
    _

</llo_original>
